<compile_context>
chip_gen: v6e
topology: v6e:2x2x1
jax: 0.10.0
libtpu: 0.0.40
codegen_flags: <defaults>
</compile_context>

<pallas_src>
import functools

import jax
import jax.numpy as jnp
from jax import lax
from jax.experimental import pallas as pl
from jax.experimental.pallas import tpu as pltpu


# ----------------------------------------------------------------------------
# Compiler-params helper: generous VMEM budget, clamped to safe bounds.
# ----------------------------------------------------------------------------
def _compiler_params(est_bytes, dims):
    vmem_limit = int(min(max(2 * est_bytes + (4 << 20), 16 << 20), 64 << 20))
    return pltpu.CompilerParams(dimension_semantics=dims,
                                vmem_limit_bytes=vmem_limit)


# ----------------------------------------------------------------------------
# Kernel 1: 1x1 conv (BN scale pre-folded into W) + bias + SiLU, row-tiled.
# ----------------------------------------------------------------------------
def _conv1x1_bn_silu_kernel(x_ref, w_ref, bias_ref, o_ref):
    # x: (tm, Cin), w: (Cin, Cout) [BN scale already folded], bias: (1, Cout)
    y = jnp.dot(x_ref[...], w_ref[...], preferred_element_type=jnp.float32)
    y = y + bias_ref[...]
    o_ref[...] = (y * jax.nn.sigmoid(y)).astype(o_ref.dtype)  # SiLU in f32


def conv1x1_bn_silu(x_nhwc, w, scale, bias, *, tm=512):
    N, H, W, Cin = x_nhwc.shape
    Cout = w.shape[1]
    M = N * H * W
    xf = x_nhwc.reshape(M, Cin)

    # Fold BN scale into the weights once (tiny, HBM-resident); only the bias
    # add + SiLU remain in the kernel epilogue.
    w_scaled = (w * scale[None, :]).astype(w.dtype)
    bias2d = bias.reshape(1, Cout).astype(jnp.float32)

    tm = tm if M > tm else M            # small inputs: single full block
    grid = (pl.cdiv(M, tm),)            # ragged last block masked by Pallas

    est = 4 * (2 * tm * (Cin + Cout) + Cin * Cout + Cout)  # f32 bytes, dbl-buf
    out = pl.pallas_call(
        _conv1x1_bn_silu_kernel,
        out_shape=jax.ShapeDtypeStruct((M, Cout), x_nhwc.dtype),
        grid=grid,
        in_specs=[
            pl.BlockSpec((tm, Cin), lambda i: (i, 0)),
            pl.BlockSpec((Cin, Cout), lambda i: (0, 0)),
            pl.BlockSpec((1, Cout), lambda i: (0, 0)),
        ],
        out_specs=pl.BlockSpec((tm, Cout), lambda i: (i, 0)),
        compiler_params=_compiler_params(est, ("parallel",)),
    )(xf, w_scaled, bias2d)
    return out.reshape(N, H, W, Cout)


# ----------------------------------------------------------------------------
# Kernel 2: fused CSPPC_Bottleneck = two chained Partial_conv3 (3x3, pad=1).
# ----------------------------------------------------------------------------
def _dual_pconv_kernel(x_ref, wa_ref, wb_ref, o_ref, pad_ref):
    # x/o: (1, H, W, C), wa/wb: (9*dc, dc), pad scratch: (H+2, W+2, dc)
    _, H, W, C = x_ref.shape
    dc = wa_ref.shape[1]

    def conv3x3(w_ref_):
        # im2col over the padded scratch -> one matmul with K = 9*dc
        cols = [pad_ref[ky:ky + H, kx:kx + W, :].reshape(H * W, dc)
                for ky in range(3) for kx in range(3)]
        im2col = jnp.concatenate(cols, axis=-1)                 # (H*W, 9*dc)
        return jnp.dot(im2col, w_ref_[...],
                       preferred_element_type=jnp.float32)      # (H*W, dc)

    # Zero-padded scratch holds the conv channels (padding done in VMEM).
    pad_ref[...] = jnp.zeros_like(pad_ref)
    pad_ref[1:H + 1, 1:W + 1, :] = x_ref[0, :, :, :dc].astype(pad_ref.dtype)
    ya = conv3x3(wa_ref)

    # Second conv consumes the first conv's output in-place (border stays 0):
    # removes one full HBM write+read of the intermediate activation.
    pad_ref[1:H + 1, 1:W + 1, :] = ya.reshape(H, W, dc).astype(pad_ref.dtype)
    yb = conv3x3(wb_ref)

    # Fused "split_cat": conv result into channels [:dc], untouched channels
    # passed straight through in the same output block (no HBM concat glue).
    o_ref[0, :, :, :dc] = yb.reshape(H, W, dc).astype(o_ref.dtype)
    o_ref[0, :, :, dc:] = x_ref[0, :, :, dc:]


def dual_partial_conv3(x_nhwc, w_a_hwio, w_b_hwio, dc):
    """One CSPPC_Bottleneck: Partial_conv3(w_a) then Partial_conv3(w_b)."""
    N, H, W, C = x_nhwc.shape
    wa = w_a_hwio.reshape(9 * dc, dc)   # rows ordered (ky, kx, cin) -> cout
    wb = w_b_hwio.reshape(9 * dc, dc)

    # TODO(synk): add an H-tile grid axis with a 1-row halo for v7x's 64 MiB
    # VMEM (and to feed both TensorCores when N is small at inference).
    est = 4 * (4 * H * W * C + (H + 2) * (W + 2) * dc
               + 2 * 9 * dc * dc + 2 * H * W * 9 * dc)
    return pl.pallas_call(
        _dual_pconv_kernel,
        out_shape=jax.ShapeDtypeStruct((N, H, W, C), x_nhwc.dtype),
        grid=(N,),
        in_specs=[
            pl.BlockSpec((1, H, W, C), lambda n: (n, 0, 0, 0)),
            pl.BlockSpec((9 * dc, dc), lambda n: (0, 0)),
            pl.BlockSpec((9 * dc, dc), lambda n: (0, 0)),
        ],
        out_specs=pl.BlockSpec((1, H, W, C), lambda n: (n, 0, 0, 0)),
        scratch_shapes=[pltpu.VMEM((H + 2, W + 2, dc), x_nhwc.dtype)],
        compiler_params=_compiler_params(est, ("parallel",)),
    )(x_nhwc, wa, wb)


# ----------------------------------------------------------------------------
# CSPPC module (parameters + forward)
# ----------------------------------------------------------------------------
def fold_bn(gamma, beta, mean, var, eps=1e-5):
    scale = gamma / jnp.sqrt(var + eps)
    bias = beta - mean * scale
    return scale, bias


def init_csppc_params(key, c1, c2, n=1, e=0.5):
    c = int(c2 * e)
    dc = c // 4  # Partial_conv3 n_div = 4
    ks = jax.random.split(key, 4 + 2 * n + 8)
    ki = iter(ks)

    def nrm(k, shape, s=0.1):
        return jax.random.normal(k, shape, jnp.float32) * s

    weights = {}
    # cv1: Conv(c1 -> 2c, k=1) + BN + SiLU
    weights["cv1_w"] = nrm(next(ki), (c1, 2 * c))
    g1 = 1.0 + nrm(next(ki), (2 * c,), 0.05)
    b1 = nrm(next(ki), (2 * c,), 0.05)
    m1 = nrm(next(ki), (2 * c,), 0.05)
    v1 = 1.0 + jnp.abs(nrm(next(ki), (2 * c,), 0.05))
    weights["cv1_scale"], weights["cv1_bias"] = fold_bn(g1, b1, m1, v1)
    # cv2: Conv((2+n)c -> c2, k=1) + BN + SiLU
    weights["cv2_w"] = nrm(next(ki), ((2 + n) * c, c2))
    g2 = 1.0 + nrm(next(ki), (c2,), 0.05)
    b2 = nrm(next(ki), (c2,), 0.05)
    m2 = nrm(next(ki), (c2,), 0.05)
    v2 = 1.0 + jnp.abs(nrm(next(ki), (c2,), 0.05))
    weights["cv2_scale"], weights["cv2_bias"] = fold_bn(g2, b2, m2, v2)
    # n bottlenecks, each = two Partial_conv3 3x3 weights (HWIO layout)
    weights["m"] = []
    for _ in range(n):
        w_a = nrm(next(ki), (3, 3, dc, dc))
        w_b = nrm(next(ki), (3, 3, dc, dc))
        weights["m"].append((w_a, w_b))
    cfg = dict(c=c, dc=dc, n=n)   # static ints kept OUT of the jitted pytree
    return weights, cfg


@functools.partial(jax.jit, static_argnames=("c", "dc", "n"))
def csppc_forward_nchw(x_nchw, weights, *, c, dc, n):
    x = jnp.transpose(x_nchw, (0, 2, 3, 1))  # NCHW -> NHWC
    y01 = conv1x1_bn_silu(x, weights["cv1_w"],
                          weights["cv1_scale"], weights["cv1_bias"])
    # torch: y = list(split(cv1(x), (c, c))); cat(y) == cat([y01, *bottlenecks])
    segs = [y01]
    z = y01[..., c:]                         # y[-1]
    for i in range(n):
        w_a, w_b = weights["m"][i]
        z = dual_partial_conv3(z, w_a, w_b, dc)   # fused CSPPC_Bottleneck
        segs.append(z)
    ycat = jnp.concatenate(segs, axis=-1)
    out = conv1x1_bn_silu(ycat, weights["cv2_w"],
                          weights["cv2_scale"], weights["cv2_bias"])
    return jnp.transpose(out, (0, 3, 1, 2))  # NHWC -> NCHW


# ----------------------------------------------------------------------------
# Pure-JAX reference (for correctness check)
# ----------------------------------------------------------------------------
def _ref_conv1x1_bn_silu(x, w, scale, bias):
    y = jnp.einsum("nhwc,cd->nhwd", x, w) * scale + bias
    return y * jax.nn.sigmoid(y)


def _ref_pconv(x, w_hwio, dc):
    x1, x2 = x[..., :dc], x[..., dc:]
    y1 = lax.conv_general_dilated(
        x1, w_hwio, window_strides=(1, 1), padding="SAME",
        dimension_numbers=("NHWC", "HWIO", "NHWC"))
    return jnp.concatenate([y1, x2], axis=-1)


def csppc_reference_nchw(x_nchw, weights, *, c, dc, n):
    x = jnp.transpose(x_nchw, (0, 2, 3, 1))
    y01 = _ref_conv1x1_bn_silu(x, weights["cv1_w"],
                               weights["cv1_scale"], weights["cv1_bias"])
    y = [y01[..., :c], y01[..., c:]]
    for i in range(n):
        z = y[-1]
        w_a, w_b = weights["m"][i]
        z = _ref_pconv(z, w_a, dc)
        z = _ref_pconv(z, w_b, dc)
        y.append(z)
    ycat = jnp.concatenate(y, axis=-1)
    out = _ref_conv1x1_bn_silu(ycat, weights["cv2_w"],
                               weights["cv2_scale"], weights["cv2_bias"])
    return jnp.transpose(out, (0, 3, 1, 2))


# ----------------------------------------------------------------------------
if __name__ == "__main__":
    key = jax.random.PRNGKey(0)
    kx, kp = jax.random.split(key)

    N, C1, C2, H, W = 2, 16, 16, 16, 16   # -> c = 8, dim_conv3 = 2
    x = jax.random.normal(kx, (N, C1, H, W), jnp.float32)   # PyTorch NCHW input
    weights, cfg = init_csppc_params(kp, C1, C2, n=1, e=0.5)

    out = jax.block_until_ready(csppc_forward_nchw(x, weights, **cfg))
    assert out.shape == (N, C2, H, W), out.shape

    ref = jax.block_until_ready(csppc_reference_nchw(x, weights, **cfg))
    max_err = float(jnp.max(jnp.abs(out - ref)))
    assert jnp.allclose(out, ref, atol=1e-4, rtol=1e-4), max_err

    print("KERNEL_OK")
</pallas_src>

<mosaic_0001>
module attributes {stable_mosaic.version = 11 : i64} {
  func.func @_conv1x1_bn_silu_kernel(%arg0: i32, %arg1: memref<512x16xf32, #tpu.memory_space<vmem>>, %arg2: memref<16x16xf32, #tpu.memory_space<vmem>>, %arg3: memref<1x16xf32, #tpu.memory_space<vmem>>, %arg4: memref<512x16xf32, #tpu.memory_space<vmem>>) attributes {dimension_semantics = [#tpu.dimension_semantics<parallel>], iteration_bounds = array<i64: 1>, scalar_prefetch = 0 : i64, scratch_operands = 0 : i64, tpu.core_type = #tpu.core_type<tc>, window_params = [{transform_indices = @transform_0, window_bounds = array<i64: 512, 16>}, {pipeline_mode = #tpu.pipeline_mode<synchronous>, transform_indices = @transform_1, window_bounds = array<i64: 16, 16>}, {pipeline_mode = #tpu.pipeline_mode<synchronous>, transform_indices = @transform_2, window_bounds = array<i64: 1, 16>}, {transform_indices = @transform_3, window_bounds = array<i64: 512, 16>}]} {
    %c0 = arith.constant 0 : index
    %c0_0 = arith.constant 0 : index
    %0 = vector.load %arg1[%c0, %c0_0] : memref<512x16xf32, #tpu.memory_space<vmem>>, vector<512x16xf32>
    %c0_1 = arith.constant 0 : index
    %c0_2 = arith.constant 0 : index
    %1 = vector.load %arg2[%c0_1, %c0_2] : memref<16x16xf32, #tpu.memory_space<vmem>>, vector<16x16xf32>
    %cst = arith.constant dense<0.000000e+00> : vector<512x16xf32>
    %2 = tpu.matmul %0, %1, %cst {dimension_numbers = #tpu.dot_dimension_numbers<[1], [0], [0], [1], [0, 0, 1, 1], [], []>} : vector<512x16xf32>, vector<16x16xf32>, vector<512x16xf32> -> vector<512x16xf32>
    %c0_3 = arith.constant 0 : index
    %c0_4 = arith.constant 0 : index
    %3 = vector.load %arg3[%c0_3, %c0_4] : memref<1x16xf32, #tpu.memory_space<vmem>>, vector<1x16xf32>
    %4 = vector.broadcast %3 : vector<1x16xf32> to vector<512x16xf32>
    %5 = arith.addf %2, %4 : vector<512x16xf32>
    %6 = arith.negf %5 : vector<512x16xf32>
    %7 = math.exp %6 : vector<512x16xf32>
    %cst_5 = arith.constant 1.000000e+00 : f32
    %8 = vector.broadcast %cst_5 : f32 to vector<512x16xf32>
    %9 = arith.addf %8, %7 : vector<512x16xf32>
    %10 = arith.divf %8, %9 : vector<512x16xf32>
    %11 = arith.mulf %5, %10 : vector<512x16xf32>
    %c0_6 = arith.constant 0 : index
    %c0_7 = arith.constant 0 : index
    %12 = vector.load %arg4[%c0_6, %c0_7] : memref<512x16xf32, #tpu.memory_space<vmem>>, vector<512x16xf32>
    tpu.vector_store %arg4[%c0_6, %c0_7], %11 {strides = array<i32>} : memref<512x16xf32, #tpu.memory_space<vmem>>, vector<512x16xf32>,
    return
  }
  func.func @transform_0(%arg0: i32) -> (i32, i32) {
    %c0_i32 = arith.constant 0 : i32
    %c0_i32_0 = arith.constant 0 : i32
    return %arg0, %c0_i32 : i32, i32
  }
  func.func @transform_1(%arg0: i32) -> (i32, i32) {
    %c0_i32 = arith.constant 0 : i32
    %c0_i32_0 = arith.constant 0 : i32
    %c0_i32_1 = arith.constant 0 : i32
    return %c0_i32, %c0_i32_0 : i32, i32
  }
  func.func @transform_2(%arg0: i32) -> (i32, i32) {
    %c0_i32 = arith.constant 0 : i32
    %c0_i32_0 = arith.constant 0 : i32
    %c0_i32_1 = arith.constant 0 : i32
    return %c0_i32, %c0_i32_0 : i32, i32
  }
  func.func @transform_3(%arg0: i32) -> (i32, i32) {
    %c0_i32 = arith.constant 0 : i32
    %c0_i32_0 = arith.constant 0 : i32
    return %arg0, %c0_i32 : i32, i32
  }
}

module attributes {stable_mosaic.version = 11 : i64} {
  func.func @_dual_pconv_kernel(%arg0: i32, %arg1: memref<1x16x16x8xf32, #tpu.memory_space<vmem>>, %arg2: memref<18x2xf32, #tpu.memory_space<vmem>>, %arg3: memref<18x2xf32, #tpu.memory_space<vmem>>, %arg4: memref<1x16x16x8xf32, #tpu.memory_space<vmem>>, %arg5: memref<18x18x2xf32, #tpu.memory_space<vmem>>) attributes {dimension_semantics = [#tpu.dimension_semantics<parallel>], iteration_bounds = array<i64: 2>, scalar_prefetch = 0 : i64, scratch_operands = 1 : i64, tpu.core_type = #tpu.core_type<tc>, window_params = [{transform_indices = @transform_0, window_bounds = array<i64: 1, 16, 16, 8>}, {pipeline_mode = #tpu.pipeline_mode<synchronous>, transform_indices = @transform_1, window_bounds = array<i64: 18, 2>}, {pipeline_mode = #tpu.pipeline_mode<synchronous>, transform_indices = @transform_2, window_bounds = array<i64: 18, 2>}, {transform_indices = @transform_3, window_bounds = array<i64: 1, 16, 16, 8>}]} {
    %cst = arith.constant 0.000000e+00 : f32
    %0 = vector.broadcast %cst : f32 to vector<18x18x2xf32>
    %c0 = arith.constant 0 : index
    %c0_0 = arith.constant 0 : index
    %c0_1 = arith.constant 0 : index
    %1 = vector.load %arg5[%c0, %c0_0, %c0_1] : memref<18x18x2xf32, #tpu.memory_space<vmem>>, vector<18x18x2xf32>
    tpu.vector_store %arg5[%c0, %c0_0, %c0_1], %0 {strides = array<i32>} : memref<18x18x2xf32, #tpu.memory_space<vmem>>, vector<18x18x2xf32>,
    %c0_2 = arith.constant 0 : index
    %c0_3 = arith.constant 0 : index
    %c0_4 = arith.constant 0 : index
    %c0_5 = arith.constant 0 : index
    %2 = vector.load %arg1[%c0_2, %c0_3, %c0_4, %c0_5] : memref<1x16x16x8xf32, #tpu.memory_space<vmem>>, vector<1x16x16x2xf32>
    %3 = vector.shape_cast %2 : vector<1x16x16x2xf32> to vector<16x16x2xf32>
    %c1 = arith.constant 1 : index
    %c1_6 = arith.constant 1 : index
    %c0_7 = arith.constant 0 : index
    %4 = vector.load %arg5[%c1, %c1_6, %c0_7] : memref<18x18x2xf32, #tpu.memory_space<vmem>>, vector<16x16x2xf32>
    tpu.vector_store %arg5[%c1, %c1_6, %c0_7], %3 {strides = array<i32>} : memref<18x18x2xf32, #tpu.memory_space<vmem>>, vector<16x16x2xf32>,
    %c0_8 = arith.constant 0 : index
    %c0_9 = arith.constant 0 : index
    %c0_10 = arith.constant 0 : index
    %5 = vector.load %arg5[%c0_8, %c0_9, %c0_10] : memref<18x18x2xf32, #tpu.memory_space<vmem>>, vector<16x16x2xf32>
    %6 = vector.shape_cast %5 : vector<16x16x2xf32> to vector<256x2xf32>
    %c0_11 = arith.constant 0 : index
    %c1_12 = arith.constant 1 : index
    %c0_13 = arith.constant 0 : index
    %7 = vector.load %arg5[%c0_11, %c1_12, %c0_13] : memref<18x18x2xf32, #tpu.memory_space<vmem>>, vector<16x16x2xf32>
    %8 = vector.shape_cast %7 : vector<16x16x2xf32> to vector<256x2xf32>
    %c0_14 = arith.constant 0 : index
    %c2 = arith.constant 2 : index
    %c0_15 = arith.constant 0 : index
    %9 = vector.load %arg5[%c0_14, %c2, %c0_15] : memref<18x18x2xf32, #tpu.memory_space<vmem>>, vector<16x16x2xf32>
    %10 = vector.shape_cast %9 : vector<16x16x2xf32> to vector<256x2xf32>
    %c1_16 = arith.constant 1 : index
    %c0_17 = arith.constant 0 : index
    %c0_18 = arith.constant 0 : index
    %11 = vector.load %arg5[%c1_16, %c0_17, %c0_18] : memref<18x18x2xf32, #tpu.memory_space<vmem>>, vector<16x16x2xf32>
    %12 = vector.shape_cast %11 : vector<16x16x2xf32> to vector<256x2xf32>
    %c1_19 = arith.constant 1 : index
    %c1_20 = arith.constant 1 : index
    %c0_21 = arith.constant 0 : index
    %13 = vector.load %arg5[%c1_19, %c1_20, %c0_21] : memref<18x18x2xf32, #tpu.memory_space<vmem>>, vector<16x16x2xf32>
    %14 = vector.shape_cast %13 : vector<16x16x2xf32> to vector<256x2xf32>
    %c1_22 = arith.constant 1 : index
    %c2_23 = arith.constant 2 : index
    %c0_24 = arith.constant 0 : index
    %15 = vector.load %arg5[%c1_22, %c2_23, %c0_24] : memref<18x18x2xf32, #tpu.memory_space<vmem>>, vector<16x16x2xf32>
    %16 = vector.shape_cast %15 : vector<16x16x2xf32> to vector<256x2xf32>
    %c2_25 = arith.constant 2 : index
    %c0_26 = arith.constant 0 : index
    %c0_27 = arith.constant 0 : index
    %17 = vector.load %arg5[%c2_25, %c0_26, %c0_27] : memref<18x18x2xf32, #tpu.memory_space<vmem>>, vector<16x16x2xf32>
    %18 = vector.shape_cast %17 : vector<16x16x2xf32> to vector<256x2xf32>
    %c2_28 = arith.constant 2 : index
    %c1_29 = arith.constant 1 : index
    %c0_30 = arith.constant 0 : index
    %19 = vector.load %arg5[%c2_28, %c1_29, %c0_30] : memref<18x18x2xf32, #tpu.memory_space<vmem>>, vector<16x16x2xf32>
    %20 = vector.shape_cast %19 : vector<16x16x2xf32> to vector<256x2xf32>
    %c2_31 = arith.constant 2 : index
    %c2_32 = arith.constant 2 : index
    %c0_33 = arith.constant 0 : index
    %21 = vector.load %arg5[%c2_31, %c2_32, %c0_33] : memref<18x18x2xf32, #tpu.memory_space<vmem>>, vector<16x16x2xf32>
    %22 = vector.shape_cast %21 : vector<16x16x2xf32> to vector<256x2xf32>
    %23 = tpu.concatenate %6, %8, %10, %12, %14, %16, %18, %20, %22 in 1 : vector<256x2xf32>, vector<256x2xf32>, vector<256x2xf32>, vector<256x2xf32>, vector<256x2xf32>, vector<256x2xf32>, vector<256x2xf32>, vector<256x2xf32>, vector<256x2xf32> -> vector<256x18xf32>
    %c0_34 = arith.constant 0 : index
    %c0_35 = arith.constant 0 : index
    %24 = vector.load %arg2[%c0_34, %c0_35] : memref<18x2xf32, #tpu.memory_space<vmem>>, vector<18x2xf32>
    %cst_36 = arith.constant dense<0.000000e+00> : vector<256x2xf32>
    %25 = tpu.matmul %23, %24, %cst_36 {dimension_numbers = #tpu.dot_dimension_numbers<[1], [0], [0], [1], [0, 0, 1, 1], [], []>} : vector<256x18xf32>, vector<18x2xf32>, vector<256x2xf32> -> vector<256x2xf32>
    %26 = vector.shape_cast %25 : vector<256x2xf32> to vector<16x16x2xf32>
    %c1_37 = arith.constant 1 : index
    %c1_38 = arith.constant 1 : index
    %c0_39 = arith.constant 0 : index
    %27 = vector.load %arg5[%c1_37, %c1_38, %c0_39] : memref<18x18x2xf32, #tpu.memory_space<vmem>>, vector<16x16x2xf32>
    tpu.vector_store %arg5[%c1_37, %c1_38, %c0_39], %26 {strides = array<i32>} : memref<18x18x2xf32, #tpu.memory_space<vmem>>, vector<16x16x2xf32>,
    %c0_40 = arith.constant 0 : index
    %c0_41 = arith.constant 0 : index
    %c0_42 = arith.constant 0 : index
    %28 = vector.load %arg5[%c0_40, %c0_41, %c0_42] : memref<18x18x2xf32, #tpu.memory_space<vmem>>, vector<16x16x2xf32>
    %29 = vector.shape_cast %28 : vector<16x16x2xf32> to vector<256x2xf32>
    %c0_43 = arith.constant 0 : index
    %c1_44 = arith.constant 1 : index
    %c0_45 = arith.constant 0 : index
    %30 = vector.load %arg5[%c0_43, %c1_44, %c0_45] : memref<18x18x2xf32, #tpu.memory_space<vmem>>, vector<16x16x2xf32>
    %31 = vector.shape_cast %30 : vector<16x16x2xf32> to vector<256x2xf32>
    %c0_46 = arith.constant 0 : index
    %c2_47 = arith.constant 2 : index
    %c0_48 = arith.constant 0 : index
    %32 = vector.load %arg5[%c0_46, %c2_47, %c0_48] : memref<18x18x2xf32, #tpu.memory_space<vmem>>, vector<16x16x2xf32>
    %33 = vector.shape_cast %32 : vector<16x16x2xf32> to vector<256x2xf32>
    %c1_49 = arith.constant 1 : index
    %c0_50 = arith.constant 0 : index
    %c0_51 = arith.constant 0 : index
    %34 = vector.load %arg5[%c1_49, %c0_50, %c0_51] : memref<18x18x2xf32, #tpu.memory_space<vmem>>, vector<16x16x2xf32>
    %35 = vector.shape_cast %34 : vector<16x16x2xf32> to vector<256x2xf32>
    %c1_52 = arith.constant 1 : index
    %c1_53 = arith.constant 1 : index
    %c0_54 = arith.constant 0 : index
    %36 = vector.load %arg5[%c1_52, %c1_53, %c0_54] : memref<18x18x2xf32, #tpu.memory_space<vmem>>, vector<16x16x2xf32>
    %37 = vector.shape_cast %36 : vector<16x16x2xf32> to vector<256x2xf32>
    %c1_55 = arith.constant 1 : index
    %c2_56 = arith.constant 2 : index
    %c0_57 = arith.constant 0 : index
    %38 = vector.load %arg5[%c1_55, %c2_56, %c0_57] : memref<18x18x2xf32, #tpu.memory_space<vmem>>, vector<16x16x2xf32>
    %39 = vector.shape_cast %38 : vector<16x16x2xf32> to vector<256x2xf32>
    %c2_58 = arith.constant 2 : index
    %c0_59 = arith.constant 0 : index
    %c0_60 = arith.constant 0 : index
    %40 = vector.load %arg5[%c2_58, %c0_59, %c0_60] : memref<18x18x2xf32, #tpu.memory_space<vmem>>, vector<16x16x2xf32>
    %41 = vector.shape_cast %40 : vector<16x16x2xf32> to vector<256x2xf32>
    %c2_61 = arith.constant 2 : index
    %c1_62 = arith.constant 1 : index
    %c0_63 = arith.constant 0 : index
    %42 = vector.load %arg5[%c2_61, %c1_62, %c0_63] : memref<18x18x2xf32, #tpu.memory_space<vmem>>, vector<16x16x2xf32>
    %43 = vector.shape_cast %42 : vector<16x16x2xf32> to vector<256x2xf32>
    %c2_64 = arith.constant 2 : index
    %c2_65 = arith.constant 2 : index
    %c0_66 = arith.constant 0 : index
    %44 = vector.load %arg5[%c2_64, %c2_65, %c0_66] : memref<18x18x2xf32, #tpu.memory_space<vmem>>, vector<16x16x2xf32>
    %45 = vector.shape_cast %44 : vector<16x16x2xf32> to vector<256x2xf32>
    %46 = tpu.concatenate %29, %31, %33, %35, %37, %39, %41, %43, %45 in 1 : vector<256x2xf32>, vector<256x2xf32>, vector<256x2xf32>, vector<256x2xf32>, vector<256x2xf32>, vector<256x2xf32>, vector<256x2xf32>, vector<256x2xf32>, vector<256x2xf32> -> vector<256x18xf32>
    %c0_67 = arith.constant 0 : index
    %c0_68 = arith.constant 0 : index
    %47 = vector.load %arg3[%c0_67, %c0_68] : memref<18x2xf32, #tpu.memory_space<vmem>>, vector<18x2xf32>
    %cst_69 = arith.constant dense<0.000000e+00> : vector<256x2xf32>
    %48 = tpu.matmul %46, %47, %cst_69 {dimension_numbers = #tpu.dot_dimension_numbers<[1], [0], [0], [1], [0, 0, 1, 1], [], []>} : vector<256x18xf32>, vector<18x2xf32>, vector<256x2xf32> -> vector<256x2xf32>
    %49 = vector.shape_cast %48 : vector<256x2xf32> to vector<16x16x2xf32>
    %c0_70 = arith.constant 0 : index
    %c0_71 = arith.constant 0 : index
    %c0_72 = arith.constant 0 : index
    %c0_73 = arith.constant 0 : index
    %50 = vector.load %arg4[%c0_70, %c0_71, %c0_72, %c0_73] : memref<1x16x16x8xf32, #tpu.memory_space<vmem>>, vector<1x16x16x2xf32>
    %51 = vector.shape_cast %50 : vector<1x16x16x2xf32> to vector<16x16x2xf32>
    %52 = vector.shape_cast %49 : vector<16x16x2xf32> to vector<1x16x16x2xf32>
    tpu.vector_store %arg4[%c0_70, %c0_71, %c0_72, %c0_73], %52 {strides = array<i32>} : memref<1x16x16x8xf32, #tpu.memory_space<vmem>>, vector<1x16x16x2xf32>,
    %c0_74 = arith.constant 0 : index
    %c0_75 = arith.constant 0 : index
    %c0_76 = arith.constant 0 : index
    %c2_77 = arith.constant 2 : index
    %53 = vector.load %arg1[%c0_74, %c0_75, %c0_76, %c2_77] : memref<1x16x16x8xf32, #tpu.memory_space<vmem>>, vector<1x16x16x6xf32>
    %54 = vector.shape_cast %53 : vector<1x16x16x6xf32> to vector<16x16x6xf32>
    %c0_78 = arith.constant 0 : index
    %c0_79 = arith.constant 0 : index
    %c0_80 = arith.constant 0 : index
    %c2_81 = arith.constant 2 : index
    %55 = vector.load %arg4[%c0_78, %c0_79, %c0_80, %c2_81] : memref<1x16x16x8xf32, #tpu.memory_space<vmem>>, vector<1x16x16x6xf32>
    %56 = vector.shape_cast %55 : vector<1x16x16x6xf32> to vector<16x16x6xf32>
    %57 = vector.shape_cast %54 : vector<16x16x6xf32> to vector<1x16x16x6xf32>
    tpu.vector_store %arg4[%c0_78, %c0_79, %c0_80, %c2_81], %57 {strides = array<i32>} : memref<1x16x16x8xf32, #tpu.memory_space<vmem>>, vector<1x16x16x6xf32>,
    return
  }
  func.func @transform_0(%arg0: i32) -> (i32, i32, i32, i32) {
    %c0_i32 = arith.constant 0 : i32
    %c0_i32_0 = arith.constant 0 : i32
    %c0_i32_1 = arith.constant 0 : i32
    %c0_i32_2 = arith.constant 0 : i32
    return %arg0, %c0_i32, %c0_i32_0, %c0_i32_1 : i32, i32, i32, i32
  }
  func.func @transform_1(%arg0: i32) -> (i32, i32) {
    %c0_i32 = arith.constant 0 : i32
    %c0_i32_0 = arith.constant 0 : i32
    %c0_i32_1 = arith.constant 0 : i32
    return %c0_i32, %c0_i32_0 : i32, i32
  }
  func.func @transform_2(%arg0: i32) -> (i32, i32) {
    %c0_i32 = arith.constant 0 : i32
    %c0_i32_0 = arith.constant 0 : i32
    %c0_i32_1 = arith.constant 0 : i32
    return %c0_i32, %c0_i32_0 : i32, i32
  }
  func.func @transform_3(%arg0: i32) -> (i32, i32, i32, i32) {
    %c0_i32 = arith.constant 0 : i32
    %c0_i32_0 = arith.constant 0 : i32
    %c0_i32_1 = arith.constant 0 : i32
    %c0_i32_2 = arith.constant 0 : i32
    return %arg0, %c0_i32, %c0_i32_0, %c0_i32_1 : i32, i32, i32, i32
  }
}

module attributes {stable_mosaic.version = 11 : i64} {
  func.func @_conv1x1_bn_silu_kernel(%arg0: i32, %arg1: memref<512x24xf32, #tpu.memory_space<vmem>>, %arg2: memref<24x16xf32, #tpu.memory_space<vmem>>, %arg3: memref<1x16xf32, #tpu.memory_space<vmem>>, %arg4: memref<512x16xf32, #tpu.memory_space<vmem>>) attributes {dimension_semantics = [#tpu.dimension_semantics<parallel>], iteration_bounds = array<i64: 1>, scalar_prefetch = 0 : i64, scratch_operands = 0 : i64, tpu.core_type = #tpu.core_type<tc>, window_params = [{transform_indices = @transform_0, window_bounds = array<i64: 512, 24>}, {pipeline_mode = #tpu.pipeline_mode<synchronous>, transform_indices = @transform_1, window_bounds = array<i64: 24, 16>}, {pipeline_mode = #tpu.pipeline_mode<synchronous>, transform_indices = @transform_2, window_bounds = array<i64: 1, 16>}, {transform_indices = @transform_3, window_bounds = array<i64: 512, 16>}]} {
    %c0 = arith.constant 0 : index
    %c0_0 = arith.constant 0 : index
    %0 = vector.load %arg1[%c0, %c0_0] : memref<512x24xf32, #tpu.memory_space<vmem>>, vector<512x24xf32>
    %c0_1 = arith.constant 0 : index
    %c0_2 = arith.constant 0 : index
    %1 = vector.load %arg2[%c0_1, %c0_2] : memref<24x16xf32, #tpu.memory_space<vmem>>, vector<24x16xf32>
    %cst = arith.constant dense<0.000000e+00> : vector<512x16xf32>
    %2 = tpu.matmul %0, %1, %cst {dimension_numbers = #tpu.dot_dimension_numbers<[1], [0], [0], [1], [0, 0, 1, 1], [], []>} : vector<512x24xf32>, vector<24x16xf32>, vector<512x16xf32> -> vector<512x16xf32>
    %c0_3 = arith.constant 0 : index
    %c0_4 = arith.constant 0 : index
    %3 = vector.load %arg3[%c0_3, %c0_4] : memref<1x16xf32, #tpu.memory_space<vmem>>, vector<1x16xf32>
    %4 = vector.broadcast %3 : vector<1x16xf32> to vector<512x16xf32>
    %5 = arith.addf %2, %4 : vector<512x16xf32>
    %6 = arith.negf %5 : vector<512x16xf32>
    %7 = math.exp %6 : vector<512x16xf32>
    %cst_5 = arith.constant 1.000000e+00 : f32
    %8 = vector.broadcast %cst_5 : f32 to vector<512x16xf32>
    %9 = arith.addf %8, %7 : vector<512x16xf32>
    %10 = arith.divf %8, %9 : vector<512x16xf32>
    %11 = arith.mulf %5, %10 : vector<512x16xf32>
    %c0_6 = arith.constant 0 : index
    %c0_7 = arith.constant 0 : index
    %12 = vector.load %arg4[%c0_6, %c0_7] : memref<512x16xf32, #tpu.memory_space<vmem>>, vector<512x16xf32>
    tpu.vector_store %arg4[%c0_6, %c0_7], %11 {strides = array<i32>} : memref<512x16xf32, #tpu.memory_space<vmem>>, vector<512x16xf32>,
    return
  }
  func.func @transform_0(%arg0: i32) -> (i32, i32) {
    %c0_i32 = arith.constant 0 : i32
    %c0_i32_0 = arith.constant 0 : i32
    return %arg0, %c0_i32 : i32, i32
  }
  func.func @transform_1(%arg0: i32) -> (i32, i32) {
    %c0_i32 = arith.constant 0 : i32
    %c0_i32_0 = arith.constant 0 : i32
    %c0_i32_1 = arith.constant 0 : i32
    return %c0_i32, %c0_i32_0 : i32, i32
  }
  func.func @transform_2(%arg0: i32) -> (i32, i32) {
    %c0_i32 = arith.constant 0 : i32
    %c0_i32_0 = arith.constant 0 : i32
    %c0_i32_1 = arith.constant 0 : i32
    return %c0_i32, %c0_i32_0 : i32, i32
  }
  func.func @transform_3(%arg0: i32) -> (i32, i32) {
    %c0_i32 = arith.constant 0 : i32
    %c0_i32_0 = arith.constant 0 : i32
    return %arg0, %c0_i32 : i32, i32
  }
}

</mosaic_0001>

<llo_original>
// kernel: csppc_forward_nchw.3
$region0: #{csppc_forward_nchw.3}
  #allocation0 [shape = 'u32[]', space=smem, size = 0x4, offset = 0x4, fixed_abs, tag = 'smem constant byte address 0x4 - core index']
  #allocation1 [shape = 'u32[144,128]{1,0:T(1,128)}', space=vmem, size = 0x12000, scoped, tag = 'internal scratch']
  %s0 = inlined_call_operand.vmem [shape: f32[512,16], index: 0, kind: input, shape index: {}]
  %s1 = inlined_call_operand.vmem [shape: f32[16,16], index: 1, kind: input, shape index: {}]
  %s2 = inlined_call_operand.vmem [shape: f32[1,16], index: 2, kind: input, shape index: {}]
  %s3 = inlined_call_operand.vmem [shape: f32[512,16], index: 3, kind: output, shape index: {}]
  %s4 = sld [smem:[#allocation0]]
  $region22: #{csppc_forward_nchw.3} parent=0
    _
  %s6 = ssub.s32 1, %s4
  %s7 = scalar_select 0, %s6, %s4
  // Predicated region
  $region2: #{csppc_forward_nchw.3} parent=0 // pred_check
    _
  $region3: #{csppc_forward_nchw.3} parent=0 // pred_check_branch
    %9 = sbr.rel (0) target = $region5
  $region4: #{csppc_forward_nchw.3} parent=0 // pred_region
    _
  $region5: #{csppc_forward_nchw.3} parent=0 // pred_fallthru
    _
  // Predicated region
  $region6: #{csppc_forward_nchw.3} parent=0 // pred_check
    _
  $region7: #{csppc_forward_nchw.3} parent=0 // pred_check_branch
    %11 = sbr.rel (0) target = $region9
  $region8: #{csppc_forward_nchw.3} parent=0 // pred_region
    _
  $region9: #{csppc_forward_nchw.3} parent=0 // pred_fallthru
    _
  // Predicated region
  $region10: #{csppc_forward_nchw.3} parent=0 // pred_check
    _
  $region11: #{csppc_forward_nchw.3} parent=0 // pred_check_branch
    %13 = sbr.rel (0) target = $region13
  $region12: #{csppc_forward_nchw.3} parent=0 // pred_region
    _
  $region13: #{csppc_forward_nchw.3} parent=0 // pred_fallthru
    _
  %v14 = vld [vmem:[%s0] sm:$0xff]
  %v15 = vld [vmem:[%s0 + $0x8] sm:$0xff]
  %v16 = vld [vmem:[%s0 + $0x10] sm:$0xff]
  %v17 = vld [vmem:[%s0 + $0x18] sm:$0xff]
  %v18 = vld [vmem:[%s0 + $0x20] sm:$0xff]
  %v19 = vld [vmem:[%s0 + $0x28] sm:$0xff]
  %v20 = vld [vmem:[%s0 + $0x30] sm:$0xff]
  %v21 = vld [vmem:[%s0 + $0x38] sm:$0xff]
  %v22 = vld [vmem:[%s0 + $0x40] sm:$0xff]
  %v23 = vld [vmem:[%s0 + $0x48] sm:$0xff]
  %v24 = vld [vmem:[%s0 + $0x50] sm:$0xff]
  %v25 = vld [vmem:[%s0 + $0x58] sm:$0xff]
  %v26 = vld [vmem:[%s0 + $0x60] sm:$0xff]
  %v27 = vld [vmem:[%s0 + $0x68] sm:$0xff]
  %v28 = vld [vmem:[%s0 + $0x70] sm:$0xff]
  %v29 = vld [vmem:[%s0 + $0x78] sm:$0xff]
  %v30 = vld [vmem:[%s0 + $0x80] sm:$0xff]
  %v31 = vld [vmem:[%s0 + $0x88] sm:$0xff]
  %v32 = vld [vmem:[%s0 + $0x90] sm:$0xff]
  %v33 = vld [vmem:[%s0 + $0x98] sm:$0xff]
  %v34 = vld [vmem:[%s0 + $0xa0] sm:$0xff]
  %v35 = vld [vmem:[%s0 + $0xa8] sm:$0xff]
  %v36 = vld [vmem:[%s0 + $0xb0] sm:$0xff]
  %v37 = vld [vmem:[%s0 + $0xb8] sm:$0xff]
  %v38 = vld [vmem:[%s0 + $0xc0] sm:$0xff]
  %v39 = vld [vmem:[%s0 + $0xc8] sm:$0xff]
  %v40 = vld [vmem:[%s0 + $0xd0] sm:$0xff]
  %v41 = vld [vmem:[%s0 + $0xd8] sm:$0xff]
  %v42 = vld [vmem:[%s0 + $0xe0] sm:$0xff]
  %v43 = vld [vmem:[%s0 + $0xe8] sm:$0xff]
  %v44 = vld [vmem:[%s0 + $0xf0] sm:$0xff]
  %v45 = vld [vmem:[%s0 + $0xf8] sm:$0xff]
  %v46 = vld [vmem:[%s0 + $0x100] sm:$0xff]
  %v47 = vld [vmem:[%s0 + $0x108] sm:$0xff]
  %v48 = vld [vmem:[%s0 + $0x110] sm:$0xff]
  %v49 = vld [vmem:[%s0 + $0x118] sm:$0xff]
  %v50 = vld [vmem:[%s0 + $0x120] sm:$0xff]
  %v51 = vld [vmem:[%s0 + $0x128] sm:$0xff]
  %v52 = vld [vmem:[%s0 + $0x130] sm:$0xff]
  %v53 = vld [vmem:[%s0 + $0x138] sm:$0xff]
  %v54 = vld [vmem:[%s0 + $0x140] sm:$0xff]
  %v55 = vld [vmem:[%s0 + $0x148] sm:$0xff]
  %v56 = vld [vmem:[%s0 + $0x150] sm:$0xff]
  %v57 = vld [vmem:[%s0 + $0x158] sm:$0xff]
  %v58 = vld [vmem:[%s0 + $0x160] sm:$0xff]
  %v59 = vld [vmem:[%s0 + $0x168] sm:$0xff]
  %v60 = vld [vmem:[%s0 + $0x170] sm:$0xff]
  %v61 = vld [vmem:[%s0 + $0x178] sm:$0xff]
  %v62 = vld [vmem:[%s0 + $0x180] sm:$0xff]
  %v63 = vld [vmem:[%s0 + $0x188] sm:$0xff]
  %v64 = vld [vmem:[%s0 + $0x190] sm:$0xff]
  %v65 = vld [vmem:[%s0 + $0x198] sm:$0xff]
  %v66 = vld [vmem:[%s0 + $0x1a0] sm:$0xff]
  %v67 = vld [vmem:[%s0 + $0x1a8] sm:$0xff]
  %v68 = vld [vmem:[%s0 + $0x1b0] sm:$0xff]
  %v69 = vld [vmem:[%s0 + $0x1b8] sm:$0xff]
  %v70 = vld [vmem:[%s0 + $0x1c0] sm:$0xff]
  %v71 = vld [vmem:[%s0 + $0x1c8] sm:$0xff]
  %v72 = vld [vmem:[%s0 + $0x1d0] sm:$0xff]
  %v73 = vld [vmem:[%s0 + $0x1d8] sm:$0xff]
  %v74 = vld [vmem:[%s0 + $0x1e0] sm:$0xff]
  %v75 = vld [vmem:[%s0 + $0x1e8] sm:$0xff]
  %v76 = vld [vmem:[%s0 + $0x1f0] sm:$0xff]
  %v77 = vld [vmem:[%s0 + $0x1f8] sm:$0xff]
  %v78 = vld [vmem:[%s1] sm:$0xff]
  %v79 = vld [vmem:[%s1 + $0x8] sm:$0xff]
  %v80 = vld [vmem:[%s2] sm:$0x1]
  %v82 = vlaneseq
  %v83 = vshrl.u32 %v82, 7
  %v84 = vsub.s32 0, %v83
  %v85 = vrot.slane %v80, %v84
  %vm87 = vcmask 130048
  %v89 = vsel %vm87, %v14, 0
  %v92 = vsel %vm87, %v15, 0
  %v95 = vsel %vm87, %v16, 0
  %v98 = vsel %vm87, %v17, 0
  %v101 = vsel %vm87, %v18, 0
  %v104 = vsel %vm87, %v19, 0
  %v107 = vsel %vm87, %v20, 0
  %v110 = vsel %vm87, %v21, 0
  %v113 = vsel %vm87, %v22, 0
  %v116 = vsel %vm87, %v23, 0
  %v119 = vsel %vm87, %v24, 0
  %v122 = vsel %vm87, %v25, 0
  %v125 = vsel %vm87, %v26, 0
  %v128 = vsel %vm87, %v27, 0
  %v131 = vsel %vm87, %v28, 0
  %v134 = vsel %vm87, %v29, 0
  %v137 = vsel %vm87, %v30, 0
  %v140 = vsel %vm87, %v31, 0
  %v143 = vsel %vm87, %v32, 0
  %v146 = vsel %vm87, %v33, 0
  %v149 = vsel %vm87, %v34, 0
  %v152 = vsel %vm87, %v35, 0
  %v155 = vsel %vm87, %v36, 0
  %v158 = vsel %vm87, %v37, 0
  %v161 = vsel %vm87, %v38, 0
  %v164 = vsel %vm87, %v39, 0
  %v167 = vsel %vm87, %v40, 0
  %v170 = vsel %vm87, %v41, 0
  %v173 = vsel %vm87, %v42, 0
  %v176 = vsel %vm87, %v43, 0
  %v179 = vsel %vm87, %v44, 0
  %v182 = vsel %vm87, %v45, 0
  %v185 = vsel %vm87, %v46, 0
  %v188 = vsel %vm87, %v47, 0
  %v191 = vsel %vm87, %v48, 0
  %v194 = vsel %vm87, %v49, 0
  %v197 = vsel %vm87, %v50, 0
  %v200 = vsel %vm87, %v51, 0
  %v203 = vsel %vm87, %v52, 0
  %v206 = vsel %vm87, %v53, 0
  %v209 = vsel %vm87, %v54, 0
  %v212 = vsel %vm87, %v55, 0
  %v215 = vsel %vm87, %v56, 0
  %v218 = vsel %vm87, %v57, 0
  %v221 = vsel %vm87, %v58, 0
  %v224 = vsel %vm87, %v59, 0
  %v227 = vsel %vm87, %v60, 0
  %v230 = vsel %vm87, %v61, 0
  %v233 = vsel %vm87, %v62, 0
  %v236 = vsel %vm87, %v63, 0
  %v239 = vsel %vm87, %v64, 0
  %v242 = vsel %vm87, %v65, 0
  %v245 = vsel %vm87, %v66, 0
  %v248 = vsel %vm87, %v67, 0
  %v251 = vsel %vm87, %v68, 0
  %v254 = vsel %vm87, %v69, 0
  %v257 = vsel %vm87, %v70, 0
  %v260 = vsel %vm87, %v71, 0
  %v263 = vsel %vm87, %v72, 0
  %v266 = vsel %vm87, %v73, 0
  %v269 = vsel %vm87, %v74, 0
  %v272 = vsel %vm87, %v75, 0
  %v275 = vsel %vm87, %v76, 0
  %v278 = vsel %vm87, %v77, 0
  %280 = vmatprep.subr.mxu0 0.0
  %281 = vmatpush1.msra.mxu0 0.0
  %282 = vmatprep.subr.mxu0 0.0
  %283 = vmatpush1.msra.mxu0 0.0
  %284 = vmatprep.subr.mxu0 0.0
  %285 = vmatpush1.msra.mxu0 0.0
  %286 = vmatprep.subr.mxu0 0.0
  %287 = vmatpush1.msra.mxu0 0.0
  %288 = vmatprep.subr.mxu0 0.0
  %289 = vmatpush1.msra.mxu0 0.0
  %290 = vmatprep.subr.mxu0 0.0
  %291 = vmatpush1.msra.mxu0 0.0
  %292 = vmatprep.subr.mxu0 0.0
  %293 = vmatpush1.msra.mxu0 0.0
  %294 = vmatprep.subr.mxu0 0.0
  %295 = vmatpush1.msra.mxu0 0.0
  %296 = vmatprep.subr.mxu0 0.0
  %297 = vmatpush1.msra.mxu0 0.0
  %298 = vmatprep.subr.mxu0 0.0
  %299 = vmatpush1.msra.mxu0 0.0
  %300 = vmatprep.subr.mxu0 0.0
  %301 = vmatpush1.msra.mxu0 0.0
  %302 = vmatprep.subr.mxu0 0.0
  %303 = vmatpush1.msra.mxu0 0.0
  %304 = vmatprep.subr.mxu0 0.0
  %305 = vmatpush1.msra.mxu0 0.0
  %306 = vmatprep.subr.mxu0 0.0
  %307 = vmatpush1.msra.mxu0 0.0
  %308 = vmatprep.subr.mxu0 0.0
  %309 = vmatpush1.msra.mxu0 %v79
  %310 = vmatprep.subr.mxu0 0.0
  %311 = vmatpush1.msra.mxu0 %v78
  %312 = vmatprep.subr.mxu0 0.0
  %313 = vmatpush2.msra.mxu0 0.0
  %314 = vmatprep.subr.mxu0 0.0
  %315 = vmatpush2.msra.mxu0 0.0
  %316 = vmatprep.subr.mxu0 0.0
  %317 = vmatpush2.msra.mxu0 0.0
  %318 = vmatprep.subr.mxu0 0.0
  %319 = vmatpush2.msra.mxu0 0.0
  %320 = vmatprep.subr.mxu0 0.0
  %321 = vmatpush2.msra.mxu0 0.0
  %322 = vmatprep.subr.mxu0 0.0
  %323 = vmatpush2.msra.mxu0 0.0
  %324 = vmatprep.subr.mxu0 0.0
  %325 = vmatpush2.msra.mxu0 0.0
  %326 = vmatprep.subr.mxu0 0.0
  %327 = vmatpush2.msra.mxu0 0.0
  %328 = vmatprep.subr.mxu0 0.0
  %329 = vmatpush2.msra.mxu0 0.0
  %330 = vmatprep.subr.mxu0 0.0
  %331 = vmatpush2.msra.mxu0 0.0
  %332 = vmatprep.subr.mxu0 0.0
  %333 = vmatpush2.msra.mxu0 0.0
  %334 = vmatprep.subr.mxu0 0.0
  %335 = vmatpush2.msra.mxu0 0.0
  %336 = vmatprep.subr.mxu0 0.0
  %337 = vmatpush2.msra.mxu0 0.0
  %338 = vmatprep.subr.mxu0 0.0
  %339 = vmatpush2.msra.mxu0 0.0
  %340 = vmatprep.subr.mxu0 0.0
  %341 = vmatpush2.msra.mxu0 0.0
  %342 = vmatprep.subr.mxu0 0.0
  %343 = vmatpush2.msra.mxu0 0.0
  %344 = vmatprep.mubr.f32.mxu0 0.0
  %345 = vmatmul.mubr.f32.gmra.mxu0 %v89
  %v346 = vpop.f32.mrf.mxu0
  %v347 = vadd.f32 %v85, %v346
  %v348 = vpop.f32.mrf.mxu0
  %349 = vmatprep.mubr.f32.mxu0 0.0
  %350 = vmatmul.mubr.f32.gmra.mxu0 %v92
  %v351 = vpop.f32.mrf.mxu0
  %v352 = vadd.f32 %v85, %v351
  %v353 = vpop.f32.mrf.mxu0
  %354 = vmatprep.mubr.f32.mxu0 0.0
  %355 = vmatmul.mubr.f32.gmra.mxu0 %v95
  %v356 = vpop.f32.mrf.mxu0
  %v357 = vadd.f32 %v85, %v356
  %v358 = vpop.f32.mrf.mxu0
  %359 = vmatprep.mubr.f32.mxu0 0.0
  %360 = vmatmul.mubr.f32.gmra.mxu0 %v98
  %v361 = vpop.f32.mrf.mxu0
  %v362 = vadd.f32 %v85, %v361
  %v363 = vpop.f32.mrf.mxu0
  %364 = vmatprep.mubr.f32.mxu0 0.0
  %365 = vmatmul.mubr.f32.gmra.mxu0 %v101
  %v366 = vpop.f32.mrf.mxu0
  %v367 = vadd.f32 %v85, %v366
  %v368 = vpop.f32.mrf.mxu0
  %369 = vmatprep.mubr.f32.mxu0 0.0
  %370 = vmatmul.mubr.f32.gmra.mxu0 %v104
  %v371 = vpop.f32.mrf.mxu0
  %v372 = vadd.f32 %v85, %v371
  %v373 = vpop.f32.mrf.mxu0
  %374 = vmatprep.mubr.f32.mxu0 0.0
  %375 = vmatmul.mubr.f32.gmra.mxu0 %v107
  %v376 = vpop.f32.mrf.mxu0
  %v377 = vadd.f32 %v85, %v376
  %v378 = vpop.f32.mrf.mxu0
  %379 = vmatprep.mubr.f32.mxu0 0.0
  %380 = vmatmul.mubr.f32.gmra.mxu0 %v110
  %v381 = vpop.f32.mrf.mxu0
  %v382 = vadd.f32 %v85, %v381
  %v383 = vpop.f32.mrf.mxu0
  %384 = vmatprep.mubr.f32.mxu0 0.0
  %385 = vmatmul.mubr.f32.gmra.mxu0 %v113
  %v386 = vpop.f32.mrf.mxu0
  %v387 = vadd.f32 %v85, %v386
  %v388 = vpop.f32.mrf.mxu0
  %389 = vmatprep.mubr.f32.mxu0 0.0
  %390 = vmatmul.mubr.f32.gmra.mxu0 %v116
  %v391 = vpop.f32.mrf.mxu0
  %v392 = vadd.f32 %v85, %v391
  %v393 = vpop.f32.mrf.mxu0
  %394 = vmatprep.mubr.f32.mxu0 0.0
  %395 = vmatmul.mubr.f32.gmra.mxu0 %v119
  %v396 = vpop.f32.mrf.mxu0
  %v397 = vadd.f32 %v85, %v396
  %v398 = vpop.f32.mrf.mxu0
  %399 = vmatprep.mubr.f32.mxu0 0.0
  %400 = vmatmul.mubr.f32.gmra.mxu0 %v122
  %v401 = vpop.f32.mrf.mxu0
  %v402 = vadd.f32 %v85, %v401
  %v403 = vpop.f32.mrf.mxu0
  %404 = vmatprep.mubr.f32.mxu0 0.0
  %405 = vmatmul.mubr.f32.gmra.mxu0 %v125
  %v406 = vpop.f32.mrf.mxu0
  %v407 = vadd.f32 %v85, %v406
  %v408 = vpop.f32.mrf.mxu0
  %409 = vmatprep.mubr.f32.mxu0 0.0
  %410 = vmatmul.mubr.f32.gmra.mxu0 %v128
  %v411 = vpop.f32.mrf.mxu0
  %v412 = vadd.f32 %v85, %v411
  %v413 = vpop.f32.mrf.mxu0
  %414 = vmatprep.mubr.f32.mxu0 0.0
  %415 = vmatmul.mubr.f32.gmra.mxu0 %v131
  %v416 = vpop.f32.mrf.mxu0
  %v417 = vadd.f32 %v85, %v416
  %v418 = vpop.f32.mrf.mxu0
  %419 = vmatprep.mubr.f32.mxu0 0.0
  %420 = vmatmul.mubr.f32.gmra.mxu0 %v134
  %v421 = vpop.f32.mrf.mxu0
  %v422 = vadd.f32 %v85, %v421
  %v423 = vpop.f32.mrf.mxu0
  %424 = vmatprep.mubr.f32.mxu0 0.0
  %425 = vmatmul.mubr.f32.gmra.mxu0 %v137
  %v426 = vpop.f32.mrf.mxu0
  %v427 = vadd.f32 %v85, %v426
  %v428 = vpop.f32.mrf.mxu0
  %429 = vmatprep.mubr.f32.mxu0 0.0
  %430 = vmatmul.mubr.f32.gmra.mxu0 %v140
  %v431 = vpop.f32.mrf.mxu0
  %v432 = vadd.f32 %v85, %v431
  %v433 = vpop.f32.mrf.mxu0
  %434 = vmatprep.mubr.f32.mxu0 0.0
  %435 = vmatmul.mubr.f32.gmra.mxu0 %v143
  %v436 = vpop.f32.mrf.mxu0
  %v437 = vadd.f32 %v85, %v436
  %v438 = vpop.f32.mrf.mxu0
  %439 = vmatprep.mubr.f32.mxu0 0.0
  %440 = vmatmul.mubr.f32.gmra.mxu0 %v146
  %v441 = vpop.f32.mrf.mxu0
  %v442 = vadd.f32 %v85, %v441
  %v443 = vpop.f32.mrf.mxu0
  %444 = vmatprep.mubr.f32.mxu0 0.0
  %445 = vmatmul.mubr.f32.gmra.mxu0 %v149
  %v446 = vpop.f32.mrf.mxu0
  %v447 = vadd.f32 %v85, %v446
  %v448 = vpop.f32.mrf.mxu0
  %449 = vmatprep.mubr.f32.mxu0 0.0
  %450 = vmatmul.mubr.f32.gmra.mxu0 %v152
  %v451 = vpop.f32.mrf.mxu0
  %v452 = vadd.f32 %v85, %v451
  %v453 = vpop.f32.mrf.mxu0
  %454 = vmatprep.mubr.f32.mxu0 0.0
  %455 = vmatmul.mubr.f32.gmra.mxu0 %v155
  %v456 = vpop.f32.mrf.mxu0
  %v457 = vadd.f32 %v85, %v456
  %v458 = vpop.f32.mrf.mxu0
  %459 = vmatprep.mubr.f32.mxu0 0.0
  %460 = vmatmul.mubr.f32.gmra.mxu0 %v158
  %v461 = vpop.f32.mrf.mxu0
  %v462 = vadd.f32 %v85, %v461
  %v463 = vpop.f32.mrf.mxu0
  %464 = vmatprep.mubr.f32.mxu0 0.0
  %465 = vmatmul.mubr.f32.gmra.mxu0 %v161
  %v466 = vpop.f32.mrf.mxu0
  %v467 = vadd.f32 %v85, %v466
  %v468 = vpop.f32.mrf.mxu0
  %469 = vmatprep.mubr.f32.mxu0 0.0
  %470 = vmatmul.mubr.f32.gmra.mxu0 %v164
  %v471 = vpop.f32.mrf.mxu0
  %v472 = vadd.f32 %v85, %v471
  %v473 = vpop.f32.mrf.mxu0
  %474 = vmatprep.mubr.f32.mxu0 0.0
  %475 = vmatmul.mubr.f32.gmra.mxu0 %v167
  %v476 = vpop.f32.mrf.mxu0
  %v477 = vadd.f32 %v85, %v476
  %v478 = vpop.f32.mrf.mxu0
  %479 = vmatprep.mubr.f32.mxu0 0.0
  %480 = vmatmul.mubr.f32.gmra.mxu0 %v170
  %v481 = vpop.f32.mrf.mxu0
  %v482 = vadd.f32 %v85, %v481
  %v483 = vpop.f32.mrf.mxu0
  %484 = vmatprep.mubr.f32.mxu0 0.0
  %485 = vmatmul.mubr.f32.gmra.mxu0 %v173
  %v486 = vpop.f32.mrf.mxu0
  %v487 = vadd.f32 %v85, %v486
  %v488 = vpop.f32.mrf.mxu0
  %489 = vmatprep.mubr.f32.mxu0 0.0
  %490 = vmatmul.mubr.f32.gmra.mxu0 %v176
  %v491 = vpop.f32.mrf.mxu0
  %v492 = vadd.f32 %v85, %v491
  %v493 = vpop.f32.mrf.mxu0
  %494 = vmatprep.mubr.f32.mxu0 0.0
  %495 = vmatmul.mubr.f32.gmra.mxu0 %v179
  %v496 = vpop.f32.mrf.mxu0
  %v497 = vadd.f32 %v85, %v496
  %v498 = vpop.f32.mrf.mxu0
  %499 = vmatprep.mubr.f32.mxu0 0.0
  %500 = vmatmul.mubr.f32.gmra.mxu0 %v182
  %v501 = vpop.f32.mrf.mxu0
  %v502 = vadd.f32 %v85, %v501
  %v503 = vpop.f32.mrf.mxu0
  %504 = vmatprep.mubr.f32.mxu0 0.0
  %505 = vmatmul.mubr.f32.gmra.mxu0 %v185
  %v506 = vpop.f32.mrf.mxu0
  %v507 = vadd.f32 %v85, %v506
  %v508 = vpop.f32.mrf.mxu0
  %509 = vmatprep.mubr.f32.mxu0 0.0
  %510 = vmatmul.mubr.f32.gmra.mxu0 %v188
  %v511 = vpop.f32.mrf.mxu0
  %v512 = vadd.f32 %v85, %v511
  %v513 = vpop.f32.mrf.mxu0
  %514 = vmatprep.mubr.f32.mxu0 0.0
  %515 = vmatmul.mubr.f32.gmra.mxu0 %v191
  %v516 = vpop.f32.mrf.mxu0
  %v517 = vadd.f32 %v85, %v516
  %v518 = vpop.f32.mrf.mxu0
  %519 = vmatprep.mubr.f32.mxu0 0.0
  %520 = vmatmul.mubr.f32.gmra.mxu0 %v194
  %v521 = vpop.f32.mrf.mxu0
  %v522 = vadd.f32 %v85, %v521
  %v523 = vpop.f32.mrf.mxu0
  %524 = vmatprep.mubr.f32.mxu0 0.0
  %525 = vmatmul.mubr.f32.gmra.mxu0 %v197
  %v526 = vpop.f32.mrf.mxu0
  %v527 = vadd.f32 %v85, %v526
  %v528 = vpop.f32.mrf.mxu0
  %529 = vmatprep.mubr.f32.mxu0 0.0
  %530 = vmatmul.mubr.f32.gmra.mxu0 %v200
  %v531 = vpop.f32.mrf.mxu0
  %v532 = vadd.f32 %v85, %v531
  %v533 = vpop.f32.mrf.mxu0
  %534 = vmatprep.mubr.f32.mxu0 0.0
  %535 = vmatmul.mubr.f32.gmra.mxu0 %v203
  %v536 = vpop.f32.mrf.mxu0
  %v537 = vadd.f32 %v85, %v536
  %v538 = vpop.f32.mrf.mxu0
  %539 = vmatprep.mubr.f32.mxu0 0.0
  %540 = vmatmul.mubr.f32.gmra.mxu0 %v206
  %v541 = vpop.f32.mrf.mxu0
  %v542 = vadd.f32 %v85, %v541
  %v543 = vpop.f32.mrf.mxu0
  %544 = vmatprep.mubr.f32.mxu0 0.0
  %545 = vmatmul.mubr.f32.gmra.mxu0 %v209
  %v546 = vpop.f32.mrf.mxu0
  %v547 = vadd.f32 %v85, %v546
  %v548 = vpop.f32.mrf.mxu0
  %549 = vmatprep.mubr.f32.mxu0 0.0
  %550 = vmatmul.mubr.f32.gmra.mxu0 %v212
  %v551 = vpop.f32.mrf.mxu0
  %v552 = vadd.f32 %v85, %v551
  %v553 = vpop.f32.mrf.mxu0
  %554 = vmatprep.mubr.f32.mxu0 0.0
  %555 = vmatmul.mubr.f32.gmra.mxu0 %v215
  %v556 = vpop.f32.mrf.mxu0
  %v557 = vadd.f32 %v85, %v556
  %v558 = vpop.f32.mrf.mxu0
  %559 = vmatprep.mubr.f32.mxu0 0.0
  %560 = vmatmul.mubr.f32.gmra.mxu0 %v218
  %v561 = vpop.f32.mrf.mxu0
  %v562 = vadd.f32 %v85, %v561
  %v563 = vpop.f32.mrf.mxu0
  %564 = vmatprep.mubr.f32.mxu0 0.0
  %565 = vmatmul.mubr.f32.gmra.mxu0 %v221
  %v566 = vpop.f32.mrf.mxu0
  %v567 = vadd.f32 %v85, %v566
  %v568 = vpop.f32.mrf.mxu0
  %569 = vmatprep.mubr.f32.mxu0 0.0
  %570 = vmatmul.mubr.f32.gmra.mxu0 %v224
  %v571 = vpop.f32.mrf.mxu0
  %v572 = vadd.f32 %v85, %v571
  %v573 = vpop.f32.mrf.mxu0
  %574 = vmatprep.mubr.f32.mxu0 0.0
  %575 = vmatmul.mubr.f32.gmra.mxu0 %v227
  %v576 = vpop.f32.mrf.mxu0
  %v577 = vadd.f32 %v85, %v576
  %v578 = vpop.f32.mrf.mxu0
  %579 = vmatprep.mubr.f32.mxu0 0.0
  %580 = vmatmul.mubr.f32.gmra.mxu0 %v230
  %v581 = vpop.f32.mrf.mxu0
  %v582 = vadd.f32 %v85, %v581
  %v583 = vpop.f32.mrf.mxu0
  %584 = vmatprep.mubr.f32.mxu0 0.0
  %585 = vmatmul.mubr.f32.gmra.mxu0 %v233
  %v586 = vpop.f32.mrf.mxu0
  %v587 = vadd.f32 %v85, %v586
  %v588 = vpop.f32.mrf.mxu0
  %589 = vmatprep.mubr.f32.mxu0 0.0
  %590 = vmatmul.mubr.f32.gmra.mxu0 %v236
  %v591 = vpop.f32.mrf.mxu0
  %v592 = vadd.f32 %v85, %v591
  %v593 = vpop.f32.mrf.mxu0
  %594 = vmatprep.mubr.f32.mxu0 0.0
  %595 = vmatmul.mubr.f32.gmra.mxu0 %v239
  %v596 = vpop.f32.mrf.mxu0
  %v597 = vadd.f32 %v85, %v596
  %v598 = vpop.f32.mrf.mxu0
  %599 = vmatprep.mubr.f32.mxu0 0.0
  %600 = vmatmul.mubr.f32.gmra.mxu0 %v242
  %v601 = vpop.f32.mrf.mxu0
  %v602 = vadd.f32 %v85, %v601
  %v603 = vpop.f32.mrf.mxu0
  %604 = vmatprep.mubr.f32.mxu0 0.0
  %605 = vmatmul.mubr.f32.gmra.mxu0 %v245
  %v606 = vpop.f32.mrf.mxu0
  %v607 = vadd.f32 %v85, %v606
  %v608 = vpop.f32.mrf.mxu0
  %609 = vmatprep.mubr.f32.mxu0 0.0
  %610 = vmatmul.mubr.f32.gmra.mxu0 %v248
  %v611 = vpop.f32.mrf.mxu0
  %v612 = vadd.f32 %v85, %v611
  %v613 = vpop.f32.mrf.mxu0
  %614 = vmatprep.mubr.f32.mxu0 0.0
  %615 = vmatmul.mubr.f32.gmra.mxu0 %v251
  %v616 = vpop.f32.mrf.mxu0
  %v617 = vadd.f32 %v85, %v616
  %v618 = vpop.f32.mrf.mxu0
  %619 = vmatprep.mubr.f32.mxu0 0.0
  %620 = vmatmul.mubr.f32.gmra.mxu0 %v254
  %v621 = vpop.f32.mrf.mxu0
  %v622 = vadd.f32 %v85, %v621
  %v623 = vpop.f32.mrf.mxu0
  %624 = vmatprep.mubr.f32.mxu0 0.0
  %625 = vmatmul.mubr.f32.gmra.mxu0 %v257
  %v626 = vpop.f32.mrf.mxu0
  %v627 = vadd.f32 %v85, %v626
  %v628 = vpop.f32.mrf.mxu0
  %629 = vmatprep.mubr.f32.mxu0 0.0
  %630 = vmatmul.mubr.f32.gmra.mxu0 %v260
  %v631 = vpop.f32.mrf.mxu0
  %v632 = vadd.f32 %v85, %v631
  %v633 = vpop.f32.mrf.mxu0
  %634 = vmatprep.mubr.f32.mxu0 0.0
  %635 = vmatmul.mubr.f32.gmra.mxu0 %v263
  %v636 = vpop.f32.mrf.mxu0
  %v637 = vadd.f32 %v85, %v636
  %v638 = vpop.f32.mrf.mxu0
  %639 = vmatprep.mubr.f32.mxu0 0.0
  %640 = vmatmul.mubr.f32.gmra.mxu0 %v266
  %v641 = vpop.f32.mrf.mxu0
  %v642 = vadd.f32 %v85, %v641
  %v643 = vpop.f32.mrf.mxu0
  %644 = vmatprep.mubr.f32.mxu0 0.0
  %645 = vmatmul.mubr.f32.gmra.mxu0 %v269
  %v646 = vpop.f32.mrf.mxu0
  %v647 = vadd.f32 %v85, %v646
  %v648 = vpop.f32.mrf.mxu0
  %649 = vmatprep.mubr.f32.mxu0 0.0
  %650 = vmatmul.mubr.f32.gmra.mxu0 %v272
  %v651 = vpop.f32.mrf.mxu0
  %v652 = vadd.f32 %v85, %v651
  %v653 = vpop.f32.mrf.mxu0
  %654 = vmatprep.mubr.f32.mxu0 0.0
  %655 = vmatmul.mubr.f32.gmra.mxu0 %v275
  %v656 = vpop.f32.mrf.mxu0
  %v657 = vadd.f32 %v85, %v656
  %v658 = vpop.f32.mrf.mxu0
  %659 = vmatprep.mubr.f32.mxu0 0.0
  %660 = vmatmul.mubr.f32.gmra.mxu0 %v278
  %v661 = vpop.f32.mrf.mxu0
  %v662 = vadd.f32 %v85, %v661
  %v663 = vpop.f32.mrf.mxu0
  %664 = vdwg.mxu0
  %v665 = vxor.u32 %v347, 2147483648
  %v666 = vxor.u32 %v352, 2147483648
  %v667 = vxor.u32 %v357, 2147483648
  %v668 = vxor.u32 %v362, 2147483648
  %v669 = vxor.u32 %v367, 2147483648
  %v670 = vxor.u32 %v372, 2147483648
  %v671 = vxor.u32 %v377, 2147483648
  %v672 = vxor.u32 %v382, 2147483648
  %v673 = vxor.u32 %v387, 2147483648
  %v674 = vxor.u32 %v392, 2147483648
  %v675 = vxor.u32 %v397, 2147483648
  %v676 = vxor.u32 %v402, 2147483648
  %v677 = vxor.u32 %v407, 2147483648
  %v678 = vxor.u32 %v412, 2147483648
  %v679 = vxor.u32 %v417, 2147483648
  %v680 = vxor.u32 %v422, 2147483648
  %v681 = vxor.u32 %v427, 2147483648
  %v682 = vxor.u32 %v432, 2147483648
  %v683 = vxor.u32 %v437, 2147483648
  %v684 = vxor.u32 %v442, 2147483648
  %v685 = vxor.u32 %v447, 2147483648
  %v686 = vxor.u32 %v452, 2147483648
  %v687 = vxor.u32 %v457, 2147483648
  %v688 = vxor.u32 %v462, 2147483648
  %v689 = vxor.u32 %v467, 2147483648
  %v690 = vxor.u32 %v472, 2147483648
  %v691 = vxor.u32 %v477, 2147483648
  %v692 = vxor.u32 %v482, 2147483648
  %v693 = vxor.u32 %v487, 2147483648
  %v694 = vxor.u32 %v492, 2147483648
  %v695 = vxor.u32 %v497, 2147483648
  %v696 = vxor.u32 %v502, 2147483648
  %v697 = vxor.u32 %v507, 2147483648
  %v698 = vxor.u32 %v512, 2147483648
  %v699 = vxor.u32 %v517, 2147483648
  %v700 = vxor.u32 %v522, 2147483648
  %v701 = vxor.u32 %v527, 2147483648
  %v702 = vxor.u32 %v532, 2147483648
  %v703 = vxor.u32 %v537, 2147483648
  %v704 = vxor.u32 %v542, 2147483648
  %v705 = vxor.u32 %v547, 2147483648
  %v706 = vxor.u32 %v552, 2147483648
  %v707 = vxor.u32 %v557, 2147483648
  %v708 = vxor.u32 %v562, 2147483648
  %v709 = vxor.u32 %v567, 2147483648
  %v710 = vxor.u32 %v572, 2147483648
  %v711 = vxor.u32 %v577, 2147483648
  %v712 = vxor.u32 %v582, 2147483648
  %v713 = vxor.u32 %v587, 2147483648
  %v714 = vxor.u32 %v592, 2147483648
  %v715 = vxor.u32 %v597, 2147483648
  %v716 = vxor.u32 %v602, 2147483648
  %v717 = vxor.u32 %v607, 2147483648
  %v718 = vxor.u32 %v612, 2147483648
  %v719 = vxor.u32 %v617, 2147483648
  %v720 = vxor.u32 %v622, 2147483648
  %v721 = vxor.u32 %v627, 2147483648
  %v722 = vxor.u32 %v632, 2147483648
  %v723 = vxor.u32 %v637, 2147483648
  %v724 = vxor.u32 %v642, 2147483648
  %v725 = vxor.u32 %v647, 2147483648
  %v726 = vxor.u32 %v652, 2147483648
  %v727 = vxor.u32 %v657, 2147483648
  %v728 = vxor.u32 %v662, 2147483648
  %v729 = vmul.f32 %v665, 1.442695
  %v730 = vpow.pop %v729
  %v731 = vmul.f32 %v666, 1.442695
  %v732 = vpow.pop %v731
  %v733 = vmul.f32 %v667, 1.442695
  %v734 = vpow.pop %v733
  %v735 = vmul.f32 %v668, 1.442695
  %v736 = vpow.pop %v735
  %v737 = vmul.f32 %v669, 1.442695
  %v738 = vpow.pop %v737
  %v739 = vmul.f32 %v670, 1.442695
  %v740 = vpow.pop %v739
  %v741 = vmul.f32 %v671, 1.442695
  %v742 = vpow.pop %v741
  %v743 = vmul.f32 %v672, 1.442695
  %v744 = vpow.pop %v743
  %v745 = vmul.f32 %v673, 1.442695
  %v746 = vpow.pop %v745
  %v747 = vmul.f32 %v674, 1.442695
  %v748 = vpow.pop %v747
  %v749 = vmul.f32 %v675, 1.442695
  %v750 = vpow.pop %v749
  %v751 = vmul.f32 %v676, 1.442695
  %v752 = vpow.pop %v751
  %v753 = vmul.f32 %v677, 1.442695
  %v754 = vpow.pop %v753
  %v755 = vmul.f32 %v678, 1.442695
  %v756 = vpow.pop %v755
  %v757 = vmul.f32 %v679, 1.442695
  %v758 = vpow.pop %v757
  %v759 = vmul.f32 %v680, 1.442695
  %v760 = vpow.pop %v759
  %v761 = vmul.f32 %v681, 1.442695
  %v762 = vpow.pop %v761
  %v763 = vmul.f32 %v682, 1.442695
  %v764 = vpow.pop %v763
  %v765 = vmul.f32 %v683, 1.442695
  %v766 = vpow.pop %v765
  %v767 = vmul.f32 %v684, 1.442695
  %v768 = vpow.pop %v767
  %v769 = vmul.f32 %v685, 1.442695
  %v770 = vpow.pop %v769
  %v771 = vmul.f32 %v686, 1.442695
  %v772 = vpow.pop %v771
  %v773 = vmul.f32 %v687, 1.442695
  %v774 = vpow.pop %v773
  %v775 = vmul.f32 %v688, 1.442695
  %v776 = vpow.pop %v775
  %v777 = vmul.f32 %v689, 1.442695
  %v778 = vpow.pop %v777
  %v779 = vmul.f32 %v690, 1.442695
  %v780 = vpow.pop %v779
  %v781 = vmul.f32 %v691, 1.442695
  %v782 = vpow.pop %v781
  %v783 = vmul.f32 %v692, 1.442695
  %v784 = vpow.pop %v783
  %v785 = vmul.f32 %v693, 1.442695
  %v786 = vpow.pop %v785
  %v787 = vmul.f32 %v694, 1.442695
  %v788 = vpow.pop %v787
  %v789 = vmul.f32 %v695, 1.442695
  %v790 = vpow.pop %v789
  %v791 = vmul.f32 %v696, 1.442695
  %v792 = vpow.pop %v791
  %v793 = vmul.f32 %v697, 1.442695
  %v794 = vpow.pop %v793
  %v795 = vmul.f32 %v698, 1.442695
  %v796 = vpow.pop %v795
  %v797 = vmul.f32 %v699, 1.442695
  %v798 = vpow.pop %v797
  %v799 = vmul.f32 %v700, 1.442695
  %v800 = vpow.pop %v799
  %v801 = vmul.f32 %v701, 1.442695
  %v802 = vpow.pop %v801
  %v803 = vmul.f32 %v702, 1.442695
  %v804 = vpow.pop %v803
  %v805 = vmul.f32 %v703, 1.442695
  %v806 = vpow.pop %v805
  %v807 = vmul.f32 %v704, 1.442695
  %v808 = vpow.pop %v807
  %v809 = vmul.f32 %v705, 1.442695
  %v810 = vpow.pop %v809
  %v811 = vmul.f32 %v706, 1.442695
  %v812 = vpow.pop %v811
  %v813 = vmul.f32 %v707, 1.442695
  %v814 = vpow.pop %v813
  %v815 = vmul.f32 %v708, 1.442695
  %v816 = vpow.pop %v815
  %v817 = vmul.f32 %v709, 1.442695
  %v818 = vpow.pop %v817
  %v819 = vmul.f32 %v710, 1.442695
  %v820 = vpow.pop %v819
  %v821 = vmul.f32 %v711, 1.442695
  %v822 = vpow.pop %v821
  %v823 = vmul.f32 %v712, 1.442695
  %v824 = vpow.pop %v823
  %v825 = vmul.f32 %v713, 1.442695
  %v826 = vpow.pop %v825
  %v827 = vmul.f32 %v714, 1.442695
  %v828 = vpow.pop %v827
  %v829 = vmul.f32 %v715, 1.442695
  %v830 = vpow.pop %v829
  %v831 = vmul.f32 %v716, 1.442695
  %v832 = vpow.pop %v831
  %v833 = vmul.f32 %v717, 1.442695
  %v834 = vpow.pop %v833
  %v835 = vmul.f32 %v718, 1.442695
  %v836 = vpow.pop %v835
  %v837 = vmul.f32 %v719, 1.442695
  %v838 = vpow.pop %v837
  %v839 = vmul.f32 %v720, 1.442695
  %v840 = vpow.pop %v839
  %v841 = vmul.f32 %v721, 1.442695
  %v842 = vpow.pop %v841
  %v843 = vmul.f32 %v722, 1.442695
  %v844 = vpow.pop %v843
  %v845 = vmul.f32 %v723, 1.442695
  %v846 = vpow.pop %v845
  %v847 = vmul.f32 %v724, 1.442695
  %v848 = vpow.pop %v847
  %v849 = vmul.f32 %v725, 1.442695
  %v850 = vpow.pop %v849
  %v851 = vmul.f32 %v726, 1.442695
  %v852 = vpow.pop %v851
  %v853 = vmul.f32 %v727, 1.442695
  %v854 = vpow.pop %v853
  %v855 = vmul.f32 %v728, 1.442695
  %v856 = vpow.pop %v855
  %v857 = vadd.f32 %v730, 1.0
  %v858 = vadd.f32 %v732, 1.0
  %v859 = vadd.f32 %v734, 1.0
  %v860 = vadd.f32 %v736, 1.0
  %v861 = vadd.f32 %v738, 1.0
  %v862 = vadd.f32 %v740, 1.0
  %v863 = vadd.f32 %v742, 1.0
  %v864 = vadd.f32 %v744, 1.0
  %v865 = vadd.f32 %v746, 1.0
  %v866 = vadd.f32 %v748, 1.0
  %v867 = vadd.f32 %v750, 1.0
  %v868 = vadd.f32 %v752, 1.0
  %v869 = vadd.f32 %v754, 1.0
  %v870 = vadd.f32 %v756, 1.0
  %v871 = vadd.f32 %v758, 1.0
  %v872 = vadd.f32 %v760, 1.0
  %v873 = vadd.f32 %v762, 1.0
  %v874 = vadd.f32 %v764, 1.0
  %v875 = vadd.f32 %v766, 1.0
  %v876 = vadd.f32 %v768, 1.0
  %v877 = vadd.f32 %v770, 1.0
  %v878 = vadd.f32 %v772, 1.0
  %v879 = vadd.f32 %v774, 1.0
  %v880 = vadd.f32 %v776, 1.0
  %v881 = vadd.f32 %v778, 1.0
  %v882 = vadd.f32 %v780, 1.0
  %v883 = vadd.f32 %v782, 1.0
  %v884 = vadd.f32 %v784, 1.0
  %v885 = vadd.f32 %v786, 1.0
  %v886 = vadd.f32 %v788, 1.0
  %v887 = vadd.f32 %v790, 1.0
  %v888 = vadd.f32 %v792, 1.0
  %v889 = vadd.f32 %v794, 1.0
  %v890 = vadd.f32 %v796, 1.0
  %v891 = vadd.f32 %v798, 1.0
  %v892 = vadd.f32 %v800, 1.0
  %v893 = vadd.f32 %v802, 1.0
  %v894 = vadd.f32 %v804, 1.0
  %v895 = vadd.f32 %v806, 1.0
  %v896 = vadd.f32 %v808, 1.0
  %v897 = vadd.f32 %v810, 1.0
  %v898 = vadd.f32 %v812, 1.0
  %v899 = vadd.f32 %v814, 1.0
  %v900 = vadd.f32 %v816, 1.0
  %v901 = vadd.f32 %v818, 1.0
  %v902 = vadd.f32 %v820, 1.0
  %v903 = vadd.f32 %v822, 1.0
  %v904 = vadd.f32 %v824, 1.0
  %v905 = vadd.f32 %v826, 1.0
  %v906 = vadd.f32 %v828, 1.0
  %v907 = vadd.f32 %v830, 1.0
  %v908 = vadd.f32 %v832, 1.0
  %v909 = vadd.f32 %v834, 1.0
  %v910 = vadd.f32 %v836, 1.0
  %v911 = vadd.f32 %v838, 1.0
  %v912 = vadd.f32 %v840, 1.0
  %v913 = vadd.f32 %v842, 1.0
  %v914 = vadd.f32 %v844, 1.0
  %v915 = vadd.f32 %v846, 1.0
  %v916 = vadd.f32 %v848, 1.0
  %v917 = vadd.f32 %v850, 1.0
  %v918 = vadd.f32 %v852, 1.0
  %v919 = vadd.f32 %v854, 1.0
  %v920 = vadd.f32 %v856, 1.0
  %v921 = vrcp.pop %v857
  %v922 = vmul.f32 1.0, %v921
  %v923 = vrcp.pop %v858
  %v924 = vmul.f32 1.0, %v923
  %v925 = vrcp.pop %v859
  %v926 = vmul.f32 1.0, %v925
  %v927 = vrcp.pop %v860
  %v928 = vmul.f32 1.0, %v927
  %v929 = vrcp.pop %v861
  %v930 = vmul.f32 1.0, %v929
  %v931 = vrcp.pop %v862
  %v932 = vmul.f32 1.0, %v931
  %v933 = vrcp.pop %v863
  %v934 = vmul.f32 1.0, %v933
  %v935 = vrcp.pop %v864
  %v936 = vmul.f32 1.0, %v935
  %v937 = vrcp.pop %v865
  %v938 = vmul.f32 1.0, %v937
  %v939 = vrcp.pop %v866
  %v940 = vmul.f32 1.0, %v939
  %v941 = vrcp.pop %v867
  %v942 = vmul.f32 1.0, %v941
  %v943 = vrcp.pop %v868
  %v944 = vmul.f32 1.0, %v943
  %v945 = vrcp.pop %v869
  %v946 = vmul.f32 1.0, %v945
  %v947 = vrcp.pop %v870
  %v948 = vmul.f32 1.0, %v947
  %v949 = vrcp.pop %v871
  %v950 = vmul.f32 1.0, %v949
  %v951 = vrcp.pop %v872
  %v952 = vmul.f32 1.0, %v951
  %v953 = vrcp.pop %v873
  %v954 = vmul.f32 1.0, %v953
  %v955 = vrcp.pop %v874
  %v956 = vmul.f32 1.0, %v955
  %v957 = vrcp.pop %v875
  %v958 = vmul.f32 1.0, %v957
  %v959 = vrcp.pop %v876
  %v960 = vmul.f32 1.0, %v959
  %v961 = vrcp.pop %v877
  %v962 = vmul.f32 1.0, %v961
  %v963 = vrcp.pop %v878
  %v964 = vmul.f32 1.0, %v963
  %v965 = vrcp.pop %v879
  %v966 = vmul.f32 1.0, %v965
  %v967 = vrcp.pop %v880
  %v968 = vmul.f32 1.0, %v967
  %v969 = vrcp.pop %v881
  %v970 = vmul.f32 1.0, %v969
  %v971 = vrcp.pop %v882
  %v972 = vmul.f32 1.0, %v971
  %v973 = vrcp.pop %v883
  %v974 = vmul.f32 1.0, %v973
  %v975 = vrcp.pop %v884
  %v976 = vmul.f32 1.0, %v975
  %v977 = vrcp.pop %v885
  %v978 = vmul.f32 1.0, %v977
  %v979 = vrcp.pop %v886
  %v980 = vmul.f32 1.0, %v979
  %v981 = vrcp.pop %v887
  %v982 = vmul.f32 1.0, %v981
  %v983 = vrcp.pop %v888
  %v984 = vmul.f32 1.0, %v983
  %v985 = vrcp.pop %v889
  %v986 = vmul.f32 1.0, %v985
  %v987 = vrcp.pop %v890
  %v988 = vmul.f32 1.0, %v987
  %v989 = vrcp.pop %v891
  %v990 = vmul.f32 1.0, %v989
  %v991 = vrcp.pop %v892
  %v992 = vmul.f32 1.0, %v991
  %v993 = vrcp.pop %v893
  %v994 = vmul.f32 1.0, %v993
  %v995 = vrcp.pop %v894
  %v996 = vmul.f32 1.0, %v995
  %v997 = vrcp.pop %v895
  %v998 = vmul.f32 1.0, %v997
  %v999 = vrcp.pop %v896
  %v1000 = vmul.f32 1.0, %v999
  %v1001 = vrcp.pop %v897
  %v1002 = vmul.f32 1.0, %v1001
  %v1003 = vrcp.pop %v898
  %v1004 = vmul.f32 1.0, %v1003
  %v1005 = vrcp.pop %v899
  %v1006 = vmul.f32 1.0, %v1005
  %v1007 = vrcp.pop %v900
  %v1008 = vmul.f32 1.0, %v1007
  %v1009 = vrcp.pop %v901
  %v1010 = vmul.f32 1.0, %v1009
  %v1011 = vrcp.pop %v902
  %v1012 = vmul.f32 1.0, %v1011
  %v1013 = vrcp.pop %v903
  %v1014 = vmul.f32 1.0, %v1013
  %v1015 = vrcp.pop %v904
  %v1016 = vmul.f32 1.0, %v1015
  %v1017 = vrcp.pop %v905
  %v1018 = vmul.f32 1.0, %v1017
  %v1019 = vrcp.pop %v906
  %v1020 = vmul.f32 1.0, %v1019
  %v1021 = vrcp.pop %v907
  %v1022 = vmul.f32 1.0, %v1021
  %v1023 = vrcp.pop %v908
  %v1024 = vmul.f32 1.0, %v1023
  %v1025 = vrcp.pop %v909
  %v1026 = vmul.f32 1.0, %v1025
  %v1027 = vrcp.pop %v910
  %v1028 = vmul.f32 1.0, %v1027
  %v1029 = vrcp.pop %v911
  %v1030 = vmul.f32 1.0, %v1029
  %v1031 = vrcp.pop %v912
  %v1032 = vmul.f32 1.0, %v1031
  %v1033 = vrcp.pop %v913
  %v1034 = vmul.f32 1.0, %v1033
  %v1035 = vrcp.pop %v914
  %v1036 = vmul.f32 1.0, %v1035
  %v1037 = vrcp.pop %v915
  %v1038 = vmul.f32 1.0, %v1037
  %v1039 = vrcp.pop %v916
  %v1040 = vmul.f32 1.0, %v1039
  %v1041 = vrcp.pop %v917
  %v1042 = vmul.f32 1.0, %v1041
  %v1043 = vrcp.pop %v918
  %v1044 = vmul.f32 1.0, %v1043
  %v1045 = vrcp.pop %v919
  %v1046 = vmul.f32 1.0, %v1045
  %v1047 = vrcp.pop %v920
  %v1048 = vmul.f32 1.0, %v1047
  %v1049 = vmul.f32 %v347, %v922
  %v1050 = vmul.f32 %v352, %v924
  %v1051 = vmul.f32 %v357, %v926
  %v1052 = vmul.f32 %v362, %v928
  %v1053 = vmul.f32 %v367, %v930
  %v1054 = vmul.f32 %v372, %v932
  %v1055 = vmul.f32 %v377, %v934
  %v1056 = vmul.f32 %v382, %v936
  %v1057 = vmul.f32 %v387, %v938
  %v1058 = vmul.f32 %v392, %v940
  %v1059 = vmul.f32 %v397, %v942
  %v1060 = vmul.f32 %v402, %v944
  %v1061 = vmul.f32 %v407, %v946
  %v1062 = vmul.f32 %v412, %v948
  %v1063 = vmul.f32 %v417, %v950
  %v1064 = vmul.f32 %v422, %v952
  %v1065 = vmul.f32 %v427, %v954
  %v1066 = vmul.f32 %v432, %v956
  %v1067 = vmul.f32 %v437, %v958
  %v1068 = vmul.f32 %v442, %v960
  %v1069 = vmul.f32 %v447, %v962
  %v1070 = vmul.f32 %v452, %v964
  %v1071 = vmul.f32 %v457, %v966
  %v1072 = vmul.f32 %v462, %v968
  %v1073 = vmul.f32 %v467, %v970
  %v1074 = vmul.f32 %v472, %v972
  %v1075 = vmul.f32 %v477, %v974
  %v1076 = vmul.f32 %v482, %v976
  %v1077 = vmul.f32 %v487, %v978
  %v1078 = vmul.f32 %v492, %v980
  %v1079 = vmul.f32 %v497, %v982
  %v1080 = vmul.f32 %v502, %v984
  %v1081 = vmul.f32 %v507, %v986
  %v1082 = vmul.f32 %v512, %v988
  %v1083 = vmul.f32 %v517, %v990
  %v1084 = vmul.f32 %v522, %v992
  %v1085 = vmul.f32 %v527, %v994
  %v1086 = vmul.f32 %v532, %v996
  %v1087 = vmul.f32 %v537, %v998
  %v1088 = vmul.f32 %v542, %v1000
  %v1089 = vmul.f32 %v547, %v1002
  %v1090 = vmul.f32 %v552, %v1004
  %v1091 = vmul.f32 %v557, %v1006
  %v1092 = vmul.f32 %v562, %v1008
  %v1093 = vmul.f32 %v567, %v1010
  %v1094 = vmul.f32 %v572, %v1012
  %v1095 = vmul.f32 %v577, %v1014
  %v1096 = vmul.f32 %v582, %v1016
  %v1097 = vmul.f32 %v587, %v1018
  %v1098 = vmul.f32 %v592, %v1020
  %v1099 = vmul.f32 %v597, %v1022
  %v1100 = vmul.f32 %v602, %v1024
  %v1101 = vmul.f32 %v607, %v1026
  %v1102 = vmul.f32 %v612, %v1028
  %v1103 = vmul.f32 %v617, %v1030
  %v1104 = vmul.f32 %v622, %v1032
  %v1105 = vmul.f32 %v627, %v1034
  %v1106 = vmul.f32 %v632, %v1036
  %v1107 = vmul.f32 %v637, %v1038
  %v1108 = vmul.f32 %v642, %v1040
  %v1109 = vmul.f32 %v647, %v1042
  %v1110 = vmul.f32 %v652, %v1044
  %v1111 = vmul.f32 %v657, %v1046
  %v1112 = vmul.f32 %v662, %v1048
  %1113 = vst.msk [vmem:[%s3] sm:$0xff] %vm87, %v1049
  %1114 = vst.msk [vmem:[%s3 + $0x8] sm:$0xff] %vm87, %v1050
  %1115 = vst.msk [vmem:[%s3 + $0x10] sm:$0xff] %vm87, %v1051
  %1116 = vst.msk [vmem:[%s3 + $0x18] sm:$0xff] %vm87, %v1052
  %1117 = vst.msk [vmem:[%s3 + $0x20] sm:$0xff] %vm87, %v1053
  %1118 = vst.msk [vmem:[%s3 + $0x28] sm:$0xff] %vm87, %v1054
  %1119 = vst.msk [vmem:[%s3 + $0x30] sm:$0xff] %vm87, %v1055
  %1120 = vst.msk [vmem:[%s3 + $0x38] sm:$0xff] %vm87, %v1056
  %1121 = vst.msk [vmem:[%s3 + $0x40] sm:$0xff] %vm87, %v1057
  %1122 = vst.msk [vmem:[%s3 + $0x48] sm:$0xff] %vm87, %v1058
  %1123 = vst.msk [vmem:[%s3 + $0x50] sm:$0xff] %vm87, %v1059
  %1124 = vst.msk [vmem:[%s3 + $0x58] sm:$0xff] %vm87, %v1060
  %1125 = vst.msk [vmem:[%s3 + $0x60] sm:$0xff] %vm87, %v1061
  %1126 = vst.msk [vmem:[%s3 + $0x68] sm:$0xff] %vm87, %v1062
  %1127 = vst.msk [vmem:[%s3 + $0x70] sm:$0xff] %vm87, %v1063
  %1128 = vst.msk [vmem:[%s3 + $0x78] sm:$0xff] %vm87, %v1064
  %1129 = vst.msk [vmem:[%s3 + $0x80] sm:$0xff] %vm87, %v1065
  %1130 = vst.msk [vmem:[%s3 + $0x88] sm:$0xff] %vm87, %v1066
  %1131 = vst.msk [vmem:[%s3 + $0x90] sm:$0xff] %vm87, %v1067
  %1132 = vst.msk [vmem:[%s3 + $0x98] sm:$0xff] %vm87, %v1068
  %1133 = vst.msk [vmem:[%s3 + $0xa0] sm:$0xff] %vm87, %v1069
  %1134 = vst.msk [vmem:[%s3 + $0xa8] sm:$0xff] %vm87, %v1070
  %1135 = vst.msk [vmem:[%s3 + $0xb0] sm:$0xff] %vm87, %v1071
  %1136 = vst.msk [vmem:[%s3 + $0xb8] sm:$0xff] %vm87, %v1072
  %1137 = vst.msk [vmem:[%s3 + $0xc0] sm:$0xff] %vm87, %v1073
  %1138 = vst.msk [vmem:[%s3 + $0xc8] sm:$0xff] %vm87, %v1074
  %1139 = vst.msk [vmem:[%s3 + $0xd0] sm:$0xff] %vm87, %v1075
  %1140 = vst.msk [vmem:[%s3 + $0xd8] sm:$0xff] %vm87, %v1076
  %1141 = vst.msk [vmem:[%s3 + $0xe0] sm:$0xff] %vm87, %v1077
  %1142 = vst.msk [vmem:[%s3 + $0xe8] sm:$0xff] %vm87, %v1078
  %1143 = vst.msk [vmem:[%s3 + $0xf0] sm:$0xff] %vm87, %v1079
  %1144 = vst.msk [vmem:[%s3 + $0xf8] sm:$0xff] %vm87, %v1080
  %1145 = vst.msk [vmem:[%s3 + $0x100] sm:$0xff] %vm87, %v1081
  %1146 = vst.msk [vmem:[%s3 + $0x108] sm:$0xff] %vm87, %v1082
  %1147 = vst.msk [vmem:[%s3 + $0x110] sm:$0xff] %vm87, %v1083
  %1148 = vst.msk [vmem:[%s3 + $0x118] sm:$0xff] %vm87, %v1084
  %1149 = vst.msk [vmem:[%s3 + $0x120] sm:$0xff] %vm87, %v1085
  %1150 = vst.msk [vmem:[%s3 + $0x128] sm:$0xff] %vm87, %v1086
  %1151 = vst.msk [vmem:[%s3 + $0x130] sm:$0xff] %vm87, %v1087
  %1152 = vst.msk [vmem:[%s3 + $0x138] sm:$0xff] %vm87, %v1088
  %1153 = vst.msk [vmem:[%s3 + $0x140] sm:$0xff] %vm87, %v1089
  %1154 = vst.msk [vmem:[%s3 + $0x148] sm:$0xff] %vm87, %v1090
  %1155 = vst.msk [vmem:[%s3 + $0x150] sm:$0xff] %vm87, %v1091
  %1156 = vst.msk [vmem:[%s3 + $0x158] sm:$0xff] %vm87, %v1092
  %1157 = vst.msk [vmem:[%s3 + $0x160] sm:$0xff] %vm87, %v1093
  %1158 = vst.msk [vmem:[%s3 + $0x168] sm:$0xff] %vm87, %v1094
  %1159 = vst.msk [vmem:[%s3 + $0x170] sm:$0xff] %vm87, %v1095
  %1160 = vst.msk [vmem:[%s3 + $0x178] sm:$0xff] %vm87, %v1096
  %1161 = vst.msk [vmem:[%s3 + $0x180] sm:$0xff] %vm87, %v1097
  %1162 = vst.msk [vmem:[%s3 + $0x188] sm:$0xff] %vm87, %v1098
  %1163 = vst.msk [vmem:[%s3 + $0x190] sm:$0xff] %vm87, %v1099
  %1164 = vst.msk [vmem:[%s3 + $0x198] sm:$0xff] %vm87, %v1100
  %1165 = vst.msk [vmem:[%s3 + $0x1a0] sm:$0xff] %vm87, %v1101
  %1166 = vst.msk [vmem:[%s3 + $0x1a8] sm:$0xff] %vm87, %v1102
  %1167 = vst.msk [vmem:[%s3 + $0x1b0] sm:$0xff] %vm87, %v1103
  %1168 = vst.msk [vmem:[%s3 + $0x1b8] sm:$0xff] %vm87, %v1104
  %1169 = vst.msk [vmem:[%s3 + $0x1c0] sm:$0xff] %vm87, %v1105
  %1170 = vst.msk [vmem:[%s3 + $0x1c8] sm:$0xff] %vm87, %v1106
  %1171 = vst.msk [vmem:[%s3 + $0x1d0] sm:$0xff] %vm87, %v1107
  %1172 = vst.msk [vmem:[%s3 + $0x1d8] sm:$0xff] %vm87, %v1108
  %1173 = vst.msk [vmem:[%s3 + $0x1e0] sm:$0xff] %vm87, %v1109
  %1174 = vst.msk [vmem:[%s3 + $0x1e8] sm:$0xff] %vm87, %v1110
  %1175 = vst.msk [vmem:[%s3 + $0x1f0] sm:$0xff] %vm87, %v1111
  %1176 = vst.msk [vmem:[%s3 + $0x1f8] sm:$0xff] %vm87, %v1112
  // Predicated region
  $region14: #{csppc_forward_nchw.3} parent=0 // pred_check
    _
  $region15: #{csppc_forward_nchw.3} parent=0 // pred_check_branch
    %1178 = sbr.rel (0) target = $region17
  $region16: #{csppc_forward_nchw.3} parent=0 // pred_region
    _
  $region17: #{csppc_forward_nchw.3} parent=0 // pred_fallthru
    _
  // Predicated region
  $region18: #{csppc_forward_nchw.3} parent=0 // pred_check
    _
  $region19: #{csppc_forward_nchw.3} parent=0 // pred_check_branch
    %1180 = sbr.rel (0) target = $region21
  $region20: #{csppc_forward_nchw.3} parent=0 // pred_region
    _
  $region21: #{csppc_forward_nchw.3} parent=0 // pred_fallthru
    _

// kernel: csppc_forward_nchw.5
$region0: #{csppc_forward_nchw.5}
  #allocation0 [shape = 'u32[]', space=smem, size = 0x4, offset = 0x4, fixed_abs, tag = 'smem constant byte address 0x4 - core index']
  #allocation1 [shape = 'u32[144,128]{1,0:T(1,128)}', space=vmem, size = 0x12000, scoped, tag = 'internal scratch']
  %s0 = inlined_call_operand.vmem [shape: f32[512,24], index: 0, kind: input, shape index: {}]
  %s1 = inlined_call_operand.vmem [shape: f32[24,16], index: 1, kind: input, shape index: {}]
  %s2 = inlined_call_operand.vmem [shape: f32[1,16], index: 2, kind: input, shape index: {}]
  %s3 = inlined_call_operand.vmem [shape: f32[512,16], index: 3, kind: output, shape index: {}]
  %s4 = sld [smem:[#allocation0]]
  $region22: #{csppc_forward_nchw.5} parent=0
    _
  %s6 = ssub.s32 1, %s4
  %s7 = scalar_select 0, %s6, %s4
  // Predicated region
  $region2: #{csppc_forward_nchw.5} parent=0 // pred_check
    _
  $region3: #{csppc_forward_nchw.5} parent=0 // pred_check_branch
    %9 = sbr.rel (0) target = $region5
  $region4: #{csppc_forward_nchw.5} parent=0 // pred_region
    _
  $region5: #{csppc_forward_nchw.5} parent=0 // pred_fallthru
    _
  // Predicated region
  $region6: #{csppc_forward_nchw.5} parent=0 // pred_check
    _
  $region7: #{csppc_forward_nchw.5} parent=0 // pred_check_branch
    %11 = sbr.rel (0) target = $region9
  $region8: #{csppc_forward_nchw.5} parent=0 // pred_region
    _
  $region9: #{csppc_forward_nchw.5} parent=0 // pred_fallthru
    _
  // Predicated region
  $region10: #{csppc_forward_nchw.5} parent=0 // pred_check
    _
  $region11: #{csppc_forward_nchw.5} parent=0 // pred_check_branch
    %13 = sbr.rel (0) target = $region13
  $region12: #{csppc_forward_nchw.5} parent=0 // pred_region
    _
  $region13: #{csppc_forward_nchw.5} parent=0 // pred_fallthru
    _
  %v14 = vld [vmem:[%s0] sm:$0xff]
  %v15 = vld [vmem:[%s0 + $0x8] sm:$0xff]
  %v16 = vld [vmem:[%s0 + $0x10] sm:$0xff]
  %v17 = vld [vmem:[%s0 + $0x18] sm:$0xff]
  %v18 = vld [vmem:[%s0 + $0x20] sm:$0xff]
  %v19 = vld [vmem:[%s0 + $0x28] sm:$0xff]
  %v20 = vld [vmem:[%s0 + $0x30] sm:$0xff]
  %v21 = vld [vmem:[%s0 + $0x38] sm:$0xff]
  %v22 = vld [vmem:[%s0 + $0x40] sm:$0xff]
  %v23 = vld [vmem:[%s0 + $0x48] sm:$0xff]
  %v24 = vld [vmem:[%s0 + $0x50] sm:$0xff]
  %v25 = vld [vmem:[%s0 + $0x58] sm:$0xff]
  %v26 = vld [vmem:[%s0 + $0x60] sm:$0xff]
  %v27 = vld [vmem:[%s0 + $0x68] sm:$0xff]
  %v28 = vld [vmem:[%s0 + $0x70] sm:$0xff]
  %v29 = vld [vmem:[%s0 + $0x78] sm:$0xff]
  %v30 = vld [vmem:[%s0 + $0x80] sm:$0xff]
  %v31 = vld [vmem:[%s0 + $0x88] sm:$0xff]
  %v32 = vld [vmem:[%s0 + $0x90] sm:$0xff]
  %v33 = vld [vmem:[%s0 + $0x98] sm:$0xff]
  %v34 = vld [vmem:[%s0 + $0xa0] sm:$0xff]
  %v35 = vld [vmem:[%s0 + $0xa8] sm:$0xff]
  %v36 = vld [vmem:[%s0 + $0xb0] sm:$0xff]
  %v37 = vld [vmem:[%s0 + $0xb8] sm:$0xff]
  %v38 = vld [vmem:[%s0 + $0xc0] sm:$0xff]
  %v39 = vld [vmem:[%s0 + $0xc8] sm:$0xff]
  %v40 = vld [vmem:[%s0 + $0xd0] sm:$0xff]
  %v41 = vld [vmem:[%s0 + $0xd8] sm:$0xff]
  %v42 = vld [vmem:[%s0 + $0xe0] sm:$0xff]
  %v43 = vld [vmem:[%s0 + $0xe8] sm:$0xff]
  %v44 = vld [vmem:[%s0 + $0xf0] sm:$0xff]
  %v45 = vld [vmem:[%s0 + $0xf8] sm:$0xff]
  %v46 = vld [vmem:[%s0 + $0x100] sm:$0xff]
  %v47 = vld [vmem:[%s0 + $0x108] sm:$0xff]
  %v48 = vld [vmem:[%s0 + $0x110] sm:$0xff]
  %v49 = vld [vmem:[%s0 + $0x118] sm:$0xff]
  %v50 = vld [vmem:[%s0 + $0x120] sm:$0xff]
  %v51 = vld [vmem:[%s0 + $0x128] sm:$0xff]
  %v52 = vld [vmem:[%s0 + $0x130] sm:$0xff]
  %v53 = vld [vmem:[%s0 + $0x138] sm:$0xff]
  %v54 = vld [vmem:[%s0 + $0x140] sm:$0xff]
  %v55 = vld [vmem:[%s0 + $0x148] sm:$0xff]
  %v56 = vld [vmem:[%s0 + $0x150] sm:$0xff]
  %v57 = vld [vmem:[%s0 + $0x158] sm:$0xff]
  %v58 = vld [vmem:[%s0 + $0x160] sm:$0xff]
  %v59 = vld [vmem:[%s0 + $0x168] sm:$0xff]
  %v60 = vld [vmem:[%s0 + $0x170] sm:$0xff]
  %v61 = vld [vmem:[%s0 + $0x178] sm:$0xff]
  %v62 = vld [vmem:[%s0 + $0x180] sm:$0xff]
  %v63 = vld [vmem:[%s0 + $0x188] sm:$0xff]
  %v64 = vld [vmem:[%s0 + $0x190] sm:$0xff]
  %v65 = vld [vmem:[%s0 + $0x198] sm:$0xff]
  %v66 = vld [vmem:[%s0 + $0x1a0] sm:$0xff]
  %v67 = vld [vmem:[%s0 + $0x1a8] sm:$0xff]
  %v68 = vld [vmem:[%s0 + $0x1b0] sm:$0xff]
  %v69 = vld [vmem:[%s0 + $0x1b8] sm:$0xff]
  %v70 = vld [vmem:[%s0 + $0x1c0] sm:$0xff]
  %v71 = vld [vmem:[%s0 + $0x1c8] sm:$0xff]
  %v72 = vld [vmem:[%s0 + $0x1d0] sm:$0xff]
  %v73 = vld [vmem:[%s0 + $0x1d8] sm:$0xff]
  %v74 = vld [vmem:[%s0 + $0x1e0] sm:$0xff]
  %v75 = vld [vmem:[%s0 + $0x1e8] sm:$0xff]
  %v76 = vld [vmem:[%s0 + $0x1f0] sm:$0xff]
  %v77 = vld [vmem:[%s0 + $0x1f8] sm:$0xff]
  %v78 = vld [vmem:[%s1] sm:$0xff]
  %v79 = vld [vmem:[%s1 + $0x8] sm:$0xff]
  %v80 = vld [vmem:[%s1 + $0x10] sm:$0xff]
  %v81 = vld [vmem:[%s2] sm:$0x1]
  %v83 = vlaneseq
  %v84 = vshrl.u32 %v83, 7
  %v85 = vsub.s32 0, %v84
  %v86 = vrot.slane %v81, %v85
  %vm88 = vcmask 195584
  %v90 = vsel %vm88, %v14, 0
  %v93 = vsel %vm88, %v15, 0
  %v96 = vsel %vm88, %v16, 0
  %v99 = vsel %vm88, %v17, 0
  %v102 = vsel %vm88, %v18, 0
  %v105 = vsel %vm88, %v19, 0
  %v108 = vsel %vm88, %v20, 0
  %v111 = vsel %vm88, %v21, 0
  %v114 = vsel %vm88, %v22, 0
  %v117 = vsel %vm88, %v23, 0
  %v120 = vsel %vm88, %v24, 0
  %v123 = vsel %vm88, %v25, 0
  %v126 = vsel %vm88, %v26, 0
  %v129 = vsel %vm88, %v27, 0
  %v132 = vsel %vm88, %v28, 0
  %v135 = vsel %vm88, %v29, 0
  %v138 = vsel %vm88, %v30, 0
  %v141 = vsel %vm88, %v31, 0
  %v144 = vsel %vm88, %v32, 0
  %v147 = vsel %vm88, %v33, 0
  %v150 = vsel %vm88, %v34, 0
  %v153 = vsel %vm88, %v35, 0
  %v156 = vsel %vm88, %v36, 0
  %v159 = vsel %vm88, %v37, 0
  %v162 = vsel %vm88, %v38, 0
  %v165 = vsel %vm88, %v39, 0
  %v168 = vsel %vm88, %v40, 0
  %v171 = vsel %vm88, %v41, 0
  %v174 = vsel %vm88, %v42, 0
  %v177 = vsel %vm88, %v43, 0
  %v180 = vsel %vm88, %v44, 0
  %v183 = vsel %vm88, %v45, 0
  %v186 = vsel %vm88, %v46, 0
  %v189 = vsel %vm88, %v47, 0
  %v192 = vsel %vm88, %v48, 0
  %v195 = vsel %vm88, %v49, 0
  %v198 = vsel %vm88, %v50, 0
  %v201 = vsel %vm88, %v51, 0
  %v204 = vsel %vm88, %v52, 0
  %v207 = vsel %vm88, %v53, 0
  %v210 = vsel %vm88, %v54, 0
  %v213 = vsel %vm88, %v55, 0
  %v216 = vsel %vm88, %v56, 0
  %v219 = vsel %vm88, %v57, 0
  %v222 = vsel %vm88, %v58, 0
  %v225 = vsel %vm88, %v59, 0
  %v228 = vsel %vm88, %v60, 0
  %v231 = vsel %vm88, %v61, 0
  %v234 = vsel %vm88, %v62, 0
  %v237 = vsel %vm88, %v63, 0
  %v240 = vsel %vm88, %v64, 0
  %v243 = vsel %vm88, %v65, 0
  %v246 = vsel %vm88, %v66, 0
  %v249 = vsel %vm88, %v67, 0
  %v252 = vsel %vm88, %v68, 0
  %v255 = vsel %vm88, %v69, 0
  %v258 = vsel %vm88, %v70, 0
  %v261 = vsel %vm88, %v71, 0
  %v264 = vsel %vm88, %v72, 0
  %v267 = vsel %vm88, %v73, 0
  %v270 = vsel %vm88, %v74, 0
  %v273 = vsel %vm88, %v75, 0
  %v276 = vsel %vm88, %v76, 0
  %v279 = vsel %vm88, %v77, 0
  %281 = vmatprep.subr.mxu0 0.0
  %282 = vmatpush1.msra.mxu0 0.0
  %283 = vmatprep.subr.mxu0 0.0
  %284 = vmatpush1.msra.mxu0 0.0
  %285 = vmatprep.subr.mxu0 0.0
  %286 = vmatpush1.msra.mxu0 0.0
  %287 = vmatprep.subr.mxu0 0.0
  %288 = vmatpush1.msra.mxu0 0.0
  %289 = vmatprep.subr.mxu0 0.0
  %290 = vmatpush1.msra.mxu0 0.0
  %291 = vmatprep.subr.mxu0 0.0
  %292 = vmatpush1.msra.mxu0 0.0
  %293 = vmatprep.subr.mxu0 0.0
  %294 = vmatpush1.msra.mxu0 0.0
  %295 = vmatprep.subr.mxu0 0.0
  %296 = vmatpush1.msra.mxu0 0.0
  %297 = vmatprep.subr.mxu0 0.0
  %298 = vmatpush1.msra.mxu0 0.0
  %299 = vmatprep.subr.mxu0 0.0
  %300 = vmatpush1.msra.mxu0 0.0
  %301 = vmatprep.subr.mxu0 0.0
  %302 = vmatpush1.msra.mxu0 0.0
  %303 = vmatprep.subr.mxu0 0.0
  %304 = vmatpush1.msra.mxu0 0.0
  %305 = vmatprep.subr.mxu0 0.0
  %306 = vmatpush1.msra.mxu0 0.0
  %307 = vmatprep.subr.mxu0 0.0
  %308 = vmatpush1.msra.mxu0 %v80
  %309 = vmatprep.subr.mxu0 0.0
  %310 = vmatpush1.msra.mxu0 %v79
  %311 = vmatprep.subr.mxu0 0.0
  %312 = vmatpush1.msra.mxu0 %v78
  %313 = vmatprep.subr.mxu0 0.0
  %314 = vmatpush2.msra.mxu0 0.0
  %315 = vmatprep.subr.mxu0 0.0
  %316 = vmatpush2.msra.mxu0 0.0
  %317 = vmatprep.subr.mxu0 0.0
  %318 = vmatpush2.msra.mxu0 0.0
  %319 = vmatprep.subr.mxu0 0.0
  %320 = vmatpush2.msra.mxu0 0.0
  %321 = vmatprep.subr.mxu0 0.0
  %322 = vmatpush2.msra.mxu0 0.0
  %323 = vmatprep.subr.mxu0 0.0
  %324 = vmatpush2.msra.mxu0 0.0
  %325 = vmatprep.subr.mxu0 0.0
  %326 = vmatpush2.msra.mxu0 0.0
  %327 = vmatprep.subr.mxu0 0.0
  %328 = vmatpush2.msra.mxu0 0.0
  %329 = vmatprep.subr.mxu0 0.0
  %330 = vmatpush2.msra.mxu0 0.0
  %331 = vmatprep.subr.mxu0 0.0
  %332 = vmatpush2.msra.mxu0 0.0
  %333 = vmatprep.subr.mxu0 0.0
  %334 = vmatpush2.msra.mxu0 0.0
  %335 = vmatprep.subr.mxu0 0.0
  %336 = vmatpush2.msra.mxu0 0.0
  %337 = vmatprep.subr.mxu0 0.0
  %338 = vmatpush2.msra.mxu0 0.0
  %339 = vmatprep.subr.mxu0 0.0
  %340 = vmatpush2.msra.mxu0 0.0
  %341 = vmatprep.subr.mxu0 0.0
  %342 = vmatpush2.msra.mxu0 0.0
  %343 = vmatprep.subr.mxu0 0.0
  %344 = vmatpush2.msra.mxu0 0.0
  %345 = vmatprep.mubr.f32.mxu0 0.0
  %346 = vmatmul.mubr.f32.gmra.mxu0 %v90
  %v347 = vpop.f32.mrf.mxu0
  %v348 = vadd.f32 %v86, %v347
  %v349 = vpop.f32.mrf.mxu0
  %350 = vmatprep.mubr.f32.mxu0 0.0
  %351 = vmatmul.mubr.f32.gmra.mxu0 %v93
  %v352 = vpop.f32.mrf.mxu0
  %v353 = vadd.f32 %v86, %v352
  %v354 = vpop.f32.mrf.mxu0
  %355 = vmatprep.mubr.f32.mxu0 0.0
  %356 = vmatmul.mubr.f32.gmra.mxu0 %v96
  %v357 = vpop.f32.mrf.mxu0
  %v358 = vadd.f32 %v86, %v357
  %v359 = vpop.f32.mrf.mxu0
  %360 = vmatprep.mubr.f32.mxu0 0.0
  %361 = vmatmul.mubr.f32.gmra.mxu0 %v99
  %v362 = vpop.f32.mrf.mxu0
  %v363 = vadd.f32 %v86, %v362
  %v364 = vpop.f32.mrf.mxu0
  %365 = vmatprep.mubr.f32.mxu0 0.0
  %366 = vmatmul.mubr.f32.gmra.mxu0 %v102
  %v367 = vpop.f32.mrf.mxu0
  %v368 = vadd.f32 %v86, %v367
  %v369 = vpop.f32.mrf.mxu0
  %370 = vmatprep.mubr.f32.mxu0 0.0
  %371 = vmatmul.mubr.f32.gmra.mxu0 %v105
  %v372 = vpop.f32.mrf.mxu0
  %v373 = vadd.f32 %v86, %v372
  %v374 = vpop.f32.mrf.mxu0
  %375 = vmatprep.mubr.f32.mxu0 0.0
  %376 = vmatmul.mubr.f32.gmra.mxu0 %v108
  %v377 = vpop.f32.mrf.mxu0
  %v378 = vadd.f32 %v86, %v377
  %v379 = vpop.f32.mrf.mxu0
  %380 = vmatprep.mubr.f32.mxu0 0.0
  %381 = vmatmul.mubr.f32.gmra.mxu0 %v111
  %v382 = vpop.f32.mrf.mxu0
  %v383 = vadd.f32 %v86, %v382
  %v384 = vpop.f32.mrf.mxu0
  %385 = vmatprep.mubr.f32.mxu0 0.0
  %386 = vmatmul.mubr.f32.gmra.mxu0 %v114
  %v387 = vpop.f32.mrf.mxu0
  %v388 = vadd.f32 %v86, %v387
  %v389 = vpop.f32.mrf.mxu0
  %390 = vmatprep.mubr.f32.mxu0 0.0
  %391 = vmatmul.mubr.f32.gmra.mxu0 %v117
  %v392 = vpop.f32.mrf.mxu0
  %v393 = vadd.f32 %v86, %v392
  %v394 = vpop.f32.mrf.mxu0
  %395 = vmatprep.mubr.f32.mxu0 0.0
  %396 = vmatmul.mubr.f32.gmra.mxu0 %v120
  %v397 = vpop.f32.mrf.mxu0
  %v398 = vadd.f32 %v86, %v397
  %v399 = vpop.f32.mrf.mxu0
  %400 = vmatprep.mubr.f32.mxu0 0.0
  %401 = vmatmul.mubr.f32.gmra.mxu0 %v123
  %v402 = vpop.f32.mrf.mxu0
  %v403 = vadd.f32 %v86, %v402
  %v404 = vpop.f32.mrf.mxu0
  %405 = vmatprep.mubr.f32.mxu0 0.0
  %406 = vmatmul.mubr.f32.gmra.mxu0 %v126
  %v407 = vpop.f32.mrf.mxu0
  %v408 = vadd.f32 %v86, %v407
  %v409 = vpop.f32.mrf.mxu0
  %410 = vmatprep.mubr.f32.mxu0 0.0
  %411 = vmatmul.mubr.f32.gmra.mxu0 %v129
  %v412 = vpop.f32.mrf.mxu0
  %v413 = vadd.f32 %v86, %v412
  %v414 = vpop.f32.mrf.mxu0
  %415 = vmatprep.mubr.f32.mxu0 0.0
  %416 = vmatmul.mubr.f32.gmra.mxu0 %v132
  %v417 = vpop.f32.mrf.mxu0
  %v418 = vadd.f32 %v86, %v417
  %v419 = vpop.f32.mrf.mxu0
  %420 = vmatprep.mubr.f32.mxu0 0.0
  %421 = vmatmul.mubr.f32.gmra.mxu0 %v135
  %v422 = vpop.f32.mrf.mxu0
  %v423 = vadd.f32 %v86, %v422
  %v424 = vpop.f32.mrf.mxu0
  %425 = vmatprep.mubr.f32.mxu0 0.0
  %426 = vmatmul.mubr.f32.gmra.mxu0 %v138
  %v427 = vpop.f32.mrf.mxu0
  %v428 = vadd.f32 %v86, %v427
  %v429 = vpop.f32.mrf.mxu0
  %430 = vmatprep.mubr.f32.mxu0 0.0
  %431 = vmatmul.mubr.f32.gmra.mxu0 %v141
  %v432 = vpop.f32.mrf.mxu0
  %v433 = vadd.f32 %v86, %v432
  %v434 = vpop.f32.mrf.mxu0
  %435 = vmatprep.mubr.f32.mxu0 0.0
  %436 = vmatmul.mubr.f32.gmra.mxu0 %v144
  %v437 = vpop.f32.mrf.mxu0
  %v438 = vadd.f32 %v86, %v437
  %v439 = vpop.f32.mrf.mxu0
  %440 = vmatprep.mubr.f32.mxu0 0.0
  %441 = vmatmul.mubr.f32.gmra.mxu0 %v147
  %v442 = vpop.f32.mrf.mxu0
  %v443 = vadd.f32 %v86, %v442
  %v444 = vpop.f32.mrf.mxu0
  %445 = vmatprep.mubr.f32.mxu0 0.0
  %446 = vmatmul.mubr.f32.gmra.mxu0 %v150
  %v447 = vpop.f32.mrf.mxu0
  %v448 = vadd.f32 %v86, %v447
  %v449 = vpop.f32.mrf.mxu0
  %450 = vmatprep.mubr.f32.mxu0 0.0
  %451 = vmatmul.mubr.f32.gmra.mxu0 %v153
  %v452 = vpop.f32.mrf.mxu0
  %v453 = vadd.f32 %v86, %v452
  %v454 = vpop.f32.mrf.mxu0
  %455 = vmatprep.mubr.f32.mxu0 0.0
  %456 = vmatmul.mubr.f32.gmra.mxu0 %v156
  %v457 = vpop.f32.mrf.mxu0
  %v458 = vadd.f32 %v86, %v457
  %v459 = vpop.f32.mrf.mxu0
  %460 = vmatprep.mubr.f32.mxu0 0.0
  %461 = vmatmul.mubr.f32.gmra.mxu0 %v159
  %v462 = vpop.f32.mrf.mxu0
  %v463 = vadd.f32 %v86, %v462
  %v464 = vpop.f32.mrf.mxu0
  %465 = vmatprep.mubr.f32.mxu0 0.0
  %466 = vmatmul.mubr.f32.gmra.mxu0 %v162
  %v467 = vpop.f32.mrf.mxu0
  %v468 = vadd.f32 %v86, %v467
  %v469 = vpop.f32.mrf.mxu0
  %470 = vmatprep.mubr.f32.mxu0 0.0
  %471 = vmatmul.mubr.f32.gmra.mxu0 %v165
  %v472 = vpop.f32.mrf.mxu0
  %v473 = vadd.f32 %v86, %v472
  %v474 = vpop.f32.mrf.mxu0
  %475 = vmatprep.mubr.f32.mxu0 0.0
  %476 = vmatmul.mubr.f32.gmra.mxu0 %v168
  %v477 = vpop.f32.mrf.mxu0
  %v478 = vadd.f32 %v86, %v477
  %v479 = vpop.f32.mrf.mxu0
  %480 = vmatprep.mubr.f32.mxu0 0.0
  %481 = vmatmul.mubr.f32.gmra.mxu0 %v171
  %v482 = vpop.f32.mrf.mxu0
  %v483 = vadd.f32 %v86, %v482
  %v484 = vpop.f32.mrf.mxu0
  %485 = vmatprep.mubr.f32.mxu0 0.0
  %486 = vmatmul.mubr.f32.gmra.mxu0 %v174
  %v487 = vpop.f32.mrf.mxu0
  %v488 = vadd.f32 %v86, %v487
  %v489 = vpop.f32.mrf.mxu0
  %490 = vmatprep.mubr.f32.mxu0 0.0
  %491 = vmatmul.mubr.f32.gmra.mxu0 %v177
  %v492 = vpop.f32.mrf.mxu0
  %v493 = vadd.f32 %v86, %v492
  %v494 = vpop.f32.mrf.mxu0
  %495 = vmatprep.mubr.f32.mxu0 0.0
  %496 = vmatmul.mubr.f32.gmra.mxu0 %v180
  %v497 = vpop.f32.mrf.mxu0
  %v498 = vadd.f32 %v86, %v497
  %v499 = vpop.f32.mrf.mxu0
  %500 = vmatprep.mubr.f32.mxu0 0.0
  %501 = vmatmul.mubr.f32.gmra.mxu0 %v183
  %v502 = vpop.f32.mrf.mxu0
  %v503 = vadd.f32 %v86, %v502
  %v504 = vpop.f32.mrf.mxu0
  %505 = vmatprep.mubr.f32.mxu0 0.0
  %506 = vmatmul.mubr.f32.gmra.mxu0 %v186
  %v507 = vpop.f32.mrf.mxu0
  %v508 = vadd.f32 %v86, %v507
  %v509 = vpop.f32.mrf.mxu0
  %510 = vmatprep.mubr.f32.mxu0 0.0
  %511 = vmatmul.mubr.f32.gmra.mxu0 %v189
  %v512 = vpop.f32.mrf.mxu0
  %v513 = vadd.f32 %v86, %v512
  %v514 = vpop.f32.mrf.mxu0
  %515 = vmatprep.mubr.f32.mxu0 0.0
  %516 = vmatmul.mubr.f32.gmra.mxu0 %v192
  %v517 = vpop.f32.mrf.mxu0
  %v518 = vadd.f32 %v86, %v517
  %v519 = vpop.f32.mrf.mxu0
  %520 = vmatprep.mubr.f32.mxu0 0.0
  %521 = vmatmul.mubr.f32.gmra.mxu0 %v195
  %v522 = vpop.f32.mrf.mxu0
  %v523 = vadd.f32 %v86, %v522
  %v524 = vpop.f32.mrf.mxu0
  %525 = vmatprep.mubr.f32.mxu0 0.0
  %526 = vmatmul.mubr.f32.gmra.mxu0 %v198
  %v527 = vpop.f32.mrf.mxu0
  %v528 = vadd.f32 %v86, %v527
  %v529 = vpop.f32.mrf.mxu0
  %530 = vmatprep.mubr.f32.mxu0 0.0
  %531 = vmatmul.mubr.f32.gmra.mxu0 %v201
  %v532 = vpop.f32.mrf.mxu0
  %v533 = vadd.f32 %v86, %v532
  %v534 = vpop.f32.mrf.mxu0
  %535 = vmatprep.mubr.f32.mxu0 0.0
  %536 = vmatmul.mubr.f32.gmra.mxu0 %v204
  %v537 = vpop.f32.mrf.mxu0
  %v538 = vadd.f32 %v86, %v537
  %v539 = vpop.f32.mrf.mxu0
  %540 = vmatprep.mubr.f32.mxu0 0.0
  %541 = vmatmul.mubr.f32.gmra.mxu0 %v207
  %v542 = vpop.f32.mrf.mxu0
  %v543 = vadd.f32 %v86, %v542
  %v544 = vpop.f32.mrf.mxu0
  %545 = vmatprep.mubr.f32.mxu0 0.0
  %546 = vmatmul.mubr.f32.gmra.mxu0 %v210
  %v547 = vpop.f32.mrf.mxu0
  %v548 = vadd.f32 %v86, %v547
  %v549 = vpop.f32.mrf.mxu0
  %550 = vmatprep.mubr.f32.mxu0 0.0
  %551 = vmatmul.mubr.f32.gmra.mxu0 %v213
  %v552 = vpop.f32.mrf.mxu0
  %v553 = vadd.f32 %v86, %v552
  %v554 = vpop.f32.mrf.mxu0
  %555 = vmatprep.mubr.f32.mxu0 0.0
  %556 = vmatmul.mubr.f32.gmra.mxu0 %v216
  %v557 = vpop.f32.mrf.mxu0
  %v558 = vadd.f32 %v86, %v557
  %v559 = vpop.f32.mrf.mxu0
  %560 = vmatprep.mubr.f32.mxu0 0.0
  %561 = vmatmul.mubr.f32.gmra.mxu0 %v219
  %v562 = vpop.f32.mrf.mxu0
  %v563 = vadd.f32 %v86, %v562
  %v564 = vpop.f32.mrf.mxu0
  %565 = vmatprep.mubr.f32.mxu0 0.0
  %566 = vmatmul.mubr.f32.gmra.mxu0 %v222
  %v567 = vpop.f32.mrf.mxu0
  %v568 = vadd.f32 %v86, %v567
  %v569 = vpop.f32.mrf.mxu0
  %570 = vmatprep.mubr.f32.mxu0 0.0
  %571 = vmatmul.mubr.f32.gmra.mxu0 %v225
  %v572 = vpop.f32.mrf.mxu0
  %v573 = vadd.f32 %v86, %v572
  %v574 = vpop.f32.mrf.mxu0
  %575 = vmatprep.mubr.f32.mxu0 0.0
  %576 = vmatmul.mubr.f32.gmra.mxu0 %v228
  %v577 = vpop.f32.mrf.mxu0
  %v578 = vadd.f32 %v86, %v577
  %v579 = vpop.f32.mrf.mxu0
  %580 = vmatprep.mubr.f32.mxu0 0.0
  %581 = vmatmul.mubr.f32.gmra.mxu0 %v231
  %v582 = vpop.f32.mrf.mxu0
  %v583 = vadd.f32 %v86, %v582
  %v584 = vpop.f32.mrf.mxu0
  %585 = vmatprep.mubr.f32.mxu0 0.0
  %586 = vmatmul.mubr.f32.gmra.mxu0 %v234
  %v587 = vpop.f32.mrf.mxu0
  %v588 = vadd.f32 %v86, %v587
  %v589 = vpop.f32.mrf.mxu0
  %590 = vmatprep.mubr.f32.mxu0 0.0
  %591 = vmatmul.mubr.f32.gmra.mxu0 %v237
  %v592 = vpop.f32.mrf.mxu0
  %v593 = vadd.f32 %v86, %v592
  %v594 = vpop.f32.mrf.mxu0
  %595 = vmatprep.mubr.f32.mxu0 0.0
  %596 = vmatmul.mubr.f32.gmra.mxu0 %v240
  %v597 = vpop.f32.mrf.mxu0
  %v598 = vadd.f32 %v86, %v597
  %v599 = vpop.f32.mrf.mxu0
  %600 = vmatprep.mubr.f32.mxu0 0.0
  %601 = vmatmul.mubr.f32.gmra.mxu0 %v243
  %v602 = vpop.f32.mrf.mxu0
  %v603 = vadd.f32 %v86, %v602
  %v604 = vpop.f32.mrf.mxu0
  %605 = vmatprep.mubr.f32.mxu0 0.0
  %606 = vmatmul.mubr.f32.gmra.mxu0 %v246
  %v607 = vpop.f32.mrf.mxu0
  %v608 = vadd.f32 %v86, %v607
  %v609 = vpop.f32.mrf.mxu0
  %610 = vmatprep.mubr.f32.mxu0 0.0
  %611 = vmatmul.mubr.f32.gmra.mxu0 %v249
  %v612 = vpop.f32.mrf.mxu0
  %v613 = vadd.f32 %v86, %v612
  %v614 = vpop.f32.mrf.mxu0
  %615 = vmatprep.mubr.f32.mxu0 0.0
  %616 = vmatmul.mubr.f32.gmra.mxu0 %v252
  %v617 = vpop.f32.mrf.mxu0
  %v618 = vadd.f32 %v86, %v617
  %v619 = vpop.f32.mrf.mxu0
  %620 = vmatprep.mubr.f32.mxu0 0.0
  %621 = vmatmul.mubr.f32.gmra.mxu0 %v255
  %v622 = vpop.f32.mrf.mxu0
  %v623 = vadd.f32 %v86, %v622
  %v624 = vpop.f32.mrf.mxu0
  %625 = vmatprep.mubr.f32.mxu0 0.0
  %626 = vmatmul.mubr.f32.gmra.mxu0 %v258
  %v627 = vpop.f32.mrf.mxu0
  %v628 = vadd.f32 %v86, %v627
  %v629 = vpop.f32.mrf.mxu0
  %630 = vmatprep.mubr.f32.mxu0 0.0
  %631 = vmatmul.mubr.f32.gmra.mxu0 %v261
  %v632 = vpop.f32.mrf.mxu0
  %v633 = vadd.f32 %v86, %v632
  %v634 = vpop.f32.mrf.mxu0
  %635 = vmatprep.mubr.f32.mxu0 0.0
  %636 = vmatmul.mubr.f32.gmra.mxu0 %v264
  %v637 = vpop.f32.mrf.mxu0
  %v638 = vadd.f32 %v86, %v637
  %v639 = vpop.f32.mrf.mxu0
  %640 = vmatprep.mubr.f32.mxu0 0.0
  %641 = vmatmul.mubr.f32.gmra.mxu0 %v267
  %v642 = vpop.f32.mrf.mxu0
  %v643 = vadd.f32 %v86, %v642
  %v644 = vpop.f32.mrf.mxu0
  %645 = vmatprep.mubr.f32.mxu0 0.0
  %646 = vmatmul.mubr.f32.gmra.mxu0 %v270
  %v647 = vpop.f32.mrf.mxu0
  %v648 = vadd.f32 %v86, %v647
  %v649 = vpop.f32.mrf.mxu0
  %650 = vmatprep.mubr.f32.mxu0 0.0
  %651 = vmatmul.mubr.f32.gmra.mxu0 %v273
  %v652 = vpop.f32.mrf.mxu0
  %v653 = vadd.f32 %v86, %v652
  %v654 = vpop.f32.mrf.mxu0
  %655 = vmatprep.mubr.f32.mxu0 0.0
  %656 = vmatmul.mubr.f32.gmra.mxu0 %v276
  %v657 = vpop.f32.mrf.mxu0
  %v658 = vadd.f32 %v86, %v657
  %v659 = vpop.f32.mrf.mxu0
  %660 = vmatprep.mubr.f32.mxu0 0.0
  %661 = vmatmul.mubr.f32.gmra.mxu0 %v279
  %v662 = vpop.f32.mrf.mxu0
  %v663 = vadd.f32 %v86, %v662
  %v664 = vpop.f32.mrf.mxu0
  %665 = vdwg.mxu0
  %v666 = vxor.u32 %v348, 2147483648
  %v667 = vxor.u32 %v353, 2147483648
  %v668 = vxor.u32 %v358, 2147483648
  %v669 = vxor.u32 %v363, 2147483648
  %v670 = vxor.u32 %v368, 2147483648
  %v671 = vxor.u32 %v373, 2147483648
  %v672 = vxor.u32 %v378, 2147483648
  %v673 = vxor.u32 %v383, 2147483648
  %v674 = vxor.u32 %v388, 2147483648
  %v675 = vxor.u32 %v393, 2147483648
  %v676 = vxor.u32 %v398, 2147483648
  %v677 = vxor.u32 %v403, 2147483648
  %v678 = vxor.u32 %v408, 2147483648
  %v679 = vxor.u32 %v413, 2147483648
  %v680 = vxor.u32 %v418, 2147483648
  %v681 = vxor.u32 %v423, 2147483648
  %v682 = vxor.u32 %v428, 2147483648
  %v683 = vxor.u32 %v433, 2147483648
  %v684 = vxor.u32 %v438, 2147483648
  %v685 = vxor.u32 %v443, 2147483648
  %v686 = vxor.u32 %v448, 2147483648
  %v687 = vxor.u32 %v453, 2147483648
  %v688 = vxor.u32 %v458, 2147483648
  %v689 = vxor.u32 %v463, 2147483648
  %v690 = vxor.u32 %v468, 2147483648
  %v691 = vxor.u32 %v473, 2147483648
  %v692 = vxor.u32 %v478, 2147483648
  %v693 = vxor.u32 %v483, 2147483648
  %v694 = vxor.u32 %v488, 2147483648
  %v695 = vxor.u32 %v493, 2147483648
  %v696 = vxor.u32 %v498, 2147483648
  %v697 = vxor.u32 %v503, 2147483648
  %v698 = vxor.u32 %v508, 2147483648
  %v699 = vxor.u32 %v513, 2147483648
  %v700 = vxor.u32 %v518, 2147483648
  %v701 = vxor.u32 %v523, 2147483648
  %v702 = vxor.u32 %v528, 2147483648
  %v703 = vxor.u32 %v533, 2147483648
  %v704 = vxor.u32 %v538, 2147483648
  %v705 = vxor.u32 %v543, 2147483648
  %v706 = vxor.u32 %v548, 2147483648
  %v707 = vxor.u32 %v553, 2147483648
  %v708 = vxor.u32 %v558, 2147483648
  %v709 = vxor.u32 %v563, 2147483648
  %v710 = vxor.u32 %v568, 2147483648
  %v711 = vxor.u32 %v573, 2147483648
  %v712 = vxor.u32 %v578, 2147483648
  %v713 = vxor.u32 %v583, 2147483648
  %v714 = vxor.u32 %v588, 2147483648
  %v715 = vxor.u32 %v593, 2147483648
  %v716 = vxor.u32 %v598, 2147483648
  %v717 = vxor.u32 %v603, 2147483648
  %v718 = vxor.u32 %v608, 2147483648
  %v719 = vxor.u32 %v613, 2147483648
  %v720 = vxor.u32 %v618, 2147483648
  %v721 = vxor.u32 %v623, 2147483648
  %v722 = vxor.u32 %v628, 2147483648
  %v723 = vxor.u32 %v633, 2147483648
  %v724 = vxor.u32 %v638, 2147483648
  %v725 = vxor.u32 %v643, 2147483648
  %v726 = vxor.u32 %v648, 2147483648
  %v727 = vxor.u32 %v653, 2147483648
  %v728 = vxor.u32 %v658, 2147483648
  %v729 = vxor.u32 %v663, 2147483648
  %v730 = vmul.f32 %v666, 1.442695
  %v731 = vpow.pop %v730
  %v732 = vmul.f32 %v667, 1.442695
  %v733 = vpow.pop %v732
  %v734 = vmul.f32 %v668, 1.442695
  %v735 = vpow.pop %v734
  %v736 = vmul.f32 %v669, 1.442695
  %v737 = vpow.pop %v736
  %v738 = vmul.f32 %v670, 1.442695
  %v739 = vpow.pop %v738
  %v740 = vmul.f32 %v671, 1.442695
  %v741 = vpow.pop %v740
  %v742 = vmul.f32 %v672, 1.442695
  %v743 = vpow.pop %v742
  %v744 = vmul.f32 %v673, 1.442695
  %v745 = vpow.pop %v744
  %v746 = vmul.f32 %v674, 1.442695
  %v747 = vpow.pop %v746
  %v748 = vmul.f32 %v675, 1.442695
  %v749 = vpow.pop %v748
  %v750 = vmul.f32 %v676, 1.442695
  %v751 = vpow.pop %v750
  %v752 = vmul.f32 %v677, 1.442695
  %v753 = vpow.pop %v752
  %v754 = vmul.f32 %v678, 1.442695
  %v755 = vpow.pop %v754
  %v756 = vmul.f32 %v679, 1.442695
  %v757 = vpow.pop %v756
  %v758 = vmul.f32 %v680, 1.442695
  %v759 = vpow.pop %v758
  %v760 = vmul.f32 %v681, 1.442695
  %v761 = vpow.pop %v760
  %v762 = vmul.f32 %v682, 1.442695
  %v763 = vpow.pop %v762
  %v764 = vmul.f32 %v683, 1.442695
  %v765 = vpow.pop %v764
  %v766 = vmul.f32 %v684, 1.442695
  %v767 = vpow.pop %v766
  %v768 = vmul.f32 %v685, 1.442695
  %v769 = vpow.pop %v768
  %v770 = vmul.f32 %v686, 1.442695
  %v771 = vpow.pop %v770
  %v772 = vmul.f32 %v687, 1.442695
  %v773 = vpow.pop %v772
  %v774 = vmul.f32 %v688, 1.442695
  %v775 = vpow.pop %v774
  %v776 = vmul.f32 %v689, 1.442695
  %v777 = vpow.pop %v776
  %v778 = vmul.f32 %v690, 1.442695
  %v779 = vpow.pop %v778
  %v780 = vmul.f32 %v691, 1.442695
  %v781 = vpow.pop %v780
  %v782 = vmul.f32 %v692, 1.442695
  %v783 = vpow.pop %v782
  %v784 = vmul.f32 %v693, 1.442695
  %v785 = vpow.pop %v784
  %v786 = vmul.f32 %v694, 1.442695
  %v787 = vpow.pop %v786
  %v788 = vmul.f32 %v695, 1.442695
  %v789 = vpow.pop %v788
  %v790 = vmul.f32 %v696, 1.442695
  %v791 = vpow.pop %v790
  %v792 = vmul.f32 %v697, 1.442695
  %v793 = vpow.pop %v792
  %v794 = vmul.f32 %v698, 1.442695
  %v795 = vpow.pop %v794
  %v796 = vmul.f32 %v699, 1.442695
  %v797 = vpow.pop %v796
  %v798 = vmul.f32 %v700, 1.442695
  %v799 = vpow.pop %v798
  %v800 = vmul.f32 %v701, 1.442695
  %v801 = vpow.pop %v800
  %v802 = vmul.f32 %v702, 1.442695
  %v803 = vpow.pop %v802
  %v804 = vmul.f32 %v703, 1.442695
  %v805 = vpow.pop %v804
  %v806 = vmul.f32 %v704, 1.442695
  %v807 = vpow.pop %v806
  %v808 = vmul.f32 %v705, 1.442695
  %v809 = vpow.pop %v808
  %v810 = vmul.f32 %v706, 1.442695
  %v811 = vpow.pop %v810
  %v812 = vmul.f32 %v707, 1.442695
  %v813 = vpow.pop %v812
  %v814 = vmul.f32 %v708, 1.442695
  %v815 = vpow.pop %v814
  %v816 = vmul.f32 %v709, 1.442695
  %v817 = vpow.pop %v816
  %v818 = vmul.f32 %v710, 1.442695
  %v819 = vpow.pop %v818
  %v820 = vmul.f32 %v711, 1.442695
  %v821 = vpow.pop %v820
  %v822 = vmul.f32 %v712, 1.442695
  %v823 = vpow.pop %v822
  %v824 = vmul.f32 %v713, 1.442695
  %v825 = vpow.pop %v824
  %v826 = vmul.f32 %v714, 1.442695
  %v827 = vpow.pop %v826
  %v828 = vmul.f32 %v715, 1.442695
  %v829 = vpow.pop %v828
  %v830 = vmul.f32 %v716, 1.442695
  %v831 = vpow.pop %v830
  %v832 = vmul.f32 %v717, 1.442695
  %v833 = vpow.pop %v832
  %v834 = vmul.f32 %v718, 1.442695
  %v835 = vpow.pop %v834
  %v836 = vmul.f32 %v719, 1.442695
  %v837 = vpow.pop %v836
  %v838 = vmul.f32 %v720, 1.442695
  %v839 = vpow.pop %v838
  %v840 = vmul.f32 %v721, 1.442695
  %v841 = vpow.pop %v840
  %v842 = vmul.f32 %v722, 1.442695
  %v843 = vpow.pop %v842
  %v844 = vmul.f32 %v723, 1.442695
  %v845 = vpow.pop %v844
  %v846 = vmul.f32 %v724, 1.442695
  %v847 = vpow.pop %v846
  %v848 = vmul.f32 %v725, 1.442695
  %v849 = vpow.pop %v848
  %v850 = vmul.f32 %v726, 1.442695
  %v851 = vpow.pop %v850
  %v852 = vmul.f32 %v727, 1.442695
  %v853 = vpow.pop %v852
  %v854 = vmul.f32 %v728, 1.442695
  %v855 = vpow.pop %v854
  %v856 = vmul.f32 %v729, 1.442695
  %v857 = vpow.pop %v856
  %v858 = vadd.f32 %v731, 1.0
  %v859 = vadd.f32 %v733, 1.0
  %v860 = vadd.f32 %v735, 1.0
  %v861 = vadd.f32 %v737, 1.0
  %v862 = vadd.f32 %v739, 1.0
  %v863 = vadd.f32 %v741, 1.0
  %v864 = vadd.f32 %v743, 1.0
  %v865 = vadd.f32 %v745, 1.0
  %v866 = vadd.f32 %v747, 1.0
  %v867 = vadd.f32 %v749, 1.0
  %v868 = vadd.f32 %v751, 1.0
  %v869 = vadd.f32 %v753, 1.0
  %v870 = vadd.f32 %v755, 1.0
  %v871 = vadd.f32 %v757, 1.0
  %v872 = vadd.f32 %v759, 1.0
  %v873 = vadd.f32 %v761, 1.0
  %v874 = vadd.f32 %v763, 1.0
  %v875 = vadd.f32 %v765, 1.0
  %v876 = vadd.f32 %v767, 1.0
  %v877 = vadd.f32 %v769, 1.0
  %v878 = vadd.f32 %v771, 1.0
  %v879 = vadd.f32 %v773, 1.0
  %v880 = vadd.f32 %v775, 1.0
  %v881 = vadd.f32 %v777, 1.0
  %v882 = vadd.f32 %v779, 1.0
  %v883 = vadd.f32 %v781, 1.0
  %v884 = vadd.f32 %v783, 1.0
  %v885 = vadd.f32 %v785, 1.0
  %v886 = vadd.f32 %v787, 1.0
  %v887 = vadd.f32 %v789, 1.0
  %v888 = vadd.f32 %v791, 1.0
  %v889 = vadd.f32 %v793, 1.0
  %v890 = vadd.f32 %v795, 1.0
  %v891 = vadd.f32 %v797, 1.0
  %v892 = vadd.f32 %v799, 1.0
  %v893 = vadd.f32 %v801, 1.0
  %v894 = vadd.f32 %v803, 1.0
  %v895 = vadd.f32 %v805, 1.0
  %v896 = vadd.f32 %v807, 1.0
  %v897 = vadd.f32 %v809, 1.0
  %v898 = vadd.f32 %v811, 1.0
  %v899 = vadd.f32 %v813, 1.0
  %v900 = vadd.f32 %v815, 1.0
  %v901 = vadd.f32 %v817, 1.0
  %v902 = vadd.f32 %v819, 1.0
  %v903 = vadd.f32 %v821, 1.0
  %v904 = vadd.f32 %v823, 1.0
  %v905 = vadd.f32 %v825, 1.0
  %v906 = vadd.f32 %v827, 1.0
  %v907 = vadd.f32 %v829, 1.0
  %v908 = vadd.f32 %v831, 1.0
  %v909 = vadd.f32 %v833, 1.0
  %v910 = vadd.f32 %v835, 1.0
  %v911 = vadd.f32 %v837, 1.0
  %v912 = vadd.f32 %v839, 1.0
  %v913 = vadd.f32 %v841, 1.0
  %v914 = vadd.f32 %v843, 1.0
  %v915 = vadd.f32 %v845, 1.0
  %v916 = vadd.f32 %v847, 1.0
  %v917 = vadd.f32 %v849, 1.0
  %v918 = vadd.f32 %v851, 1.0
  %v919 = vadd.f32 %v853, 1.0
  %v920 = vadd.f32 %v855, 1.0
  %v921 = vadd.f32 %v857, 1.0
  %v922 = vrcp.pop %v858
  %v923 = vmul.f32 1.0, %v922
  %v924 = vrcp.pop %v859
  %v925 = vmul.f32 1.0, %v924
  %v926 = vrcp.pop %v860
  %v927 = vmul.f32 1.0, %v926
  %v928 = vrcp.pop %v861
  %v929 = vmul.f32 1.0, %v928
  %v930 = vrcp.pop %v862
  %v931 = vmul.f32 1.0, %v930
  %v932 = vrcp.pop %v863
  %v933 = vmul.f32 1.0, %v932
  %v934 = vrcp.pop %v864
  %v935 = vmul.f32 1.0, %v934
  %v936 = vrcp.pop %v865
  %v937 = vmul.f32 1.0, %v936
  %v938 = vrcp.pop %v866
  %v939 = vmul.f32 1.0, %v938
  %v940 = vrcp.pop %v867
  %v941 = vmul.f32 1.0, %v940
  %v942 = vrcp.pop %v868
  %v943 = vmul.f32 1.0, %v942
  %v944 = vrcp.pop %v869
  %v945 = vmul.f32 1.0, %v944
  %v946 = vrcp.pop %v870
  %v947 = vmul.f32 1.0, %v946
  %v948 = vrcp.pop %v871
  %v949 = vmul.f32 1.0, %v948
  %v950 = vrcp.pop %v872
  %v951 = vmul.f32 1.0, %v950
  %v952 = vrcp.pop %v873
  %v953 = vmul.f32 1.0, %v952
  %v954 = vrcp.pop %v874
  %v955 = vmul.f32 1.0, %v954
  %v956 = vrcp.pop %v875
  %v957 = vmul.f32 1.0, %v956
  %v958 = vrcp.pop %v876
  %v959 = vmul.f32 1.0, %v958
  %v960 = vrcp.pop %v877
  %v961 = vmul.f32 1.0, %v960
  %v962 = vrcp.pop %v878
  %v963 = vmul.f32 1.0, %v962
  %v964 = vrcp.pop %v879
  %v965 = vmul.f32 1.0, %v964
  %v966 = vrcp.pop %v880
  %v967 = vmul.f32 1.0, %v966
  %v968 = vrcp.pop %v881
  %v969 = vmul.f32 1.0, %v968
  %v970 = vrcp.pop %v882
  %v971 = vmul.f32 1.0, %v970
  %v972 = vrcp.pop %v883
  %v973 = vmul.f32 1.0, %v972
  %v974 = vrcp.pop %v884
  %v975 = vmul.f32 1.0, %v974
  %v976 = vrcp.pop %v885
  %v977 = vmul.f32 1.0, %v976
  %v978 = vrcp.pop %v886
  %v979 = vmul.f32 1.0, %v978
  %v980 = vrcp.pop %v887
  %v981 = vmul.f32 1.0, %v980
  %v982 = vrcp.pop %v888
  %v983 = vmul.f32 1.0, %v982
  %v984 = vrcp.pop %v889
  %v985 = vmul.f32 1.0, %v984
  %v986 = vrcp.pop %v890
  %v987 = vmul.f32 1.0, %v986
  %v988 = vrcp.pop %v891
  %v989 = vmul.f32 1.0, %v988
  %v990 = vrcp.pop %v892
  %v991 = vmul.f32 1.0, %v990
  %v992 = vrcp.pop %v893
  %v993 = vmul.f32 1.0, %v992
  %v994 = vrcp.pop %v894
  %v995 = vmul.f32 1.0, %v994
  %v996 = vrcp.pop %v895
  %v997 = vmul.f32 1.0, %v996
  %v998 = vrcp.pop %v896
  %v999 = vmul.f32 1.0, %v998
  %v1000 = vrcp.pop %v897
  %v1001 = vmul.f32 1.0, %v1000
  %v1002 = vrcp.pop %v898
  %v1003 = vmul.f32 1.0, %v1002
  %v1004 = vrcp.pop %v899
  %v1005 = vmul.f32 1.0, %v1004
  %v1006 = vrcp.pop %v900
  %v1007 = vmul.f32 1.0, %v1006
  %v1008 = vrcp.pop %v901
  %v1009 = vmul.f32 1.0, %v1008
  %v1010 = vrcp.pop %v902
  %v1011 = vmul.f32 1.0, %v1010
  %v1012 = vrcp.pop %v903
  %v1013 = vmul.f32 1.0, %v1012
  %v1014 = vrcp.pop %v904
  %v1015 = vmul.f32 1.0, %v1014
  %v1016 = vrcp.pop %v905
  %v1017 = vmul.f32 1.0, %v1016
  %v1018 = vrcp.pop %v906
  %v1019 = vmul.f32 1.0, %v1018
  %v1020 = vrcp.pop %v907
  %v1021 = vmul.f32 1.0, %v1020
  %v1022 = vrcp.pop %v908
  %v1023 = vmul.f32 1.0, %v1022
  %v1024 = vrcp.pop %v909
  %v1025 = vmul.f32 1.0, %v1024
  %v1026 = vrcp.pop %v910
  %v1027 = vmul.f32 1.0, %v1026
  %v1028 = vrcp.pop %v911
  %v1029 = vmul.f32 1.0, %v1028
  %v1030 = vrcp.pop %v912
  %v1031 = vmul.f32 1.0, %v1030
  %v1032 = vrcp.pop %v913
  %v1033 = vmul.f32 1.0, %v1032
  %v1034 = vrcp.pop %v914
  %v1035 = vmul.f32 1.0, %v1034
  %v1036 = vrcp.pop %v915
  %v1037 = vmul.f32 1.0, %v1036
  %v1038 = vrcp.pop %v916
  %v1039 = vmul.f32 1.0, %v1038
  %v1040 = vrcp.pop %v917
  %v1041 = vmul.f32 1.0, %v1040
  %v1042 = vrcp.pop %v918
  %v1043 = vmul.f32 1.0, %v1042
  %v1044 = vrcp.pop %v919
  %v1045 = vmul.f32 1.0, %v1044
  %v1046 = vrcp.pop %v920
  %v1047 = vmul.f32 1.0, %v1046
  %v1048 = vrcp.pop %v921
  %v1049 = vmul.f32 1.0, %v1048
  %v1050 = vmul.f32 %v348, %v923
  %v1051 = vmul.f32 %v353, %v925
  %v1052 = vmul.f32 %v358, %v927
  %v1053 = vmul.f32 %v363, %v929
  %v1054 = vmul.f32 %v368, %v931
  %v1055 = vmul.f32 %v373, %v933
  %v1056 = vmul.f32 %v378, %v935
  %v1057 = vmul.f32 %v383, %v937
  %v1058 = vmul.f32 %v388, %v939
  %v1059 = vmul.f32 %v393, %v941
  %v1060 = vmul.f32 %v398, %v943
  %v1061 = vmul.f32 %v403, %v945
  %v1062 = vmul.f32 %v408, %v947
  %v1063 = vmul.f32 %v413, %v949
  %v1064 = vmul.f32 %v418, %v951
  %v1065 = vmul.f32 %v423, %v953
  %v1066 = vmul.f32 %v428, %v955
  %v1067 = vmul.f32 %v433, %v957
  %v1068 = vmul.f32 %v438, %v959
  %v1069 = vmul.f32 %v443, %v961
  %v1070 = vmul.f32 %v448, %v963
  %v1071 = vmul.f32 %v453, %v965
  %v1072 = vmul.f32 %v458, %v967
  %v1073 = vmul.f32 %v463, %v969
  %v1074 = vmul.f32 %v468, %v971
  %v1075 = vmul.f32 %v473, %v973
  %v1076 = vmul.f32 %v478, %v975
  %v1077 = vmul.f32 %v483, %v977
  %v1078 = vmul.f32 %v488, %v979
  %v1079 = vmul.f32 %v493, %v981
  %v1080 = vmul.f32 %v498, %v983
  %v1081 = vmul.f32 %v503, %v985
  %v1082 = vmul.f32 %v508, %v987
  %v1083 = vmul.f32 %v513, %v989
  %v1084 = vmul.f32 %v518, %v991
  %v1085 = vmul.f32 %v523, %v993
  %v1086 = vmul.f32 %v528, %v995
  %v1087 = vmul.f32 %v533, %v997
  %v1088 = vmul.f32 %v538, %v999
  %v1089 = vmul.f32 %v543, %v1001
  %v1090 = vmul.f32 %v548, %v1003
  %v1091 = vmul.f32 %v553, %v1005
  %v1092 = vmul.f32 %v558, %v1007
  %v1093 = vmul.f32 %v563, %v1009
  %v1094 = vmul.f32 %v568, %v1011
  %v1095 = vmul.f32 %v573, %v1013
  %v1096 = vmul.f32 %v578, %v1015
  %v1097 = vmul.f32 %v583, %v1017
  %v1098 = vmul.f32 %v588, %v1019
  %v1099 = vmul.f32 %v593, %v1021
  %v1100 = vmul.f32 %v598, %v1023
  %v1101 = vmul.f32 %v603, %v1025
  %v1102 = vmul.f32 %v608, %v1027
  %v1103 = vmul.f32 %v613, %v1029
  %v1104 = vmul.f32 %v618, %v1031
  %v1105 = vmul.f32 %v623, %v1033
  %v1106 = vmul.f32 %v628, %v1035
  %v1107 = vmul.f32 %v633, %v1037
  %v1108 = vmul.f32 %v638, %v1039
  %v1109 = vmul.f32 %v643, %v1041
  %v1110 = vmul.f32 %v648, %v1043
  %v1111 = vmul.f32 %v653, %v1045
  %v1112 = vmul.f32 %v658, %v1047
  %v1113 = vmul.f32 %v663, %v1049
  %vm1114 = vcmask 130048
  %1115 = vst.msk [vmem:[%s3] sm:$0xff] %vm1114, %v1050
  %1116 = vst.msk [vmem:[%s3 + $0x8] sm:$0xff] %vm1114, %v1051
  %1117 = vst.msk [vmem:[%s3 + $0x10] sm:$0xff] %vm1114, %v1052
  %1118 = vst.msk [vmem:[%s3 + $0x18] sm:$0xff] %vm1114, %v1053
  %1119 = vst.msk [vmem:[%s3 + $0x20] sm:$0xff] %vm1114, %v1054
  %1120 = vst.msk [vmem:[%s3 + $0x28] sm:$0xff] %vm1114, %v1055
  %1121 = vst.msk [vmem:[%s3 + $0x30] sm:$0xff] %vm1114, %v1056
  %1122 = vst.msk [vmem:[%s3 + $0x38] sm:$0xff] %vm1114, %v1057
  %1123 = vst.msk [vmem:[%s3 + $0x40] sm:$0xff] %vm1114, %v1058
  %1124 = vst.msk [vmem:[%s3 + $0x48] sm:$0xff] %vm1114, %v1059
  %1125 = vst.msk [vmem:[%s3 + $0x50] sm:$0xff] %vm1114, %v1060
  %1126 = vst.msk [vmem:[%s3 + $0x58] sm:$0xff] %vm1114, %v1061
  %1127 = vst.msk [vmem:[%s3 + $0x60] sm:$0xff] %vm1114, %v1062
  %1128 = vst.msk [vmem:[%s3 + $0x68] sm:$0xff] %vm1114, %v1063
  %1129 = vst.msk [vmem:[%s3 + $0x70] sm:$0xff] %vm1114, %v1064
  %1130 = vst.msk [vmem:[%s3 + $0x78] sm:$0xff] %vm1114, %v1065
  %1131 = vst.msk [vmem:[%s3 + $0x80] sm:$0xff] %vm1114, %v1066
  %1132 = vst.msk [vmem:[%s3 + $0x88] sm:$0xff] %vm1114, %v1067
  %1133 = vst.msk [vmem:[%s3 + $0x90] sm:$0xff] %vm1114, %v1068
  %1134 = vst.msk [vmem:[%s3 + $0x98] sm:$0xff] %vm1114, %v1069
  %1135 = vst.msk [vmem:[%s3 + $0xa0] sm:$0xff] %vm1114, %v1070
  %1136 = vst.msk [vmem:[%s3 + $0xa8] sm:$0xff] %vm1114, %v1071
  %1137 = vst.msk [vmem:[%s3 + $0xb0] sm:$0xff] %vm1114, %v1072
  %1138 = vst.msk [vmem:[%s3 + $0xb8] sm:$0xff] %vm1114, %v1073
  %1139 = vst.msk [vmem:[%s3 + $0xc0] sm:$0xff] %vm1114, %v1074
  %1140 = vst.msk [vmem:[%s3 + $0xc8] sm:$0xff] %vm1114, %v1075
  %1141 = vst.msk [vmem:[%s3 + $0xd0] sm:$0xff] %vm1114, %v1076
  %1142 = vst.msk [vmem:[%s3 + $0xd8] sm:$0xff] %vm1114, %v1077
  %1143 = vst.msk [vmem:[%s3 + $0xe0] sm:$0xff] %vm1114, %v1078
  %1144 = vst.msk [vmem:[%s3 + $0xe8] sm:$0xff] %vm1114, %v1079
  %1145 = vst.msk [vmem:[%s3 + $0xf0] sm:$0xff] %vm1114, %v1080
  %1146 = vst.msk [vmem:[%s3 + $0xf8] sm:$0xff] %vm1114, %v1081
  %1147 = vst.msk [vmem:[%s3 + $0x100] sm:$0xff] %vm1114, %v1082
  %1148 = vst.msk [vmem:[%s3 + $0x108] sm:$0xff] %vm1114, %v1083
  %1149 = vst.msk [vmem:[%s3 + $0x110] sm:$0xff] %vm1114, %v1084
  %1150 = vst.msk [vmem:[%s3 + $0x118] sm:$0xff] %vm1114, %v1085
  %1151 = vst.msk [vmem:[%s3 + $0x120] sm:$0xff] %vm1114, %v1086
  %1152 = vst.msk [vmem:[%s3 + $0x128] sm:$0xff] %vm1114, %v1087
  %1153 = vst.msk [vmem:[%s3 + $0x130] sm:$0xff] %vm1114, %v1088
  %1154 = vst.msk [vmem:[%s3 + $0x138] sm:$0xff] %vm1114, %v1089
  %1155 = vst.msk [vmem:[%s3 + $0x140] sm:$0xff] %vm1114, %v1090
  %1156 = vst.msk [vmem:[%s3 + $0x148] sm:$0xff] %vm1114, %v1091
  %1157 = vst.msk [vmem:[%s3 + $0x150] sm:$0xff] %vm1114, %v1092
  %1158 = vst.msk [vmem:[%s3 + $0x158] sm:$0xff] %vm1114, %v1093
  %1159 = vst.msk [vmem:[%s3 + $0x160] sm:$0xff] %vm1114, %v1094
  %1160 = vst.msk [vmem:[%s3 + $0x168] sm:$0xff] %vm1114, %v1095
  %1161 = vst.msk [vmem:[%s3 + $0x170] sm:$0xff] %vm1114, %v1096
  %1162 = vst.msk [vmem:[%s3 + $0x178] sm:$0xff] %vm1114, %v1097
  %1163 = vst.msk [vmem:[%s3 + $0x180] sm:$0xff] %vm1114, %v1098
  %1164 = vst.msk [vmem:[%s3 + $0x188] sm:$0xff] %vm1114, %v1099
  %1165 = vst.msk [vmem:[%s3 + $0x190] sm:$0xff] %vm1114, %v1100
  %1166 = vst.msk [vmem:[%s3 + $0x198] sm:$0xff] %vm1114, %v1101
  %1167 = vst.msk [vmem:[%s3 + $0x1a0] sm:$0xff] %vm1114, %v1102
  %1168 = vst.msk [vmem:[%s3 + $0x1a8] sm:$0xff] %vm1114, %v1103
  %1169 = vst.msk [vmem:[%s3 + $0x1b0] sm:$0xff] %vm1114, %v1104
  %1170 = vst.msk [vmem:[%s3 + $0x1b8] sm:$0xff] %vm1114, %v1105
  %1171 = vst.msk [vmem:[%s3 + $0x1c0] sm:$0xff] %vm1114, %v1106
  %1172 = vst.msk [vmem:[%s3 + $0x1c8] sm:$0xff] %vm1114, %v1107
  %1173 = vst.msk [vmem:[%s3 + $0x1d0] sm:$0xff] %vm1114, %v1108
  %1174 = vst.msk [vmem:[%s3 + $0x1d8] sm:$0xff] %vm1114, %v1109
  %1175 = vst.msk [vmem:[%s3 + $0x1e0] sm:$0xff] %vm1114, %v1110
  %1176 = vst.msk [vmem:[%s3 + $0x1e8] sm:$0xff] %vm1114, %v1111
  %1177 = vst.msk [vmem:[%s3 + $0x1f0] sm:$0xff] %vm1114, %v1112
  %1178 = vst.msk [vmem:[%s3 + $0x1f8] sm:$0xff] %vm1114, %v1113
  // Predicated region
  $region14: #{csppc_forward_nchw.5} parent=0 // pred_check
    _
  $region15: #{csppc_forward_nchw.5} parent=0 // pred_check_branch
    %1180 = sbr.rel (0) target = $region17
  $region16: #{csppc_forward_nchw.5} parent=0 // pred_region
    _
  $region17: #{csppc_forward_nchw.5} parent=0 // pred_fallthru
    _
  // Predicated region
  $region18: #{csppc_forward_nchw.5} parent=0 // pred_check
    _
  $region19: #{csppc_forward_nchw.5} parent=0 // pred_check_branch
    %1182 = sbr.rel (0) target = $region21
  $region20: #{csppc_forward_nchw.5} parent=0 // pred_region
    _
  $region21: #{csppc_forward_nchw.5} parent=0 // pred_fallthru
    _

// kernel: csppc_forward_nchw.4
$region0: #{csppc_forward_nchw.4}
  #allocation0 [shape = 'u32[]', space=smem, size = 0x4, offset = 0x4, fixed_abs, tag = 'smem constant byte address 0x4 - core index']
  #allocation1 [shape = 'u32[144,128]{1,0:T(1,128)}', space=vmem, size = 0x12000, scoped, tag = 'internal scratch']
  #allocation2 [shape = 'f32[18,18,2]{2,1,0:T(8,128)}', space=vmem, size = 0x36000, scoped, tag = 'scratch operand']
  %s0 = inlined_call_operand.vmem [shape: f32[2,16,16,8], index: 0, kind: input, shape index: {}]
  %s1 = inlined_call_operand.vmem [shape: f32[18,2], index: 1, kind: input, shape index: {}]
  %s2 = inlined_call_operand.vmem [shape: f32[18,2], index: 2, kind: input, shape index: {}]
  %s3 = inlined_call_operand.vmem [shape: f32[2,16,16,8], index: 3, kind: output, shape index: {}]
  %s4 = sld [smem:[#allocation0]]
  $region45: #{csppc_forward_nchw.4} parent=0
    _
  %s6 = ssub.s32 1, %s4
  %s7 = scalar_select 0, %s6, %s4
  loop: start=0, step=1, limit=4
  $region2: #{csppc_forward_nchw.4} parent=0 // loop_pre_header
    _
  $region3: #{csppc_forward_nchw.4} parent=0 // loop_header
    %s9 = sphi 0, %s13
    %p10 = scmp.ge.s32.totalorder %s9, 4
    %s19 = sphi 0, %s21
    %s22 = sphi 0, %s19
    %s23 = sphi 0, %s22
    %s39 = sphi 0, %s23
    %s43 = sphi 0, %s43
    %s45 = sphi 0, %s43
    %s46 = sphi 0, %s45
    %s60 = sphi 0, %s46
    %s64 = sphi 0, %s64
    %s66 = sphi 0, %s64
    %s67 = sphi 0, %s66
    %s81 = sphi 0, %s67
    %s87 = sphi 0, %s89
    %s90 = sphi 0, %s87
    %s91 = sphi 0, %s90
    %s107 = sphi 0, %s91
  $region4: #{csppc_forward_nchw.4} parent=0 // loop_header_branch
    %12 = sbr.rel (%p10) target = $region8
  $region5: #{csppc_forward_nchw.4} parent=0 // loop_body
    %s14 = ssub.s32 %s9, 1
    %s15 = ssub.s32 %s9, 2
    %s16 = sadd.s32 %s9, 1
    %s17 = ssub.s32 %s9, %s16
    %p18 = scmp.eq.s32.totalorder %s17, 0
    %s20 = sadd.s32 %s19, 1
    %s21 = scalar_select %p18, %s19, %s20
    %p24 = pneg %p18
    %p25 = scmp.eq.s32.totalorder %s9, 1
    %p26 = por %p24, %p25
    %p27 = scmp.ne.s32.totalorder %s19, %s22
    %p28 = scmp.eq.s32.totalorder %s9, 0
    %p29 = por %p27, %p28
    %p30 = scmp.ne.s32.totalorder %s19, %s22
    %p31 = scmp.eq.s32.totalorder %s14, 1
    %p32 = por %p30, %p31
    %p33 = scmp.ne.s32.totalorder %s22, %s23
    %p34 = scmp.eq.s32.totalorder %s14, 0
    %p35 = por %p33, %p34
    %p36 = scmp.ne.s32.totalorder %s22, %s23
    %p37 = scmp.eq.s32.totalorder %s15, 1
    %p38 = por %p36, %p37
    %p40 = scmp.ne.s32.totalorder %s23, %s39
    %p41 = scmp.eq.s32.totalorder %s15, 0
    %p42 = por %p40, %p41
    %s44 = sadd.s32 %s43, 1
    %p47 = scmp.eq.s32.totalorder %s9, 1
    %p48 = scmp.ne.s32.totalorder %s43, %s45
    %p49 = scmp.eq.s32.totalorder %s9, 0
    %p50 = por %p48, %p49
    %p51 = scmp.ne.s32.totalorder %s43, %s45
    %p52 = scmp.eq.s32.totalorder %s14, 1
    %p53 = por %p51, %p52
    %p54 = scmp.ne.s32.totalorder %s45, %s46
    %p55 = scmp.eq.s32.totalorder %s14, 0
    %p56 = por %p54, %p55
    %p57 = scmp.ne.s32.totalorder %s45, %s46
    %p58 = scmp.eq.s32.totalorder %s15, 1
    %p59 = por %p57, %p58
    %p61 = scmp.ne.s32.totalorder %s46, %s60
    %p62 = scmp.eq.s32.totalorder %s15, 0
    %p63 = por %p61, %p62
    %s65 = sadd.s32 %s64, 1
    %p68 = scmp.eq.s32.totalorder %s9, 1
    %p69 = scmp.ne.s32.totalorder %s64, %s66
    %p70 = scmp.eq.s32.totalorder %s9, 0
    %p71 = por %p69, %p70
    %p72 = scmp.ne.s32.totalorder %s64, %s66
    %p73 = scmp.eq.s32.totalorder %s14, 1
    %p74 = por %p72, %p73
    %p75 = scmp.ne.s32.totalorder %s66, %s67
    %p76 = scmp.eq.s32.totalorder %s14, 0
    %p77 = por %p75, %p76
    %p78 = scmp.ne.s32.totalorder %s66, %s67
    %p79 = scmp.eq.s32.totalorder %s15, 1
    %p80 = por %p78, %p79
    %p82 = scmp.ne.s32.totalorder %s67, %s81
    %p83 = scmp.eq.s32.totalorder %s15, 0
    %p84 = por %p82, %p83
    %s85 = ssub.s32 %s9, %s16
    %p86 = scmp.eq.s32.totalorder %s85, 0
    %s88 = sadd.s32 %s87, 1
    %s89 = scalar_select %p86, %s87, %s88
    %p92 = pneg %p86
    %p93 = scmp.eq.s32.totalorder %s9, 1
    %p94 = por %p92, %p93
    %p95 = scmp.ne.s32.totalorder %s87, %s90
    %p96 = scmp.eq.s32.totalorder %s9, 0
    %p97 = por %p95, %p96
    %p98 = scmp.ne.s32.totalorder %s87, %s90
    %p99 = scmp.eq.s32.totalorder %s14, 1
    %p100 = por %p98, %p99
    %p101 = scmp.ne.s32.totalorder %s90, %s91
    %p102 = scmp.eq.s32.totalorder %s14, 0
    %p103 = por %p101, %p102
    %p104 = scmp.ne.s32.totalorder %s90, %s91
    %p105 = scmp.eq.s32.totalorder %s15, 1
    %p106 = por %p104, %p105
    %p108 = scmp.ne.s32.totalorder %s91, %s107
    %p109 = scmp.eq.s32.totalorder %s15, 0
    %p110 = por %p108, %p109
    %p111 = scmp.le.s32.totalorder 1, %s9
    %p112 = scmp.lt.s32.totalorder %s9, 3
    %p113 = pnand %p111, %p112
    %p114 = pneg %p113
    // Predicated region
    $region9: #{csppc_forward_nchw.4} parent=5 // pred_check
      _
    $region10: #{csppc_forward_nchw.4} parent=5 // pred_check_branch
      %116 = sbr.rel (%p113) target = $region12
    $region11: #{csppc_forward_nchw.4} parent=5 // pred_region
      %s117 = ssub.s32 %s9, 1
      // Predicated region
      $region13: #{csppc_forward_nchw.4} parent=11 // pred_check
        %p118 = pneg %p56
      $region14: #{csppc_forward_nchw.4} parent=11 // pred_check_branch
        %120 = sbr.rel (%p118) target = $region16
      $region15: #{csppc_forward_nchw.4} parent=11 // pred_region
        _
      $region16: #{csppc_forward_nchw.4} parent=11 // pred_fallthru
        _
      // Predicated region
      $region17: #{csppc_forward_nchw.4} parent=11 // pred_check
        %p121 = pneg %p77
      $region18: #{csppc_forward_nchw.4} parent=11 // pred_check_branch
        %123 = sbr.rel (%p121) target = $region20
      $region19: #{csppc_forward_nchw.4} parent=11 // pred_region
        _
      $region20: #{csppc_forward_nchw.4} parent=11 // pred_fallthru
        _
    $region12: #{csppc_forward_nchw.4} parent=5 // pred_fallthru
      _
    %p124 = scmp.lt.s32.totalorder %s9, 2
    // Predicated region
    $region21: #{csppc_forward_nchw.4} parent=5 // pred_check
      %p125 = pneg %p124
    $region22: #{csppc_forward_nchw.4} parent=5 // pred_check_branch
      %127 = sbr.rel (%p125) target = $region24
    $region23: #{csppc_forward_nchw.4} parent=5 // pred_region
      // Predicated region
      $region25: #{csppc_forward_nchw.4} parent=23 // pred_check
        %p128 = pneg %p29
      $region26: #{csppc_forward_nchw.4} parent=23 // pred_check_branch
        %130 = sbr.rel (%p128) target = $region28
      $region27: #{csppc_forward_nchw.4} parent=23 // pred_region
        %p131 = scmp.lt.s32.totalorder %s9, 1
        %s132 = scalar_select %p131, %s9, 1
        %s133 = smul.addr %s132, 32
        %s134 = smul.addr %s133, 8
        %s135 = scalar_lea.vmem %s0, %s134
      $region28: #{csppc_forward_nchw.4} parent=23 // pred_fallthru
        _
    $region24: #{csppc_forward_nchw.4} parent=5 // pred_fallthru
      _
    %p136 = scmp.le.s32.totalorder 1, %s9
    %p137 = scmp.lt.s32.totalorder %s9, 3
    %p138 = pnand %p136, %p137
    %p139 = pneg %p138
    // Predicated region
    $region29: #{csppc_forward_nchw.4} parent=5 // pred_check
      _
    $region30: #{csppc_forward_nchw.4} parent=5 // pred_check_branch
      %141 = sbr.rel (%p138) target = $region32
    $region31: #{csppc_forward_nchw.4} parent=5 // pred_region
      %s142 = ssub.s32 %s9, 1
      %p143 = scmp.lt.s32.totalorder %s14, 1
      %s144 = scalar_select %p143, %s14, 1
      %s145 = smul.addr %s144, 32
      %s146 = smul.addr %s145, 8
      %s147 = scalar_lea.vmem %s0, %s146
      %p148 = pneg %p35
      %p149 = pneg %p32
      %p150 = pneg %p56
      %p151 = pneg %p53
      %p152 = pneg %p77
      %p153 = pneg %p74
      %p154 = pneg %p103
      %p155 = pneg %p100
      %p156 = scmp.lt.s32.totalorder %s14, 1
      %s157 = scalar_select %p156, %s14, 1
      %s158 = smul.addr %s157, 32
      %s159 = smul.addr %s158, 8
      %s160 = scalar_lea.vmem %s3, %s159
      %p161 = scmp.lt.s32.totalorder %s14, 1
      %s162 = scalar_select %p161, %s14, 1
      %s163 = smul.addr %s162, 32
      %s164 = smul.addr %s163, 8
      %s165 = scalar_lea.vmem %s0, %s164
      %p166 = scmp.lt.s32.totalorder %s14, 1
      %s167 = scalar_select %p166, %s14, 1
      %s168 = smul.addr %s167, 32
      %s169 = smul.addr %s168, 8
      %s170 = scalar_lea.vmem %s3, %s169
      %vm171 = vcmask 15360
      %172 = vst.msk [vmem:[#allocation2] sm:$0xff] %vm171, 0.0
      %173 = vst.msk [vmem:[#allocation2 + $0x8] sm:$0xff] %vm171, 0.0
      %vm174 = vcmask 9216
      %175 = vst.msk [vmem:[#allocation2 + $0x10] sm:$0x3] %vm174, 0.0
      %176 = vst.msk [vmem:[#allocation2 + $0x18] sm:$0xff] %vm171, 0.0
      %177 = vst.msk [vmem:[#allocation2 + $0x20] sm:$0xff] %vm171, 0.0
      %178 = vst.msk [vmem:[#allocation2 + $0x28] sm:$0x3] %vm174, 0.0
      %179 = vst.msk [vmem:[#allocation2 + $0x30] sm:$0xff] %vm171, 0.0
      %180 = vst.msk [vmem:[#allocation2 + $0x38] sm:$0xff] %vm171, 0.0
      %181 = vst.msk [vmem:[#allocation2 + $0x40] sm:$0x3] %vm174, 0.0
      %182 = vst.msk [vmem:[#allocation2 + $0x48] sm:$0xff] %vm171, 0.0
      %183 = vst.msk [vmem:[#allocation2 + $0x50] sm:$0xff] %vm171, 0.0
      %184 = vst.msk [vmem:[#allocation2 + $0x58] sm:$0x3] %vm174, 0.0
      %185 = vst.msk [vmem:[#allocation2 + $0x60] sm:$0xff] %vm171, 0.0
      %186 = vst.msk [vmem:[#allocation2 + $0x68] sm:$0xff] %vm171, 0.0
      %187 = vst.msk [vmem:[#allocation2 + $0x70] sm:$0x3] %vm174, 0.0
      %188 = vst.msk [vmem:[#allocation2 + $0x78] sm:$0xff] %vm171, 0.0
      %189 = vst.msk [vmem:[#allocation2 + $0x80] sm:$0xff] %vm171, 0.0
      %190 = vst.msk [vmem:[#allocation2 + $0x88] sm:$0x3] %vm174, 0.0
      %191 = vst.msk [vmem:[#allocation2 + $0x90] sm:$0xff] %vm171, 0.0
      %192 = vst.msk [vmem:[#allocation2 + $0x98] sm:$0xff] %vm171, 0.0
      %193 = vst.msk [vmem:[#allocation2 + $0xa0] sm:$0x3] %vm174, 0.0
      %194 = vst.msk [vmem:[#allocation2 + $0xa8] sm:$0xff] %vm171, 0.0
      %195 = vst.msk [vmem:[#allocation2 + $0xb0] sm:$0xff] %vm171, 0.0
      %196 = vst.msk [vmem:[#allocation2 + $0xb8] sm:$0x3] %vm174, 0.0
      %197 = vst.msk [vmem:[#allocation2 + $0xc0] sm:$0xff] %vm171, 0.0
      %198 = vst.msk [vmem:[#allocation2 + $0xc8] sm:$0xff] %vm171, 0.0
      %199 = vst.msk [vmem:[#allocation2 + $0xd0] sm:$0x3] %vm174, 0.0
      %200 = vst.msk [vmem:[#allocation2 + $0xd8] sm:$0xff] %vm171, 0.0
      %201 = vst.msk [vmem:[#allocation2 + $0xe0] sm:$0xff] %vm171, 0.0
      %202 = vst.msk [vmem:[#allocation2 + $0xe8] sm:$0x3] %vm174, 0.0
      %203 = vst.msk [vmem:[#allocation2 + $0xf0] sm:$0xff] %vm171, 0.0
      %204 = vst.msk [vmem:[#allocation2 + $0xf8] sm:$0xff] %vm171, 0.0
      %205 = vst.msk [vmem:[#allocation2 + $0x100] sm:$0x3] %vm174, 0.0
      %206 = vst.msk [vmem:[#allocation2 + $0x108] sm:$0xff] %vm171, 0.0
      %207 = vst.msk [vmem:[#allocation2 + $0x110] sm:$0xff] %vm171, 0.0
      %208 = vst.msk [vmem:[#allocation2 + $0x118] sm:$0x3] %vm174, 0.0
      %209 = vst.msk [vmem:[#allocation2 + $0x120] sm:$0xff] %vm171, 0.0
      %210 = vst.msk [vmem:[#allocation2 + $0x128] sm:$0xff] %vm171, 0.0
      %211 = vst.msk [vmem:[#allocation2 + $0x130] sm:$0x3] %vm174, 0.0
      %212 = vst.msk [vmem:[#allocation2 + $0x138] sm:$0xff] %vm171, 0.0
      %213 = vst.msk [vmem:[#allocation2 + $0x140] sm:$0xff] %vm171, 0.0
      %214 = vst.msk [vmem:[#allocation2 + $0x148] sm:$0x3] %vm174, 0.0
      %215 = vst.msk [vmem:[#allocation2 + $0x150] sm:$0xff] %vm171, 0.0
      %216 = vst.msk [vmem:[#allocation2 + $0x158] sm:$0xff] %vm171, 0.0
      %217 = vst.msk [vmem:[#allocation2 + $0x160] sm:$0x3] %vm174, 0.0
      %218 = vst.msk [vmem:[#allocation2 + $0x168] sm:$0xff] %vm171, 0.0
      %219 = vst.msk [vmem:[#allocation2 + $0x170] sm:$0xff] %vm171, 0.0
      %220 = vst.msk [vmem:[#allocation2 + $0x178] sm:$0x3] %vm174, 0.0
      %221 = vst.msk [vmem:[#allocation2 + $0x180] sm:$0xff] %vm171, 0.0
      %222 = vst.msk [vmem:[#allocation2 + $0x188] sm:$0xff] %vm171, 0.0
      %223 = vst.msk [vmem:[#allocation2 + $0x190] sm:$0x3] %vm174, 0.0
      %224 = vst.msk [vmem:[#allocation2 + $0x198] sm:$0xff] %vm171, 0.0
      %225 = vst.msk [vmem:[#allocation2 + $0x1a0] sm:$0xff] %vm171, 0.0
      %226 = vst.msk [vmem:[#allocation2 + $0x1a8] sm:$0x3] %vm174, 0.0
      %v227 = vld [vmem:[%s165] sm:$0xff]
      %v228 = vld [vmem:[%s165 + $0x8] sm:$0xff]
      %v229 = vld [vmem:[%s165 + $0x10] sm:$0xff]
      %v230 = vld [vmem:[%s165 + $0x18] sm:$0xff]
      %v231 = vld [vmem:[%s165 + $0x20] sm:$0xff]
      %v232 = vld [vmem:[%s165 + $0x28] sm:$0xff]
      %v233 = vld [vmem:[%s165 + $0x30] sm:$0xff]
      %v234 = vld [vmem:[%s165 + $0x38] sm:$0xff]
      %v235 = vld [vmem:[%s165 + $0x40] sm:$0xff]
      %v236 = vld [vmem:[%s165 + $0x48] sm:$0xff]
      %v237 = vld [vmem:[%s165 + $0x50] sm:$0xff]
      %v238 = vld [vmem:[%s165 + $0x58] sm:$0xff]
      %v239 = vld [vmem:[%s165 + $0x60] sm:$0xff]
      %v240 = vld [vmem:[%s165 + $0x68] sm:$0xff]
      %v241 = vld [vmem:[%s165 + $0x70] sm:$0xff]
      %v242 = vld [vmem:[%s165 + $0x78] sm:$0xff]
      %v243 = vld [vmem:[%s165 + $0x80] sm:$0xff]
      %v244 = vld [vmem:[%s165 + $0x88] sm:$0xff]
      %v245 = vld [vmem:[%s165 + $0x90] sm:$0xff]
      %v246 = vld [vmem:[%s165 + $0x98] sm:$0xff]
      %v247 = vld [vmem:[%s165 + $0xa0] sm:$0xff]
      %v248 = vld [vmem:[%s165 + $0xa8] sm:$0xff]
      %v249 = vld [vmem:[%s165 + $0xb0] sm:$0xff]
      %v250 = vld [vmem:[%s165 + $0xb8] sm:$0xff]
      %v251 = vld [vmem:[%s165 + $0xc0] sm:$0xff]
      %v252 = vld [vmem:[%s165 + $0xc8] sm:$0xff]
      %v253 = vld [vmem:[%s165 + $0xd0] sm:$0xff]
      %v254 = vld [vmem:[%s165 + $0xd8] sm:$0xff]
      %v255 = vld [vmem:[%s165 + $0xe0] sm:$0xff]
      %v256 = vld [vmem:[%s165 + $0xe8] sm:$0xff]
      %v257 = vld [vmem:[%s165 + $0xf0] sm:$0xff]
      %v258 = vld [vmem:[%s165 + $0xf8] sm:$0xff]
      %s259 = scalar_lea.vmem [#allocation2], 24
      %260 = vst.msk [vmem:[%s259 + $0x1] sm:$0xff] %vm171, %v227
      %261 = vst.msk [vmem:[%s259 + $0x9] sm:$0xff] %vm171, %v228
      %262 = vst.msk [vmem:[%s259 + $0x19] sm:$0xff] %vm171, %v229
      %263 = vst.msk [vmem:[%s259 + $0x21] sm:$0xff] %vm171, %v230
      %264 = vst.msk [vmem:[%s259 + $0x31] sm:$0xff] %vm171, %v231
      %265 = vst.msk [vmem:[%s259 + $0x39] sm:$0xff] %vm171, %v232
      %266 = vst.msk [vmem:[%s259 + $0x49] sm:$0xff] %vm171, %v233
      %267 = vst.msk [vmem:[%s259 + $0x51] sm:$0xff] %vm171, %v234
      %268 = vst.msk [vmem:[%s259 + $0x61] sm:$0xff] %vm171, %v235
      %269 = vst.msk [vmem:[%s259 + $0x69] sm:$0xff] %vm171, %v236
      %270 = vst.msk [vmem:[%s259 + $0x79] sm:$0xff] %vm171, %v237
      %271 = vst.msk [vmem:[%s259 + $0x81] sm:$0xff] %vm171, %v238
      %272 = vst.msk [vmem:[%s259 + $0x91] sm:$0xff] %vm171, %v239
      %273 = vst.msk [vmem:[%s259 + $0x99] sm:$0xff] %vm171, %v240
      %274 = vst.msk [vmem:[%s259 + $0xa9] sm:$0xff] %vm171, %v241
      %275 = vst.msk [vmem:[%s259 + $0xb1] sm:$0xff] %vm171, %v242
      %276 = vst.msk [vmem:[%s259 + $0xc1] sm:$0xff] %vm171, %v243
      %277 = vst.msk [vmem:[%s259 + $0xc9] sm:$0xff] %vm171, %v244
      %278 = vst.msk [vmem:[%s259 + $0xd9] sm:$0xff] %vm171, %v245
      %279 = vst.msk [vmem:[%s259 + $0xe1] sm:$0xff] %vm171, %v246
      %280 = vst.msk [vmem:[%s259 + $0xf1] sm:$0xff] %vm171, %v247
      %281 = vst.msk [vmem:[%s259 + $0xf9] sm:$0xff] %vm171, %v248
      %282 = vst.msk [vmem:[%s259 + $0x109] sm:$0xff] %vm171, %v249
      %283 = vst.msk [vmem:[%s259 + $0x111] sm:$0xff] %vm171, %v250
      %284 = vst.msk [vmem:[%s259 + $0x121] sm:$0xff] %vm171, %v251
      %285 = vst.msk [vmem:[%s259 + $0x129] sm:$0xff] %vm171, %v252
      %286 = vst.msk [vmem:[%s259 + $0x139] sm:$0xff] %vm171, %v253
      %287 = vst.msk [vmem:[%s259 + $0x141] sm:$0xff] %vm171, %v254
      %288 = vst.msk [vmem:[%s259 + $0x151] sm:$0xff] %vm171, %v255
      %289 = vst.msk [vmem:[%s259 + $0x159] sm:$0xff] %vm171, %v256
      %290 = vst.msk [vmem:[%s259 + $0x169] sm:$0xff] %vm171, %v257
      %291 = vst.msk [vmem:[%s259 + $0x171] sm:$0xff] %vm171, %v258
      %v292 = vld [vmem:[#allocation2] sm:$0xff]
      %v293 = vld [vmem:[#allocation2 + $0x8] sm:$0xff]
      %v294 = vld [vmem:[#allocation2 + $0x18] sm:$0xff]
      %v295 = vld [vmem:[#allocation2 + $0x20] sm:$0xff]
      %v296 = vld [vmem:[#allocation2 + $0x30] sm:$0xff]
      %v297 = vld [vmem:[#allocation2 + $0x38] sm:$0xff]
      %v298 = vld [vmem:[#allocation2 + $0x48] sm:$0xff]
      %v299 = vld [vmem:[#allocation2 + $0x50] sm:$0xff]
      %v300 = vld [vmem:[#allocation2 + $0x60] sm:$0xff]
      %v301 = vld [vmem:[#allocation2 + $0x68] sm:$0xff]
      %v302 = vld [vmem:[#allocation2 + $0x78] sm:$0xff]
      %v303 = vld [vmem:[#allocation2 + $0x80] sm:$0xff]
      %v304 = vld [vmem:[#allocation2 + $0x90] sm:$0xff]
      %v305 = vld [vmem:[#allocation2 + $0x98] sm:$0xff]
      %v306 = vld [vmem:[#allocation2 + $0xa8] sm:$0xff]
      %v307 = vld [vmem:[#allocation2 + $0xb0] sm:$0xff]
      %v308 = vld [vmem:[#allocation2 + $0xc0] sm:$0xff]
      %v309 = vld [vmem:[#allocation2 + $0xc8] sm:$0xff]
      %v310 = vld [vmem:[#allocation2 + $0xd8] sm:$0xff]
      %v311 = vld [vmem:[#allocation2 + $0xe0] sm:$0xff]
      %v312 = vld [vmem:[#allocation2 + $0xf0] sm:$0xff]
      %v313 = vld [vmem:[#allocation2 + $0xf8] sm:$0xff]
      %v314 = vld [vmem:[#allocation2 + $0x108] sm:$0xff]
      %v315 = vld [vmem:[#allocation2 + $0x110] sm:$0xff]
      %v316 = vld [vmem:[#allocation2 + $0x120] sm:$0xff]
      %v317 = vld [vmem:[#allocation2 + $0x128] sm:$0xff]
      %v318 = vld [vmem:[#allocation2 + $0x138] sm:$0xff]
      %v319 = vld [vmem:[#allocation2 + $0x140] sm:$0xff]
      %v320 = vld [vmem:[#allocation2 + $0x150] sm:$0xff]
      %v321 = vld [vmem:[#allocation2 + $0x158] sm:$0xff]
      %v322 = vld [vmem:[#allocation2 + $0x168] sm:$0xff]
      %v323 = vld [vmem:[#allocation2 + $0x170] sm:$0xff]
      %v324 = vld [vmem:[#allocation2 + $0x1] sm:$0xff]
      %v325 = vld [vmem:[#allocation2 + $0x9] sm:$0xff]
      %v326 = vld [vmem:[#allocation2 + $0x19] sm:$0xff]
      %v327 = vld [vmem:[#allocation2 + $0x21] sm:$0xff]
      %v328 = vld [vmem:[#allocation2 + $0x31] sm:$0xff]
      %v329 = vld [vmem:[#allocation2 + $0x39] sm:$0xff]
      %v330 = vld [vmem:[#allocation2 + $0x49] sm:$0xff]
      %v331 = vld [vmem:[#allocation2 + $0x51] sm:$0xff]
      %v332 = vld [vmem:[#allocation2 + $0x61] sm:$0xff]
      %v333 = vld [vmem:[#allocation2 + $0x69] sm:$0xff]
      %v334 = vld [vmem:[#allocation2 + $0x79] sm:$0xff]
      %v335 = vld [vmem:[#allocation2 + $0x81] sm:$0xff]
      %v336 = vld [vmem:[#allocation2 + $0x91] sm:$0xff]
      %v337 = vld [vmem:[#allocation2 + $0x99] sm:$0xff]
      %v338 = vld [vmem:[#allocation2 + $0xa9] sm:$0xff]
      %v339 = vld [vmem:[#allocation2 + $0xb1] sm:$0xff]
      %v340 = vld [vmem:[#allocation2 + $0xc1] sm:$0xff]
      %v341 = vld [vmem:[#allocation2 + $0xc9] sm:$0xff]
      %v342 = vld [vmem:[#allocation2 + $0xd9] sm:$0xff]
      %v343 = vld [vmem:[#allocation2 + $0xe1] sm:$0xff]
      %v344 = vld [vmem:[#allocation2 + $0xf1] sm:$0xff]
      %v345 = vld [vmem:[#allocation2 + $0xf9] sm:$0xff]
      %v346 = vld [vmem:[#allocation2 + $0x109] sm:$0xff]
      %v347 = vld [vmem:[#allocation2 + $0x111] sm:$0xff]
      %v348 = vld [vmem:[#allocation2 + $0x121] sm:$0xff]
      %v349 = vld [vmem:[#allocation2 + $0x129] sm:$0xff]
      %v350 = vld [vmem:[#allocation2 + $0x139] sm:$0xff]
      %v351 = vld [vmem:[#allocation2 + $0x141] sm:$0xff]
      %v352 = vld [vmem:[#allocation2 + $0x151] sm:$0xff]
      %v353 = vld [vmem:[#allocation2 + $0x159] sm:$0xff]
      %v354 = vld [vmem:[#allocation2 + $0x169] sm:$0xff]
      %v355 = vld [vmem:[#allocation2 + $0x171] sm:$0xff]
      %v356 = vld [vmem:[#allocation2 + $0x2] sm:$0xff]
      %v357 = vld [vmem:[#allocation2 + $0xa] sm:$0xff]
      %v358 = vld [vmem:[#allocation2 + $0x1a] sm:$0xff]
      %v359 = vld [vmem:[#allocation2 + $0x22] sm:$0xff]
      %v360 = vld [vmem:[#allocation2 + $0x32] sm:$0xff]
      %v361 = vld [vmem:[#allocation2 + $0x3a] sm:$0xff]
      %v362 = vld [vmem:[#allocation2 + $0x4a] sm:$0xff]
      %v363 = vld [vmem:[#allocation2 + $0x52] sm:$0xff]
      %v364 = vld [vmem:[#allocation2 + $0x62] sm:$0xff]
      %v365 = vld [vmem:[#allocation2 + $0x6a] sm:$0xff]
      %v366 = vld [vmem:[#allocation2 + $0x7a] sm:$0xff]
      %v367 = vld [vmem:[#allocation2 + $0x82] sm:$0xff]
      %v368 = vld [vmem:[#allocation2 + $0x92] sm:$0xff]
      %v369 = vld [vmem:[#allocation2 + $0x9a] sm:$0xff]
      %v370 = vld [vmem:[#allocation2 + $0xaa] sm:$0xff]
      %v371 = vld [vmem:[#allocation2 + $0xb2] sm:$0xff]
      %v372 = vld [vmem:[#allocation2 + $0xc2] sm:$0xff]
      %v373 = vld [vmem:[#allocation2 + $0xca] sm:$0xff]
      %v374 = vld [vmem:[#allocation2 + $0xda] sm:$0xff]
      %v375 = vld [vmem:[#allocation2 + $0xe2] sm:$0xff]
      %v376 = vld [vmem:[#allocation2 + $0xf2] sm:$0xff]
      %v377 = vld [vmem:[#allocation2 + $0xfa] sm:$0xff]
      %v378 = vld [vmem:[#allocation2 + $0x10a] sm:$0xff]
      %v379 = vld [vmem:[#allocation2 + $0x112] sm:$0xff]
      %v380 = vld [vmem:[#allocation2 + $0x122] sm:$0xff]
      %v381 = vld [vmem:[#allocation2 + $0x12a] sm:$0xff]
      %v382 = vld [vmem:[#allocation2 + $0x13a] sm:$0xff]
      %v383 = vld [vmem:[#allocation2 + $0x142] sm:$0xff]
      %v384 = vld [vmem:[#allocation2 + $0x152] sm:$0xff]
      %v385 = vld [vmem:[#allocation2 + $0x15a] sm:$0xff]
      %v386 = vld [vmem:[#allocation2 + $0x16a] sm:$0xff]
      %v387 = vld [vmem:[#allocation2 + $0x172] sm:$0xff]
      %v388 = vld [vmem:[%s259] sm:$0xff]
      %v389 = vld [vmem:[%s259 + $0x8] sm:$0xff]
      %v390 = vld [vmem:[%s259 + $0x18] sm:$0xff]
      %v391 = vld [vmem:[%s259 + $0x20] sm:$0xff]
      %v392 = vld [vmem:[%s259 + $0x30] sm:$0xff]
      %v393 = vld [vmem:[%s259 + $0x38] sm:$0xff]
      %v394 = vld [vmem:[%s259 + $0x48] sm:$0xff]
      %v395 = vld [vmem:[%s259 + $0x50] sm:$0xff]
      %v396 = vld [vmem:[%s259 + $0x60] sm:$0xff]
      %v397 = vld [vmem:[%s259 + $0x68] sm:$0xff]
      %v398 = vld [vmem:[%s259 + $0x78] sm:$0xff]
      %v399 = vld [vmem:[%s259 + $0x80] sm:$0xff]
      %v400 = vld [vmem:[%s259 + $0x90] sm:$0xff]
      %v401 = vld [vmem:[%s259 + $0x98] sm:$0xff]
      %v402 = vld [vmem:[%s259 + $0xa8] sm:$0xff]
      %v403 = vld [vmem:[%s259 + $0xb0] sm:$0xff]
      %v404 = vld [vmem:[%s259 + $0xc0] sm:$0xff]
      %v405 = vld [vmem:[%s259 + $0xc8] sm:$0xff]
      %v406 = vld [vmem:[%s259 + $0xd8] sm:$0xff]
      %v407 = vld [vmem:[%s259 + $0xe0] sm:$0xff]
      %v408 = vld [vmem:[%s259 + $0xf0] sm:$0xff]
      %v409 = vld [vmem:[%s259 + $0xf8] sm:$0xff]
      %v410 = vld [vmem:[%s259 + $0x108] sm:$0xff]
      %v411 = vld [vmem:[%s259 + $0x110] sm:$0xff]
      %v412 = vld [vmem:[%s259 + $0x120] sm:$0xff]
      %v413 = vld [vmem:[%s259 + $0x128] sm:$0xff]
      %v414 = vld [vmem:[%s259 + $0x138] sm:$0xff]
      %v415 = vld [vmem:[%s259 + $0x140] sm:$0xff]
      %v416 = vld [vmem:[%s259 + $0x150] sm:$0xff]
      %v417 = vld [vmem:[%s259 + $0x158] sm:$0xff]
      %v418 = vld [vmem:[%s259 + $0x168] sm:$0xff]
      %v419 = vld [vmem:[%s259 + $0x170] sm:$0xff]
      %v420 = vld [vmem:[%s259 + $0x1] sm:$0xff]
      %v421 = vld [vmem:[%s259 + $0x9] sm:$0xff]
      %v422 = vld [vmem:[%s259 + $0x19] sm:$0xff]
      %v423 = vld [vmem:[%s259 + $0x21] sm:$0xff]
      %v424 = vld [vmem:[%s259 + $0x31] sm:$0xff]
      %v425 = vld [vmem:[%s259 + $0x39] sm:$0xff]
      %v426 = vld [vmem:[%s259 + $0x49] sm:$0xff]
      %v427 = vld [vmem:[%s259 + $0x51] sm:$0xff]
      %v428 = vld [vmem:[%s259 + $0x61] sm:$0xff]
      %v429 = vld [vmem:[%s259 + $0x69] sm:$0xff]
      %v430 = vld [vmem:[%s259 + $0x79] sm:$0xff]
      %v431 = vld [vmem:[%s259 + $0x81] sm:$0xff]
      %v432 = vld [vmem:[%s259 + $0x91] sm:$0xff]
      %v433 = vld [vmem:[%s259 + $0x99] sm:$0xff]
      %v434 = vld [vmem:[%s259 + $0xa9] sm:$0xff]
      %v435 = vld [vmem:[%s259 + $0xb1] sm:$0xff]
      %v436 = vld [vmem:[%s259 + $0xc1] sm:$0xff]
      %v437 = vld [vmem:[%s259 + $0xc9] sm:$0xff]
      %v438 = vld [vmem:[%s259 + $0xd9] sm:$0xff]
      %v439 = vld [vmem:[%s259 + $0xe1] sm:$0xff]
      %v440 = vld [vmem:[%s259 + $0xf1] sm:$0xff]
      %v441 = vld [vmem:[%s259 + $0xf9] sm:$0xff]
      %v442 = vld [vmem:[%s259 + $0x109] sm:$0xff]
      %v443 = vld [vmem:[%s259 + $0x111] sm:$0xff]
      %v444 = vld [vmem:[%s259 + $0x121] sm:$0xff]
      %v445 = vld [vmem:[%s259 + $0x129] sm:$0xff]
      %v446 = vld [vmem:[%s259 + $0x139] sm:$0xff]
      %v447 = vld [vmem:[%s259 + $0x141] sm:$0xff]
      %v448 = vld [vmem:[%s259 + $0x151] sm:$0xff]
      %v449 = vld [vmem:[%s259 + $0x159] sm:$0xff]
      %v450 = vld [vmem:[%s259 + $0x169] sm:$0xff]
      %v451 = vld [vmem:[%s259 + $0x171] sm:$0xff]
      %v452 = vld [vmem:[%s259 + $0x2] sm:$0xff]
      %v453 = vld [vmem:[%s259 + $0xa] sm:$0xff]
      %v454 = vld [vmem:[%s259 + $0x1a] sm:$0xff]
      %v455 = vld [vmem:[%s259 + $0x22] sm:$0xff]
      %v456 = vld [vmem:[%s259 + $0x32] sm:$0xff]
      %v457 = vld [vmem:[%s259 + $0x3a] sm:$0xff]
      %v458 = vld [vmem:[%s259 + $0x4a] sm:$0xff]
      %v459 = vld [vmem:[%s259 + $0x52] sm:$0xff]
      %v460 = vld [vmem:[%s259 + $0x62] sm:$0xff]
      %v461 = vld [vmem:[%s259 + $0x6a] sm:$0xff]
      %v462 = vld [vmem:[%s259 + $0x7a] sm:$0xff]
      %v463 = vld [vmem:[%s259 + $0x82] sm:$0xff]
      %v464 = vld [vmem:[%s259 + $0x92] sm:$0xff]
      %v465 = vld [vmem:[%s259 + $0x9a] sm:$0xff]
      %v466 = vld [vmem:[%s259 + $0xaa] sm:$0xff]
      %v467 = vld [vmem:[%s259 + $0xb2] sm:$0xff]
      %v468 = vld [vmem:[%s259 + $0xc2] sm:$0xff]
      %v469 = vld [vmem:[%s259 + $0xca] sm:$0xff]
      %v470 = vld [vmem:[%s259 + $0xda] sm:$0xff]
      %v471 = vld [vmem:[%s259 + $0xe2] sm:$0xff]
      %v472 = vld [vmem:[%s259 + $0xf2] sm:$0xff]
      %v473 = vld [vmem:[%s259 + $0xfa] sm:$0xff]
      %v474 = vld [vmem:[%s259 + $0x10a] sm:$0xff]
      %v475 = vld [vmem:[%s259 + $0x112] sm:$0xff]
      %v476 = vld [vmem:[%s259 + $0x122] sm:$0xff]
      %v477 = vld [vmem:[%s259 + $0x12a] sm:$0xff]
      %v478 = vld [vmem:[%s259 + $0x13a] sm:$0xff]
      %v479 = vld [vmem:[%s259 + $0x142] sm:$0xff]
      %v480 = vld [vmem:[%s259 + $0x152] sm:$0xff]
      %v481 = vld [vmem:[%s259 + $0x15a] sm:$0xff]
      %v482 = vld [vmem:[%s259 + $0x16a] sm:$0xff]
      %v483 = vld [vmem:[%s259 + $0x172] sm:$0xff]
      %s484 = scalar_lea.vmem [#allocation2], 48
      %v485 = vld [vmem:[%s484] sm:$0xff]
      %v486 = vld [vmem:[%s484 + $0x8] sm:$0xff]
      %v487 = vld [vmem:[%s484 + $0x18] sm:$0xff]
      %v488 = vld [vmem:[%s484 + $0x20] sm:$0xff]
      %v489 = vld [vmem:[%s484 + $0x30] sm:$0xff]
      %v490 = vld [vmem:[%s484 + $0x38] sm:$0xff]
      %v491 = vld [vmem:[%s484 + $0x48] sm:$0xff]
      %v492 = vld [vmem:[%s484 + $0x50] sm:$0xff]
      %v493 = vld [vmem:[%s484 + $0x60] sm:$0xff]
      %v494 = vld [vmem:[%s484 + $0x68] sm:$0xff]
      %v495 = vld [vmem:[%s484 + $0x78] sm:$0xff]
      %v496 = vld [vmem:[%s484 + $0x80] sm:$0xff]
      %v497 = vld [vmem:[%s484 + $0x90] sm:$0xff]
      %v498 = vld [vmem:[%s484 + $0x98] sm:$0xff]
      %v499 = vld [vmem:[%s484 + $0xa8] sm:$0xff]
      %v500 = vld [vmem:[%s484 + $0xb0] sm:$0xff]
      %v501 = vld [vmem:[%s484 + $0xc0] sm:$0xff]
      %v502 = vld [vmem:[%s484 + $0xc8] sm:$0xff]
      %v503 = vld [vmem:[%s484 + $0xd8] sm:$0xff]
      %v504 = vld [vmem:[%s484 + $0xe0] sm:$0xff]
      %v505 = vld [vmem:[%s484 + $0xf0] sm:$0xff]
      %v506 = vld [vmem:[%s484 + $0xf8] sm:$0xff]
      %v507 = vld [vmem:[%s484 + $0x108] sm:$0xff]
      %v508 = vld [vmem:[%s484 + $0x110] sm:$0xff]
      %v509 = vld [vmem:[%s484 + $0x120] sm:$0xff]
      %v510 = vld [vmem:[%s484 + $0x128] sm:$0xff]
      %v511 = vld [vmem:[%s484 + $0x138] sm:$0xff]
      %v512 = vld [vmem:[%s484 + $0x140] sm:$0xff]
      %v513 = vld [vmem:[%s484 + $0x150] sm:$0xff]
      %v514 = vld [vmem:[%s484 + $0x158] sm:$0xff]
      %v515 = vld [vmem:[%s484 + $0x168] sm:$0xff]
      %v516 = vld [vmem:[%s484 + $0x170] sm:$0xff]
      %v517 = vld [vmem:[%s484 + $0x1] sm:$0xff]
      %v518 = vld [vmem:[%s484 + $0x9] sm:$0xff]
      %v519 = vld [vmem:[%s484 + $0x19] sm:$0xff]
      %v520 = vld [vmem:[%s484 + $0x21] sm:$0xff]
      %v521 = vld [vmem:[%s484 + $0x31] sm:$0xff]
      %v522 = vld [vmem:[%s484 + $0x39] sm:$0xff]
      %v523 = vld [vmem:[%s484 + $0x49] sm:$0xff]
      %v524 = vld [vmem:[%s484 + $0x51] sm:$0xff]
      %v525 = vld [vmem:[%s484 + $0x61] sm:$0xff]
      %v526 = vld [vmem:[%s484 + $0x69] sm:$0xff]
      %v527 = vld [vmem:[%s484 + $0x79] sm:$0xff]
      %v528 = vld [vmem:[%s484 + $0x81] sm:$0xff]
      %v529 = vld [vmem:[%s484 + $0x91] sm:$0xff]
      %v530 = vld [vmem:[%s484 + $0x99] sm:$0xff]
      %v531 = vld [vmem:[%s484 + $0xa9] sm:$0xff]
      %v532 = vld [vmem:[%s484 + $0xb1] sm:$0xff]
      %v533 = vld [vmem:[%s484 + $0xc1] sm:$0xff]
      %v534 = vld [vmem:[%s484 + $0xc9] sm:$0xff]
      %v535 = vld [vmem:[%s484 + $0xd9] sm:$0xff]
      %v536 = vld [vmem:[%s484 + $0xe1] sm:$0xff]
      %v537 = vld [vmem:[%s484 + $0xf1] sm:$0xff]
      %v538 = vld [vmem:[%s484 + $0xf9] sm:$0xff]
      %v539 = vld [vmem:[%s484 + $0x109] sm:$0xff]
      %v540 = vld [vmem:[%s484 + $0x111] sm:$0xff]
      %v541 = vld [vmem:[%s484 + $0x121] sm:$0xff]
      %v542 = vld [vmem:[%s484 + $0x129] sm:$0xff]
      %v543 = vld [vmem:[%s484 + $0x139] sm:$0xff]
      %v544 = vld [vmem:[%s484 + $0x141] sm:$0xff]
      %v545 = vld [vmem:[%s484 + $0x151] sm:$0xff]
      %v546 = vld [vmem:[%s484 + $0x159] sm:$0xff]
      %v547 = vld [vmem:[%s484 + $0x169] sm:$0xff]
      %v548 = vld [vmem:[%s484 + $0x171] sm:$0xff]
      %v549 = vld [vmem:[%s484 + $0x2] sm:$0xff]
      %v550 = vld [vmem:[%s484 + $0xa] sm:$0xff]
      %v551 = vld [vmem:[%s484 + $0x1a] sm:$0xff]
      %v552 = vld [vmem:[%s484 + $0x22] sm:$0xff]
      %v553 = vld [vmem:[%s484 + $0x32] sm:$0xff]
      %v554 = vld [vmem:[%s484 + $0x3a] sm:$0xff]
      %v555 = vld [vmem:[%s484 + $0x4a] sm:$0xff]
      %v556 = vld [vmem:[%s484 + $0x52] sm:$0xff]
      %v557 = vld [vmem:[%s484 + $0x62] sm:$0xff]
      %v558 = vld [vmem:[%s484 + $0x6a] sm:$0xff]
      %v559 = vld [vmem:[%s484 + $0x7a] sm:$0xff]
      %v560 = vld [vmem:[%s484 + $0x82] sm:$0xff]
      %v561 = vld [vmem:[%s484 + $0x92] sm:$0xff]
      %v562 = vld [vmem:[%s484 + $0x9a] sm:$0xff]
      %v563 = vld [vmem:[%s484 + $0xaa] sm:$0xff]
      %v564 = vld [vmem:[%s484 + $0xb2] sm:$0xff]
      %v565 = vld [vmem:[%s484 + $0xc2] sm:$0xff]
      %v566 = vld [vmem:[%s484 + $0xca] sm:$0xff]
      %v567 = vld [vmem:[%s484 + $0xda] sm:$0xff]
      %v568 = vld [vmem:[%s484 + $0xe2] sm:$0xff]
      %v569 = vld [vmem:[%s484 + $0xf2] sm:$0xff]
      %v570 = vld [vmem:[%s484 + $0xfa] sm:$0xff]
      %v571 = vld [vmem:[%s484 + $0x10a] sm:$0xff]
      %v572 = vld [vmem:[%s484 + $0x112] sm:$0xff]
      %v573 = vld [vmem:[%s484 + $0x122] sm:$0xff]
      %v574 = vld [vmem:[%s484 + $0x12a] sm:$0xff]
      %v575 = vld [vmem:[%s484 + $0x13a] sm:$0xff]
      %v576 = vld [vmem:[%s484 + $0x142] sm:$0xff]
      %v577 = vld [vmem:[%s484 + $0x152] sm:$0xff]
      %v578 = vld [vmem:[%s484 + $0x15a] sm:$0xff]
      %v579 = vld [vmem:[%s484 + $0x16a] sm:$0xff]
      %v580 = vld [vmem:[%s484 + $0x172] sm:$0xff]
      %613 = vrot.lane.b32.xlu0 %v324, 2
      %v614 = vpop.permute.xlu0 %613
      %615 = vrot.lane.b32.xlu0 %v325, 2
      %v616 = vpop.permute.xlu0 %615
      %617 = vrot.lane.b32.xlu0 %v326, 2
      %v618 = vpop.permute.xlu0 %617
      %619 = vrot.lane.b32.xlu0 %v327, 2
      %v620 = vpop.permute.xlu0 %619
      %621 = vrot.lane.b32.xlu0 %v328, 2
      %v622 = vpop.permute.xlu0 %621
      %623 = vrot.lane.b32.xlu0 %v329, 2
      %v624 = vpop.permute.xlu0 %623
      %625 = vrot.lane.b32.xlu0 %v330, 2
      %v626 = vpop.permute.xlu0 %625
      %627 = vrot.lane.b32.xlu0 %v331, 2
      %v628 = vpop.permute.xlu0 %627
      %629 = vrot.lane.b32.xlu0 %v332, 2
      %v630 = vpop.permute.xlu0 %629
      %631 = vrot.lane.b32.xlu0 %v333, 2
      %v632 = vpop.permute.xlu0 %631
      %633 = vrot.lane.b32.xlu0 %v334, 2
      %v634 = vpop.permute.xlu0 %633
      %635 = vrot.lane.b32.xlu0 %v335, 2
      %v636 = vpop.permute.xlu0 %635
      %637 = vrot.lane.b32.xlu0 %v336, 2
      %v638 = vpop.permute.xlu0 %637
      %639 = vrot.lane.b32.xlu0 %v337, 2
      %v640 = vpop.permute.xlu0 %639
      %641 = vrot.lane.b32.xlu0 %v338, 2
      %v642 = vpop.permute.xlu0 %641
      %643 = vrot.lane.b32.xlu0 %v339, 2
      %v644 = vpop.permute.xlu0 %643
      %645 = vrot.lane.b32.xlu0 %v340, 2
      %v646 = vpop.permute.xlu0 %645
      %647 = vrot.lane.b32.xlu0 %v341, 2
      %v648 = vpop.permute.xlu0 %647
      %649 = vrot.lane.b32.xlu0 %v342, 2
      %v650 = vpop.permute.xlu0 %649
      %651 = vrot.lane.b32.xlu0 %v343, 2
      %v652 = vpop.permute.xlu0 %651
      %653 = vrot.lane.b32.xlu0 %v344, 2
      %v654 = vpop.permute.xlu0 %653
      %655 = vrot.lane.b32.xlu0 %v345, 2
      %v656 = vpop.permute.xlu0 %655
      %657 = vrot.lane.b32.xlu0 %v346, 2
      %v658 = vpop.permute.xlu0 %657
      %659 = vrot.lane.b32.xlu0 %v347, 2
      %v660 = vpop.permute.xlu0 %659
      %661 = vrot.lane.b32.xlu0 %v348, 2
      %v662 = vpop.permute.xlu0 %661
      %663 = vrot.lane.b32.xlu0 %v349, 2
      %v664 = vpop.permute.xlu0 %663
      %665 = vrot.lane.b32.xlu0 %v350, 2
      %v666 = vpop.permute.xlu0 %665
      %667 = vrot.lane.b32.xlu0 %v351, 2
      %v668 = vpop.permute.xlu0 %667
      %669 = vrot.lane.b32.xlu0 %v352, 2
      %v670 = vpop.permute.xlu0 %669
      %671 = vrot.lane.b32.xlu0 %v353, 2
      %v672 = vpop.permute.xlu0 %671
      %673 = vrot.lane.b32.xlu0 %v354, 2
      %v674 = vpop.permute.xlu0 %673
      %675 = vrot.lane.b32.xlu0 %v355, 2
      %v676 = vpop.permute.xlu0 %675
      %741 = vrot.lane.b32.xlu0 %v356, 4
      %v742 = vpop.permute.xlu0 %741
      %743 = vrot.lane.b32.xlu0 %v357, 4
      %v744 = vpop.permute.xlu0 %743
      %745 = vrot.lane.b32.xlu0 %v358, 4
      %v746 = vpop.permute.xlu0 %745
      %747 = vrot.lane.b32.xlu0 %v359, 4
      %v748 = vpop.permute.xlu0 %747
      %749 = vrot.lane.b32.xlu0 %v360, 4
      %v750 = vpop.permute.xlu0 %749
      %751 = vrot.lane.b32.xlu0 %v361, 4
      %v752 = vpop.permute.xlu0 %751
      %753 = vrot.lane.b32.xlu0 %v362, 4
      %v754 = vpop.permute.xlu0 %753
      %755 = vrot.lane.b32.xlu0 %v363, 4
      %v756 = vpop.permute.xlu0 %755
      %757 = vrot.lane.b32.xlu0 %v364, 4
      %v758 = vpop.permute.xlu0 %757
      %759 = vrot.lane.b32.xlu0 %v365, 4
      %v760 = vpop.permute.xlu0 %759
      %761 = vrot.lane.b32.xlu0 %v366, 4
      %v762 = vpop.permute.xlu0 %761
      %763 = vrot.lane.b32.xlu0 %v367, 4
      %v764 = vpop.permute.xlu0 %763
      %765 = vrot.lane.b32.xlu0 %v368, 4
      %v766 = vpop.permute.xlu0 %765
      %767 = vrot.lane.b32.xlu0 %v369, 4
      %v768 = vpop.permute.xlu0 %767
      %769 = vrot.lane.b32.xlu0 %v370, 4
      %v770 = vpop.permute.xlu0 %769
      %771 = vrot.lane.b32.xlu0 %v371, 4
      %v772 = vpop.permute.xlu0 %771
      %773 = vrot.lane.b32.xlu0 %v372, 4
      %v774 = vpop.permute.xlu0 %773
      %775 = vrot.lane.b32.xlu0 %v373, 4
      %v776 = vpop.permute.xlu0 %775
      %777 = vrot.lane.b32.xlu0 %v374, 4
      %v778 = vpop.permute.xlu0 %777
      %779 = vrot.lane.b32.xlu0 %v375, 4
      %v780 = vpop.permute.xlu0 %779
      %781 = vrot.lane.b32.xlu0 %v376, 4
      %v782 = vpop.permute.xlu0 %781
      %783 = vrot.lane.b32.xlu0 %v377, 4
      %v784 = vpop.permute.xlu0 %783
      %785 = vrot.lane.b32.xlu0 %v378, 4
      %v786 = vpop.permute.xlu0 %785
      %787 = vrot.lane.b32.xlu0 %v379, 4
      %v788 = vpop.permute.xlu0 %787
      %789 = vrot.lane.b32.xlu0 %v380, 4
      %v790 = vpop.permute.xlu0 %789
      %791 = vrot.lane.b32.xlu0 %v381, 4
      %v792 = vpop.permute.xlu0 %791
      %793 = vrot.lane.b32.xlu0 %v382, 4
      %v794 = vpop.permute.xlu0 %793
      %795 = vrot.lane.b32.xlu0 %v383, 4
      %v796 = vpop.permute.xlu0 %795
      %797 = vrot.lane.b32.xlu0 %v384, 4
      %v798 = vpop.permute.xlu0 %797
      %799 = vrot.lane.b32.xlu0 %v385, 4
      %v800 = vpop.permute.xlu0 %799
      %801 = vrot.lane.b32.xlu0 %v386, 4
      %v802 = vpop.permute.xlu0 %801
      %803 = vrot.lane.b32.xlu0 %v387, 4
      %v804 = vpop.permute.xlu0 %803
      %869 = vrot.lane.b32.xlu0 %v388, 6
      %v870 = vpop.permute.xlu0 %869
      %871 = vrot.lane.b32.xlu0 %v389, 6
      %v872 = vpop.permute.xlu0 %871
      %873 = vrot.lane.b32.xlu0 %v390, 6
      %v874 = vpop.permute.xlu0 %873
      %875 = vrot.lane.b32.xlu0 %v391, 6
      %v876 = vpop.permute.xlu0 %875
      %877 = vrot.lane.b32.xlu0 %v392, 6
      %v878 = vpop.permute.xlu0 %877
      %879 = vrot.lane.b32.xlu0 %v393, 6
      %v880 = vpop.permute.xlu0 %879
      %881 = vrot.lane.b32.xlu0 %v394, 6
      %v882 = vpop.permute.xlu0 %881
      %883 = vrot.lane.b32.xlu0 %v395, 6
      %v884 = vpop.permute.xlu0 %883
      %885 = vrot.lane.b32.xlu0 %v396, 6
      %v886 = vpop.permute.xlu0 %885
      %887 = vrot.lane.b32.xlu0 %v397, 6
      %v888 = vpop.permute.xlu0 %887
      %889 = vrot.lane.b32.xlu0 %v398, 6
      %v890 = vpop.permute.xlu0 %889
      %891 = vrot.lane.b32.xlu0 %v399, 6
      %v892 = vpop.permute.xlu0 %891
      %893 = vrot.lane.b32.xlu0 %v400, 6
      %v894 = vpop.permute.xlu0 %893
      %895 = vrot.lane.b32.xlu0 %v401, 6
      %v896 = vpop.permute.xlu0 %895
      %897 = vrot.lane.b32.xlu0 %v402, 6
      %v898 = vpop.permute.xlu0 %897
      %899 = vrot.lane.b32.xlu0 %v403, 6
      %v900 = vpop.permute.xlu0 %899
      %901 = vrot.lane.b32.xlu0 %v404, 6
      %v902 = vpop.permute.xlu0 %901
      %903 = vrot.lane.b32.xlu0 %v405, 6
      %v904 = vpop.permute.xlu0 %903
      %905 = vrot.lane.b32.xlu0 %v406, 6
      %v906 = vpop.permute.xlu0 %905
      %907 = vrot.lane.b32.xlu0 %v407, 6
      %v908 = vpop.permute.xlu0 %907
      %909 = vrot.lane.b32.xlu0 %v408, 6
      %v910 = vpop.permute.xlu0 %909
      %911 = vrot.lane.b32.xlu0 %v409, 6
      %v912 = vpop.permute.xlu0 %911
      %913 = vrot.lane.b32.xlu0 %v410, 6
      %v914 = vpop.permute.xlu0 %913
      %915 = vrot.lane.b32.xlu0 %v411, 6
      %v916 = vpop.permute.xlu0 %915
      %917 = vrot.lane.b32.xlu0 %v412, 6
      %v918 = vpop.permute.xlu0 %917
      %919 = vrot.lane.b32.xlu0 %v413, 6
      %v920 = vpop.permute.xlu0 %919
      %921 = vrot.lane.b32.xlu0 %v414, 6
      %v922 = vpop.permute.xlu0 %921
      %923 = vrot.lane.b32.xlu0 %v415, 6
      %v924 = vpop.permute.xlu0 %923
      %925 = vrot.lane.b32.xlu0 %v416, 6
      %v926 = vpop.permute.xlu0 %925
      %927 = vrot.lane.b32.xlu0 %v417, 6
      %v928 = vpop.permute.xlu0 %927
      %929 = vrot.lane.b32.xlu0 %v418, 6
      %v930 = vpop.permute.xlu0 %929
      %931 = vrot.lane.b32.xlu0 %v419, 6
      %v932 = vpop.permute.xlu0 %931
      %997 = vrot.lane.b32.xlu0 %v420, 8
      %v998 = vpop.permute.xlu0 %997
      %999 = vrot.lane.b32.xlu0 %v421, 8
      %v1000 = vpop.permute.xlu0 %999
      %1001 = vrot.lane.b32.xlu0 %v422, 8
      %v1002 = vpop.permute.xlu0 %1001
      %1003 = vrot.lane.b32.xlu0 %v423, 8
      %v1004 = vpop.permute.xlu0 %1003
      %1005 = vrot.lane.b32.xlu0 %v424, 8
      %v1006 = vpop.permute.xlu0 %1005
      %1007 = vrot.lane.b32.xlu0 %v425, 8
      %v1008 = vpop.permute.xlu0 %1007
      %1009 = vrot.lane.b32.xlu0 %v426, 8
      %v1010 = vpop.permute.xlu0 %1009
      %1011 = vrot.lane.b32.xlu0 %v427, 8
      %v1012 = vpop.permute.xlu0 %1011
      %1013 = vrot.lane.b32.xlu0 %v428, 8
      %v1014 = vpop.permute.xlu0 %1013
      %1015 = vrot.lane.b32.xlu0 %v429, 8
      %v1016 = vpop.permute.xlu0 %1015
      %1017 = vrot.lane.b32.xlu0 %v430, 8
      %v1018 = vpop.permute.xlu0 %1017
      %1019 = vrot.lane.b32.xlu0 %v431, 8
      %v1020 = vpop.permute.xlu0 %1019
      %1021 = vrot.lane.b32.xlu0 %v432, 8
      %v1022 = vpop.permute.xlu0 %1021
      %1023 = vrot.lane.b32.xlu0 %v433, 8
      %v1024 = vpop.permute.xlu0 %1023
      %1025 = vrot.lane.b32.xlu0 %v434, 8
      %v1026 = vpop.permute.xlu0 %1025
      %1027 = vrot.lane.b32.xlu0 %v435, 8
      %v1028 = vpop.permute.xlu0 %1027
      %1029 = vrot.lane.b32.xlu0 %v436, 8
      %v1030 = vpop.permute.xlu0 %1029
      %1031 = vrot.lane.b32.xlu0 %v437, 8
      %v1032 = vpop.permute.xlu0 %1031
      %1033 = vrot.lane.b32.xlu0 %v438, 8
      %v1034 = vpop.permute.xlu0 %1033
      %1035 = vrot.lane.b32.xlu0 %v439, 8
      %v1036 = vpop.permute.xlu0 %1035
      %1037 = vrot.lane.b32.xlu0 %v440, 8
      %v1038 = vpop.permute.xlu0 %1037
      %1039 = vrot.lane.b32.xlu0 %v441, 8
      %v1040 = vpop.permute.xlu0 %1039
      %1041 = vrot.lane.b32.xlu0 %v442, 8
      %v1042 = vpop.permute.xlu0 %1041
      %1043 = vrot.lane.b32.xlu0 %v443, 8
      %v1044 = vpop.permute.xlu0 %1043
      %1045 = vrot.lane.b32.xlu0 %v444, 8
      %v1046 = vpop.permute.xlu0 %1045
      %1047 = vrot.lane.b32.xlu0 %v445, 8
      %v1048 = vpop.permute.xlu0 %1047
      %1049 = vrot.lane.b32.xlu0 %v446, 8
      %v1050 = vpop.permute.xlu0 %1049
      %1051 = vrot.lane.b32.xlu0 %v447, 8
      %v1052 = vpop.permute.xlu0 %1051
      %1053 = vrot.lane.b32.xlu0 %v448, 8
      %v1054 = vpop.permute.xlu0 %1053
      %1055 = vrot.lane.b32.xlu0 %v449, 8
      %v1056 = vpop.permute.xlu0 %1055
      %1057 = vrot.lane.b32.xlu0 %v450, 8
      %v1058 = vpop.permute.xlu0 %1057
      %1059 = vrot.lane.b32.xlu0 %v451, 8
      %v1060 = vpop.permute.xlu0 %1059
      %1125 = vrot.lane.b32.xlu0 %v452, 10
      %v1126 = vpop.permute.xlu0 %1125
      %1127 = vrot.lane.b32.xlu0 %v453, 10
      %v1128 = vpop.permute.xlu0 %1127
      %1129 = vrot.lane.b32.xlu0 %v454, 10
      %v1130 = vpop.permute.xlu0 %1129
      %1131 = vrot.lane.b32.xlu0 %v455, 10
      %v1132 = vpop.permute.xlu0 %1131
      %1133 = vrot.lane.b32.xlu0 %v456, 10
      %v1134 = vpop.permute.xlu0 %1133
      %1135 = vrot.lane.b32.xlu0 %v457, 10
      %v1136 = vpop.permute.xlu0 %1135
      %1137 = vrot.lane.b32.xlu0 %v458, 10
      %v1138 = vpop.permute.xlu0 %1137
      %1139 = vrot.lane.b32.xlu0 %v459, 10
      %v1140 = vpop.permute.xlu0 %1139
      %1141 = vrot.lane.b32.xlu0 %v460, 10
      %v1142 = vpop.permute.xlu0 %1141
      %1143 = vrot.lane.b32.xlu0 %v461, 10
      %v1144 = vpop.permute.xlu0 %1143
      %1145 = vrot.lane.b32.xlu0 %v462, 10
      %v1146 = vpop.permute.xlu0 %1145
      %1147 = vrot.lane.b32.xlu0 %v463, 10
      %v1148 = vpop.permute.xlu0 %1147
      %1149 = vrot.lane.b32.xlu0 %v464, 10
      %v1150 = vpop.permute.xlu0 %1149
      %1151 = vrot.lane.b32.xlu0 %v465, 10
      %v1152 = vpop.permute.xlu0 %1151
      %1153 = vrot.lane.b32.xlu0 %v466, 10
      %v1154 = vpop.permute.xlu0 %1153
      %1155 = vrot.lane.b32.xlu0 %v467, 10
      %v1156 = vpop.permute.xlu0 %1155
      %1157 = vrot.lane.b32.xlu0 %v468, 10
      %v1158 = vpop.permute.xlu0 %1157
      %1159 = vrot.lane.b32.xlu0 %v469, 10
      %v1160 = vpop.permute.xlu0 %1159
      %1161 = vrot.lane.b32.xlu0 %v470, 10
      %v1162 = vpop.permute.xlu0 %1161
      %1163 = vrot.lane.b32.xlu0 %v471, 10
      %v1164 = vpop.permute.xlu0 %1163
      %1165 = vrot.lane.b32.xlu0 %v472, 10
      %v1166 = vpop.permute.xlu0 %1165
      %1167 = vrot.lane.b32.xlu0 %v473, 10
      %v1168 = vpop.permute.xlu0 %1167
      %1169 = vrot.lane.b32.xlu0 %v474, 10
      %v1170 = vpop.permute.xlu0 %1169
      %1171 = vrot.lane.b32.xlu0 %v475, 10
      %v1172 = vpop.permute.xlu0 %1171
      %1173 = vrot.lane.b32.xlu0 %v476, 10
      %v1174 = vpop.permute.xlu0 %1173
      %1175 = vrot.lane.b32.xlu0 %v477, 10
      %v1176 = vpop.permute.xlu0 %1175
      %1177 = vrot.lane.b32.xlu0 %v478, 10
      %v1178 = vpop.permute.xlu0 %1177
      %1179 = vrot.lane.b32.xlu0 %v479, 10
      %v1180 = vpop.permute.xlu0 %1179
      %1181 = vrot.lane.b32.xlu0 %v480, 10
      %v1182 = vpop.permute.xlu0 %1181
      %1183 = vrot.lane.b32.xlu0 %v481, 10
      %v1184 = vpop.permute.xlu0 %1183
      %1185 = vrot.lane.b32.xlu0 %v482, 10
      %v1186 = vpop.permute.xlu0 %1185
      %1187 = vrot.lane.b32.xlu0 %v483, 10
      %v1188 = vpop.permute.xlu0 %1187
      %1253 = vrot.lane.b32.xlu0 %v485, 12
      %v1254 = vpop.permute.xlu0 %1253
      %1255 = vrot.lane.b32.xlu0 %v486, 12
      %v1256 = vpop.permute.xlu0 %1255
      %1257 = vrot.lane.b32.xlu0 %v487, 12
      %v1258 = vpop.permute.xlu0 %1257
      %1259 = vrot.lane.b32.xlu0 %v488, 12
      %v1260 = vpop.permute.xlu0 %1259
      %1261 = vrot.lane.b32.xlu0 %v489, 12
      %v1262 = vpop.permute.xlu0 %1261
      %1263 = vrot.lane.b32.xlu0 %v490, 12
      %v1264 = vpop.permute.xlu0 %1263
      %1265 = vrot.lane.b32.xlu0 %v491, 12
      %v1266 = vpop.permute.xlu0 %1265
      %1267 = vrot.lane.b32.xlu0 %v492, 12
      %v1268 = vpop.permute.xlu0 %1267
      %1269 = vrot.lane.b32.xlu0 %v493, 12
      %v1270 = vpop.permute.xlu0 %1269
      %1271 = vrot.lane.b32.xlu0 %v494, 12
      %v1272 = vpop.permute.xlu0 %1271
      %1273 = vrot.lane.b32.xlu0 %v495, 12
      %v1274 = vpop.permute.xlu0 %1273
      %1275 = vrot.lane.b32.xlu0 %v496, 12
      %v1276 = vpop.permute.xlu0 %1275
      %1277 = vrot.lane.b32.xlu0 %v497, 12
      %v1278 = vpop.permute.xlu0 %1277
      %1279 = vrot.lane.b32.xlu0 %v498, 12
      %v1280 = vpop.permute.xlu0 %1279
      %1281 = vrot.lane.b32.xlu0 %v499, 12
      %v1282 = vpop.permute.xlu0 %1281
      %1283 = vrot.lane.b32.xlu0 %v500, 12
      %v1284 = vpop.permute.xlu0 %1283
      %1285 = vrot.lane.b32.xlu0 %v501, 12
      %v1286 = vpop.permute.xlu0 %1285
      %1287 = vrot.lane.b32.xlu0 %v502, 12
      %v1288 = vpop.permute.xlu0 %1287
      %1289 = vrot.lane.b32.xlu0 %v503, 12
      %v1290 = vpop.permute.xlu0 %1289
      %1291 = vrot.lane.b32.xlu0 %v504, 12
      %v1292 = vpop.permute.xlu0 %1291
      %1293 = vrot.lane.b32.xlu0 %v505, 12
      %v1294 = vpop.permute.xlu0 %1293
      %1295 = vrot.lane.b32.xlu0 %v506, 12
      %v1296 = vpop.permute.xlu0 %1295
      %1297 = vrot.lane.b32.xlu0 %v507, 12
      %v1298 = vpop.permute.xlu0 %1297
      %1299 = vrot.lane.b32.xlu0 %v508, 12
      %v1300 = vpop.permute.xlu0 %1299
      %1301 = vrot.lane.b32.xlu0 %v509, 12
      %v1302 = vpop.permute.xlu0 %1301
      %1303 = vrot.lane.b32.xlu0 %v510, 12
      %v1304 = vpop.permute.xlu0 %1303
      %1305 = vrot.lane.b32.xlu0 %v511, 12
      %v1306 = vpop.permute.xlu0 %1305
      %1307 = vrot.lane.b32.xlu0 %v512, 12
      %v1308 = vpop.permute.xlu0 %1307
      %1309 = vrot.lane.b32.xlu0 %v513, 12
      %v1310 = vpop.permute.xlu0 %1309
      %1311 = vrot.lane.b32.xlu0 %v514, 12
      %v1312 = vpop.permute.xlu0 %1311
      %1313 = vrot.lane.b32.xlu0 %v515, 12
      %v1314 = vpop.permute.xlu0 %1313
      %1315 = vrot.lane.b32.xlu0 %v516, 12
      %v1316 = vpop.permute.xlu0 %1315
      %1381 = vrot.lane.b32.xlu0 %v517, 14
      %v1382 = vpop.permute.xlu0 %1381
      %1383 = vrot.lane.b32.xlu0 %v518, 14
      %v1384 = vpop.permute.xlu0 %1383
      %1385 = vrot.lane.b32.xlu0 %v519, 14
      %v1386 = vpop.permute.xlu0 %1385
      %1387 = vrot.lane.b32.xlu0 %v520, 14
      %v1388 = vpop.permute.xlu0 %1387
      %1389 = vrot.lane.b32.xlu0 %v521, 14
      %v1390 = vpop.permute.xlu0 %1389
      %1391 = vrot.lane.b32.xlu0 %v522, 14
      %v1392 = vpop.permute.xlu0 %1391
      %1393 = vrot.lane.b32.xlu0 %v523, 14
      %v1394 = vpop.permute.xlu0 %1393
      %1395 = vrot.lane.b32.xlu0 %v524, 14
      %v1396 = vpop.permute.xlu0 %1395
      %1397 = vrot.lane.b32.xlu0 %v525, 14
      %v1398 = vpop.permute.xlu0 %1397
      %1399 = vrot.lane.b32.xlu0 %v526, 14
      %v1400 = vpop.permute.xlu0 %1399
      %1401 = vrot.lane.b32.xlu0 %v527, 14
      %v1402 = vpop.permute.xlu0 %1401
      %1403 = vrot.lane.b32.xlu0 %v528, 14
      %v1404 = vpop.permute.xlu0 %1403
      %1405 = vrot.lane.b32.xlu0 %v529, 14
      %v1406 = vpop.permute.xlu0 %1405
      %1407 = vrot.lane.b32.xlu0 %v530, 14
      %v1408 = vpop.permute.xlu0 %1407
      %1409 = vrot.lane.b32.xlu0 %v531, 14
      %v1410 = vpop.permute.xlu0 %1409
      %1411 = vrot.lane.b32.xlu0 %v532, 14
      %v1412 = vpop.permute.xlu0 %1411
      %1413 = vrot.lane.b32.xlu0 %v533, 14
      %v1414 = vpop.permute.xlu0 %1413
      %1415 = vrot.lane.b32.xlu0 %v534, 14
      %v1416 = vpop.permute.xlu0 %1415
      %1417 = vrot.lane.b32.xlu0 %v535, 14
      %v1418 = vpop.permute.xlu0 %1417
      %1419 = vrot.lane.b32.xlu0 %v536, 14
      %v1420 = vpop.permute.xlu0 %1419
      %1421 = vrot.lane.b32.xlu0 %v537, 14
      %v1422 = vpop.permute.xlu0 %1421
      %1423 = vrot.lane.b32.xlu0 %v538, 14
      %v1424 = vpop.permute.xlu0 %1423
      %1425 = vrot.lane.b32.xlu0 %v539, 14
      %v1426 = vpop.permute.xlu0 %1425
      %1427 = vrot.lane.b32.xlu0 %v540, 14
      %v1428 = vpop.permute.xlu0 %1427
      %1429 = vrot.lane.b32.xlu0 %v541, 14
      %v1430 = vpop.permute.xlu0 %1429
      %1431 = vrot.lane.b32.xlu0 %v542, 14
      %v1432 = vpop.permute.xlu0 %1431
      %1433 = vrot.lane.b32.xlu0 %v543, 14
      %v1434 = vpop.permute.xlu0 %1433
      %1435 = vrot.lane.b32.xlu0 %v544, 14
      %v1436 = vpop.permute.xlu0 %1435
      %1437 = vrot.lane.b32.xlu0 %v545, 14
      %v1438 = vpop.permute.xlu0 %1437
      %1439 = vrot.lane.b32.xlu0 %v546, 14
      %v1440 = vpop.permute.xlu0 %1439
      %1441 = vrot.lane.b32.xlu0 %v547, 14
      %v1442 = vpop.permute.xlu0 %1441
      %1443 = vrot.lane.b32.xlu0 %v548, 14
      %v1444 = vpop.permute.xlu0 %1443
      %1509 = vrot.lane.b32.xlu0 %v549, 16
      %v1510 = vpop.permute.xlu0 %1509
      %1511 = vrot.lane.b32.xlu0 %v550, 16
      %v1512 = vpop.permute.xlu0 %1511
      %1513 = vrot.lane.b32.xlu0 %v551, 16
      %v1514 = vpop.permute.xlu0 %1513
      %1515 = vrot.lane.b32.xlu0 %v552, 16
      %v1516 = vpop.permute.xlu0 %1515
      %1517 = vrot.lane.b32.xlu0 %v553, 16
      %v1518 = vpop.permute.xlu0 %1517
      %1519 = vrot.lane.b32.xlu0 %v554, 16
      %v1520 = vpop.permute.xlu0 %1519
      %1521 = vrot.lane.b32.xlu0 %v555, 16
      %v1522 = vpop.permute.xlu0 %1521
      %1523 = vrot.lane.b32.xlu0 %v556, 16
      %v1524 = vpop.permute.xlu0 %1523
      %1525 = vrot.lane.b32.xlu0 %v557, 16
      %v1526 = vpop.permute.xlu0 %1525
      %1527 = vrot.lane.b32.xlu0 %v558, 16
      %v1528 = vpop.permute.xlu0 %1527
      %1529 = vrot.lane.b32.xlu0 %v559, 16
      %v1530 = vpop.permute.xlu0 %1529
      %1531 = vrot.lane.b32.xlu0 %v560, 16
      %v1532 = vpop.permute.xlu0 %1531
      %1533 = vrot.lane.b32.xlu0 %v561, 16
      %v1534 = vpop.permute.xlu0 %1533
      %1535 = vrot.lane.b32.xlu0 %v562, 16
      %v1536 = vpop.permute.xlu0 %1535
      %1537 = vrot.lane.b32.xlu0 %v563, 16
      %v1538 = vpop.permute.xlu0 %1537
      %1539 = vrot.lane.b32.xlu0 %v564, 16
      %v1540 = vpop.permute.xlu0 %1539
      %1541 = vrot.lane.b32.xlu0 %v565, 16
      %v1542 = vpop.permute.xlu0 %1541
      %1543 = vrot.lane.b32.xlu0 %v566, 16
      %v1544 = vpop.permute.xlu0 %1543
      %1545 = vrot.lane.b32.xlu0 %v567, 16
      %v1546 = vpop.permute.xlu0 %1545
      %1547 = vrot.lane.b32.xlu0 %v568, 16
      %v1548 = vpop.permute.xlu0 %1547
      %1549 = vrot.lane.b32.xlu0 %v569, 16
      %v1550 = vpop.permute.xlu0 %1549
      %1551 = vrot.lane.b32.xlu0 %v570, 16
      %v1552 = vpop.permute.xlu0 %1551
      %1553 = vrot.lane.b32.xlu0 %v571, 16
      %v1554 = vpop.permute.xlu0 %1553
      %1555 = vrot.lane.b32.xlu0 %v572, 16
      %v1556 = vpop.permute.xlu0 %1555
      %1557 = vrot.lane.b32.xlu0 %v573, 16
      %v1558 = vpop.permute.xlu0 %1557
      %1559 = vrot.lane.b32.xlu0 %v574, 16
      %v1560 = vpop.permute.xlu0 %1559
      %1561 = vrot.lane.b32.xlu0 %v575, 16
      %v1562 = vpop.permute.xlu0 %1561
      %1563 = vrot.lane.b32.xlu0 %v576, 16
      %v1564 = vpop.permute.xlu0 %1563
      %1565 = vrot.lane.b32.xlu0 %v577, 16
      %v1566 = vpop.permute.xlu0 %1565
      %1567 = vrot.lane.b32.xlu0 %v578, 16
      %v1568 = vpop.permute.xlu0 %1567
      %1569 = vrot.lane.b32.xlu0 %v579, 16
      %v1570 = vpop.permute.xlu0 %1569
      %1571 = vrot.lane.b32.xlu0 %v580, 16
      %v1572 = vpop.permute.xlu0 %1571
      %v1605 = vsel %vm171, %v292, %v614
      %v1606 = vsel %vm171, %v293, %v616
      %v1607 = vsel %vm171, %v294, %v618
      %v1608 = vsel %vm171, %v295, %v620
      %v1609 = vsel %vm171, %v296, %v622
      %v1610 = vsel %vm171, %v297, %v624
      %v1611 = vsel %vm171, %v298, %v626
      %v1612 = vsel %vm171, %v299, %v628
      %v1613 = vsel %vm171, %v300, %v630
      %v1614 = vsel %vm171, %v301, %v632
      %v1615 = vsel %vm171, %v302, %v634
      %v1616 = vsel %vm171, %v303, %v636
      %v1617 = vsel %vm171, %v304, %v638
      %v1618 = vsel %vm171, %v305, %v640
      %v1619 = vsel %vm171, %v306, %v642
      %v1620 = vsel %vm171, %v307, %v644
      %v1621 = vsel %vm171, %v308, %v646
      %v1622 = vsel %vm171, %v309, %v648
      %v1623 = vsel %vm171, %v310, %v650
      %v1624 = vsel %vm171, %v311, %v652
      %v1625 = vsel %vm171, %v312, %v654
      %v1626 = vsel %vm171, %v313, %v656
      %v1627 = vsel %vm171, %v314, %v658
      %v1628 = vsel %vm171, %v315, %v660
      %v1629 = vsel %vm171, %v316, %v662
      %v1630 = vsel %vm171, %v317, %v664
      %v1631 = vsel %vm171, %v318, %v666
      %v1632 = vsel %vm171, %v319, %v668
      %v1633 = vsel %vm171, %v320, %v670
      %v1634 = vsel %vm171, %v321, %v672
      %v1635 = vsel %vm171, %v322, %v674
      %v1636 = vsel %vm171, %v323, %v676
      %vm1637 = vcmask 31744
      %v1638 = vsel %vm1637, %v1605, %v742
      %v1639 = vsel %vm1637, %v1606, %v744
      %v1640 = vsel %vm1637, %v1607, %v746
      %v1641 = vsel %vm1637, %v1608, %v748
      %v1642 = vsel %vm1637, %v1609, %v750
      %v1643 = vsel %vm1637, %v1610, %v752
      %v1644 = vsel %vm1637, %v1611, %v754
      %v1645 = vsel %vm1637, %v1612, %v756
      %v1646 = vsel %vm1637, %v1613, %v758
      %v1647 = vsel %vm1637, %v1614, %v760
      %v1648 = vsel %vm1637, %v1615, %v762
      %v1649 = vsel %vm1637, %v1616, %v764
      %v1650 = vsel %vm1637, %v1617, %v766
      %v1651 = vsel %vm1637, %v1618, %v768
      %v1652 = vsel %vm1637, %v1619, %v770
      %v1653 = vsel %vm1637, %v1620, %v772
      %v1654 = vsel %vm1637, %v1621, %v774
      %v1655 = vsel %vm1637, %v1622, %v776
      %v1656 = vsel %vm1637, %v1623, %v778
      %v1657 = vsel %vm1637, %v1624, %v780
      %v1658 = vsel %vm1637, %v1625, %v782
      %v1659 = vsel %vm1637, %v1626, %v784
      %v1660 = vsel %vm1637, %v1627, %v786
      %v1661 = vsel %vm1637, %v1628, %v788
      %v1662 = vsel %vm1637, %v1629, %v790
      %v1663 = vsel %vm1637, %v1630, %v792
      %v1664 = vsel %vm1637, %v1631, %v794
      %v1665 = vsel %vm1637, %v1632, %v796
      %v1666 = vsel %vm1637, %v1633, %v798
      %v1667 = vsel %vm1637, %v1634, %v800
      %v1668 = vsel %vm1637, %v1635, %v802
      %v1669 = vsel %vm1637, %v1636, %v804
      %vm1670 = vcmask 48128
      %v1671 = vsel %vm1670, %v1638, %v870
      %v1672 = vsel %vm1670, %v1639, %v872
      %v1673 = vsel %vm1670, %v1640, %v874
      %v1674 = vsel %vm1670, %v1641, %v876
      %v1675 = vsel %vm1670, %v1642, %v878
      %v1676 = vsel %vm1670, %v1643, %v880
      %v1677 = vsel %vm1670, %v1644, %v882
      %v1678 = vsel %vm1670, %v1645, %v884
      %v1679 = vsel %vm1670, %v1646, %v886
      %v1680 = vsel %vm1670, %v1647, %v888
      %v1681 = vsel %vm1670, %v1648, %v890
      %v1682 = vsel %vm1670, %v1649, %v892
      %v1683 = vsel %vm1670, %v1650, %v894
      %v1684 = vsel %vm1670, %v1651, %v896
      %v1685 = vsel %vm1670, %v1652, %v898
      %v1686 = vsel %vm1670, %v1653, %v900
      %v1687 = vsel %vm1670, %v1654, %v902
      %v1688 = vsel %vm1670, %v1655, %v904
      %v1689 = vsel %vm1670, %v1656, %v906
      %v1690 = vsel %vm1670, %v1657, %v908
      %v1691 = vsel %vm1670, %v1658, %v910
      %v1692 = vsel %vm1670, %v1659, %v912
      %v1693 = vsel %vm1670, %v1660, %v914
      %v1694 = vsel %vm1670, %v1661, %v916
      %v1695 = vsel %vm1670, %v1662, %v918
      %v1696 = vsel %vm1670, %v1663, %v920
      %v1697 = vsel %vm1670, %v1664, %v922
      %v1698 = vsel %vm1670, %v1665, %v924
      %v1699 = vsel %vm1670, %v1666, %v926
      %v1700 = vsel %vm1670, %v1667, %v928
      %v1701 = vsel %vm1670, %v1668, %v930
      %v1702 = vsel %vm1670, %v1669, %v932
      %vm1703 = vcmask 64512
      %v1704 = vsel %vm1703, %v1671, %v998
      %v1705 = vsel %vm1703, %v1672, %v1000
      %v1706 = vsel %vm1703, %v1673, %v1002
      %v1707 = vsel %vm1703, %v1674, %v1004
      %v1708 = vsel %vm1703, %v1675, %v1006
      %v1709 = vsel %vm1703, %v1676, %v1008
      %v1710 = vsel %vm1703, %v1677, %v1010
      %v1711 = vsel %vm1703, %v1678, %v1012
      %v1712 = vsel %vm1703, %v1679, %v1014
      %v1713 = vsel %vm1703, %v1680, %v1016
      %v1714 = vsel %vm1703, %v1681, %v1018
      %v1715 = vsel %vm1703, %v1682, %v1020
      %v1716 = vsel %vm1703, %v1683, %v1022
      %v1717 = vsel %vm1703, %v1684, %v1024
      %v1718 = vsel %vm1703, %v1685, %v1026
      %v1719 = vsel %vm1703, %v1686, %v1028
      %v1720 = vsel %vm1703, %v1687, %v1030
      %v1721 = vsel %vm1703, %v1688, %v1032
      %v1722 = vsel %vm1703, %v1689, %v1034
      %v1723 = vsel %vm1703, %v1690, %v1036
      %v1724 = vsel %vm1703, %v1691, %v1038
      %v1725 = vsel %vm1703, %v1692, %v1040
      %v1726 = vsel %vm1703, %v1693, %v1042
      %v1727 = vsel %vm1703, %v1694, %v1044
      %v1728 = vsel %vm1703, %v1695, %v1046
      %v1729 = vsel %vm1703, %v1696, %v1048
      %v1730 = vsel %vm1703, %v1697, %v1050
      %v1731 = vsel %vm1703, %v1698, %v1052
      %v1732 = vsel %vm1703, %v1699, %v1054
      %v1733 = vsel %vm1703, %v1700, %v1056
      %v1734 = vsel %vm1703, %v1701, %v1058
      %v1735 = vsel %vm1703, %v1702, %v1060
      %vm1736 = vcmask 80896
      %v1737 = vsel %vm1736, %v1704, %v1126
      %v1738 = vsel %vm1736, %v1705, %v1128
      %v1739 = vsel %vm1736, %v1706, %v1130
      %v1740 = vsel %vm1736, %v1707, %v1132
      %v1741 = vsel %vm1736, %v1708, %v1134
      %v1742 = vsel %vm1736, %v1709, %v1136
      %v1743 = vsel %vm1736, %v1710, %v1138
      %v1744 = vsel %vm1736, %v1711, %v1140
      %v1745 = vsel %vm1736, %v1712, %v1142
      %v1746 = vsel %vm1736, %v1713, %v1144
      %v1747 = vsel %vm1736, %v1714, %v1146
      %v1748 = vsel %vm1736, %v1715, %v1148
      %v1749 = vsel %vm1736, %v1716, %v1150
      %v1750 = vsel %vm1736, %v1717, %v1152
      %v1751 = vsel %vm1736, %v1718, %v1154
      %v1752 = vsel %vm1736, %v1719, %v1156
      %v1753 = vsel %vm1736, %v1720, %v1158
      %v1754 = vsel %vm1736, %v1721, %v1160
      %v1755 = vsel %vm1736, %v1722, %v1162
      %v1756 = vsel %vm1736, %v1723, %v1164
      %v1757 = vsel %vm1736, %v1724, %v1166
      %v1758 = vsel %vm1736, %v1725, %v1168
      %v1759 = vsel %vm1736, %v1726, %v1170
      %v1760 = vsel %vm1736, %v1727, %v1172
      %v1761 = vsel %vm1736, %v1728, %v1174
      %v1762 = vsel %vm1736, %v1729, %v1176
      %v1763 = vsel %vm1736, %v1730, %v1178
      %v1764 = vsel %vm1736, %v1731, %v1180
      %v1765 = vsel %vm1736, %v1732, %v1182
      %v1766 = vsel %vm1736, %v1733, %v1184
      %v1767 = vsel %vm1736, %v1734, %v1186
      %v1768 = vsel %vm1736, %v1735, %v1188
      %vm1769 = vcmask 97280
      %v1770 = vsel %vm1769, %v1737, %v1254
      %v1771 = vsel %vm1769, %v1738, %v1256
      %v1772 = vsel %vm1769, %v1739, %v1258
      %v1773 = vsel %vm1769, %v1740, %v1260
      %v1774 = vsel %vm1769, %v1741, %v1262
      %v1775 = vsel %vm1769, %v1742, %v1264
      %v1776 = vsel %vm1769, %v1743, %v1266
      %v1777 = vsel %vm1769, %v1744, %v1268
      %v1778 = vsel %vm1769, %v1745, %v1270
      %v1779 = vsel %vm1769, %v1746, %v1272
      %v1780 = vsel %vm1769, %v1747, %v1274
      %v1781 = vsel %vm1769, %v1748, %v1276
      %v1782 = vsel %vm1769, %v1749, %v1278
      %v1783 = vsel %vm1769, %v1750, %v1280
      %v1784 = vsel %vm1769, %v1751, %v1282
      %v1785 = vsel %vm1769, %v1752, %v1284
      %v1786 = vsel %vm1769, %v1753, %v1286
      %v1787 = vsel %vm1769, %v1754, %v1288
      %v1788 = vsel %vm1769, %v1755, %v1290
      %v1789 = vsel %vm1769, %v1756, %v1292
      %v1790 = vsel %vm1769, %v1757, %v1294
      %v1791 = vsel %vm1769, %v1758, %v1296
      %v1792 = vsel %vm1769, %v1759, %v1298
      %v1793 = vsel %vm1769, %v1760, %v1300
      %v1794 = vsel %vm1769, %v1761, %v1302
      %v1795 = vsel %vm1769, %v1762, %v1304
      %v1796 = vsel %vm1769, %v1763, %v1306
      %v1797 = vsel %vm1769, %v1764, %v1308
      %v1798 = vsel %vm1769, %v1765, %v1310
      %v1799 = vsel %vm1769, %v1766, %v1312
      %v1800 = vsel %vm1769, %v1767, %v1314
      %v1801 = vsel %vm1769, %v1768, %v1316
      %vm1802 = vcmask 113664
      %v1803 = vsel %vm1802, %v1770, %v1382
      %v1804 = vsel %vm1802, %v1771, %v1384
      %v1805 = vsel %vm1802, %v1772, %v1386
      %v1806 = vsel %vm1802, %v1773, %v1388
      %v1807 = vsel %vm1802, %v1774, %v1390
      %v1808 = vsel %vm1802, %v1775, %v1392
      %v1809 = vsel %vm1802, %v1776, %v1394
      %v1810 = vsel %vm1802, %v1777, %v1396
      %v1811 = vsel %vm1802, %v1778, %v1398
      %v1812 = vsel %vm1802, %v1779, %v1400
      %v1813 = vsel %vm1802, %v1780, %v1402
      %v1814 = vsel %vm1802, %v1781, %v1404
      %v1815 = vsel %vm1802, %v1782, %v1406
      %v1816 = vsel %vm1802, %v1783, %v1408
      %v1817 = vsel %vm1802, %v1784, %v1410
      %v1818 = vsel %vm1802, %v1785, %v1412
      %v1819 = vsel %vm1802, %v1786, %v1414
      %v1820 = vsel %vm1802, %v1787, %v1416
      %v1821 = vsel %vm1802, %v1788, %v1418
      %v1822 = vsel %vm1802, %v1789, %v1420
      %v1823 = vsel %vm1802, %v1790, %v1422
      %v1824 = vsel %vm1802, %v1791, %v1424
      %v1825 = vsel %vm1802, %v1792, %v1426
      %v1826 = vsel %vm1802, %v1793, %v1428
      %v1827 = vsel %vm1802, %v1794, %v1430
      %v1828 = vsel %vm1802, %v1795, %v1432
      %v1829 = vsel %vm1802, %v1796, %v1434
      %v1830 = vsel %vm1802, %v1797, %v1436
      %v1831 = vsel %vm1802, %v1798, %v1438
      %v1832 = vsel %vm1802, %v1799, %v1440
      %v1833 = vsel %vm1802, %v1800, %v1442
      %v1834 = vsel %vm1802, %v1801, %v1444
      %vm1835 = vcmask 130048
      %v1836 = vsel %vm1835, %v1803, %v1510
      %v1837 = vsel %vm1835, %v1804, %v1512
      %v1838 = vsel %vm1835, %v1805, %v1514
      %v1839 = vsel %vm1835, %v1806, %v1516
      %v1840 = vsel %vm1835, %v1807, %v1518
      %v1841 = vsel %vm1835, %v1808, %v1520
      %v1842 = vsel %vm1835, %v1809, %v1522
      %v1843 = vsel %vm1835, %v1810, %v1524
      %v1844 = vsel %vm1835, %v1811, %v1526
      %v1845 = vsel %vm1835, %v1812, %v1528
      %v1846 = vsel %vm1835, %v1813, %v1530
      %v1847 = vsel %vm1835, %v1814, %v1532
      %v1848 = vsel %vm1835, %v1815, %v1534
      %v1849 = vsel %vm1835, %v1816, %v1536
      %v1850 = vsel %vm1835, %v1817, %v1538
      %v1851 = vsel %vm1835, %v1818, %v1540
      %v1852 = vsel %vm1835, %v1819, %v1542
      %v1853 = vsel %vm1835, %v1820, %v1544
      %v1854 = vsel %vm1835, %v1821, %v1546
      %v1855 = vsel %vm1835, %v1822, %v1548
      %v1856 = vsel %vm1835, %v1823, %v1550
      %v1857 = vsel %vm1835, %v1824, %v1552
      %v1858 = vsel %vm1835, %v1825, %v1554
      %v1859 = vsel %vm1835, %v1826, %v1556
      %v1860 = vsel %vm1835, %v1827, %v1558
      %v1861 = vsel %vm1835, %v1828, %v1560
      %v1862 = vsel %vm1835, %v1829, %v1562
      %v1863 = vsel %vm1835, %v1830, %v1564
      %v1864 = vsel %vm1835, %v1831, %v1566
      %v1865 = vsel %vm1835, %v1832, %v1568
      %v1866 = vsel %vm1835, %v1833, %v1570
      %v1867 = vsel %vm1835, %v1834, %v1572
      %v1868 = vld [vmem:[%s1] sm:$0xff]
      %v1869 = vld [vmem:[%s1 + $0x8] sm:$0xff]
      %v1870 = vld [vmem:[%s1 + $0x10] sm:$0x3]
      %vm1871 = vcmask 146432
      %v1873 = vsel %vm1871, %v1836, 0
      %v1876 = vsel %vm1871, %v1837, 0
      %v1879 = vsel %vm1871, %v1838, 0
      %v1882 = vsel %vm1871, %v1839, 0
      %v1885 = vsel %vm1871, %v1840, 0
      %v1888 = vsel %vm1871, %v1841, 0
      %v1891 = vsel %vm1871, %v1842, 0
      %v1894 = vsel %vm1871, %v1843, 0
      %v1897 = vsel %vm1871, %v1844, 0
      %v1900 = vsel %vm1871, %v1845, 0
      %v1903 = vsel %vm1871, %v1846, 0
      %v1906 = vsel %vm1871, %v1847, 0
      %v1909 = vsel %vm1871, %v1848, 0
      %v1912 = vsel %vm1871, %v1849, 0
      %v1915 = vsel %vm1871, %v1850, 0
      %v1918 = vsel %vm1871, %v1851, 0
      %v1921 = vsel %vm1871, %v1852, 0
      %v1924 = vsel %vm1871, %v1853, 0
      %v1927 = vsel %vm1871, %v1854, 0
      %v1930 = vsel %vm1871, %v1855, 0
      %v1933 = vsel %vm1871, %v1856, 0
      %v1936 = vsel %vm1871, %v1857, 0
      %v1939 = vsel %vm1871, %v1858, 0
      %v1942 = vsel %vm1871, %v1859, 0
      %v1945 = vsel %vm1871, %v1860, 0
      %v1948 = vsel %vm1871, %v1861, 0
      %v1951 = vsel %vm1871, %v1862, 0
      %v1954 = vsel %vm1871, %v1863, 0
      %v1957 = vsel %vm1871, %v1864, 0
      %v1960 = vsel %vm1871, %v1865, 0
      %v1963 = vsel %vm1871, %v1866, 0
      %v1966 = vsel %vm1871, %v1867, 0
      %vm1968 = vcmask 1041408
      %v1970 = vsel %vm1968, %v1870, 0
      %1972 = vmatprep.subr.mxu0 0.0
      %1973 = vmatpush1.msra.mxu0 0.0
      %1974 = vmatprep.subr.mxu0 0.0
      %1975 = vmatpush1.msra.mxu0 0.0
      %1976 = vmatprep.subr.mxu0 0.0
      %1977 = vmatpush1.msra.mxu0 0.0
      %1978 = vmatprep.subr.mxu0 0.0
      %1979 = vmatpush1.msra.mxu0 0.0
      %1980 = vmatprep.subr.mxu0 0.0
      %1981 = vmatpush1.msra.mxu0 0.0
      %1982 = vmatprep.subr.mxu0 0.0
      %1983 = vmatpush1.msra.mxu0 0.0
      %1984 = vmatprep.subr.mxu0 0.0
      %1985 = vmatpush1.msra.mxu0 0.0
      %1986 = vmatprep.subr.mxu0 0.0
      %1987 = vmatpush1.msra.mxu0 0.0
      %1988 = vmatprep.subr.mxu0 0.0
      %1989 = vmatpush1.msra.mxu0 0.0
      %1990 = vmatprep.subr.mxu0 0.0
      %1991 = vmatpush1.msra.mxu0 0.0
      %1992 = vmatprep.subr.mxu0 0.0
      %1993 = vmatpush1.msra.mxu0 0.0
      %1994 = vmatprep.subr.mxu0 0.0
      %1995 = vmatpush1.msra.mxu0 0.0
      %1996 = vmatprep.subr.mxu0 0.0
      %1997 = vmatpush1.msra.mxu0 0.0
      %1998 = vmatprep.subr.mxu0 0.0
      %1999 = vmatpush1.msra.mxu0 %v1970
      %2000 = vmatprep.subr.mxu0 0.0
      %2001 = vmatpush1.msra.mxu0 %v1869
      %2002 = vmatprep.subr.mxu0 0.0
      %2003 = vmatpush1.msra.mxu0 %v1868
      %2004 = vmatprep.subr.mxu0 0.0
      %2005 = vmatpush2.msra.mxu0 0.0
      %2006 = vmatprep.subr.mxu0 0.0
      %2007 = vmatpush2.msra.mxu0 0.0
      %2008 = vmatprep.subr.mxu0 0.0
      %2009 = vmatpush2.msra.mxu0 0.0
      %2010 = vmatprep.subr.mxu0 0.0
      %2011 = vmatpush2.msra.mxu0 0.0
      %2012 = vmatprep.subr.mxu0 0.0
      %2013 = vmatpush2.msra.mxu0 0.0
      %2014 = vmatprep.subr.mxu0 0.0
      %2015 = vmatpush2.msra.mxu0 0.0
      %2016 = vmatprep.subr.mxu0 0.0
      %2017 = vmatpush2.msra.mxu0 0.0
      %2018 = vmatprep.subr.mxu0 0.0
      %2019 = vmatpush2.msra.mxu0 0.0
      %2020 = vmatprep.subr.mxu0 0.0
      %2021 = vmatpush2.msra.mxu0 0.0
      %2022 = vmatprep.subr.mxu0 0.0
      %2023 = vmatpush2.msra.mxu0 0.0
      %2024 = vmatprep.subr.mxu0 0.0
      %2025 = vmatpush2.msra.mxu0 0.0
      %2026 = vmatprep.subr.mxu0 0.0
      %2027 = vmatpush2.msra.mxu0 0.0
      %2028 = vmatprep.subr.mxu0 0.0
      %2029 = vmatpush2.msra.mxu0 0.0
      %2030 = vmatprep.subr.mxu0 0.0
      %2031 = vmatpush2.msra.mxu0 0.0
      %2032 = vmatprep.subr.mxu0 0.0
      %2033 = vmatpush2.msra.mxu0 0.0
      %2034 = vmatprep.subr.mxu0 0.0
      %2035 = vmatpush2.msra.mxu0 0.0
      %2036 = vmatprep.mubr.f32.mxu0 0.0
      %2037 = vmatmul.mubr.f32.gmra.mxu0 %v1873
      %v2038 = vpop.f32.mrf.mxu0
      %v2039 = vadd.f32 0.0, %v2038
      %v2040 = vpop.f32.mrf.mxu0
      %2041 = vmatprep.mubr.f32.mxu0 0.0
      %2042 = vmatmul.mubr.f32.gmra.mxu0 %v1876
      %v2043 = vpop.f32.mrf.mxu0
      %v2044 = vadd.f32 0.0, %v2043
      %v2045 = vpop.f32.mrf.mxu0
      %2046 = vmatprep.mubr.f32.mxu0 0.0
      %2047 = vmatmul.mubr.f32.gmra.mxu0 %v1879
      %v2048 = vpop.f32.mrf.mxu0
      %v2049 = vadd.f32 0.0, %v2048
      %v2050 = vpop.f32.mrf.mxu0
      %2051 = vmatprep.mubr.f32.mxu0 0.0
      %2052 = vmatmul.mubr.f32.gmra.mxu0 %v1882
      %v2053 = vpop.f32.mrf.mxu0
      %v2054 = vadd.f32 0.0, %v2053
      %v2055 = vpop.f32.mrf.mxu0
      %2056 = vmatprep.mubr.f32.mxu0 0.0
      %2057 = vmatmul.mubr.f32.gmra.mxu0 %v1885
      %v2058 = vpop.f32.mrf.mxu0
      %v2059 = vadd.f32 0.0, %v2058
      %v2060 = vpop.f32.mrf.mxu0
      %2061 = vmatprep.mubr.f32.mxu0 0.0
      %2062 = vmatmul.mubr.f32.gmra.mxu0 %v1888
      %v2063 = vpop.f32.mrf.mxu0
      %v2064 = vadd.f32 0.0, %v2063
      %v2065 = vpop.f32.mrf.mxu0
      %2066 = vmatprep.mubr.f32.mxu0 0.0
      %2067 = vmatmul.mubr.f32.gmra.mxu0 %v1891
      %v2068 = vpop.f32.mrf.mxu0
      %v2069 = vadd.f32 0.0, %v2068
      %v2070 = vpop.f32.mrf.mxu0
      %2071 = vmatprep.mubr.f32.mxu0 0.0
      %2072 = vmatmul.mubr.f32.gmra.mxu0 %v1894
      %v2073 = vpop.f32.mrf.mxu0
      %v2074 = vadd.f32 0.0, %v2073
      %v2075 = vpop.f32.mrf.mxu0
      %2076 = vmatprep.mubr.f32.mxu0 0.0
      %2077 = vmatmul.mubr.f32.gmra.mxu0 %v1897
      %v2078 = vpop.f32.mrf.mxu0
      %v2079 = vadd.f32 0.0, %v2078
      %v2080 = vpop.f32.mrf.mxu0
      %2081 = vmatprep.mubr.f32.mxu0 0.0
      %2082 = vmatmul.mubr.f32.gmra.mxu0 %v1900
      %v2083 = vpop.f32.mrf.mxu0
      %v2084 = vadd.f32 0.0, %v2083
      %v2085 = vpop.f32.mrf.mxu0
      %2086 = vmatprep.mubr.f32.mxu0 0.0
      %2087 = vmatmul.mubr.f32.gmra.mxu0 %v1903
      %v2088 = vpop.f32.mrf.mxu0
      %v2089 = vadd.f32 0.0, %v2088
      %v2090 = vpop.f32.mrf.mxu0
      %2091 = vmatprep.mubr.f32.mxu0 0.0
      %2092 = vmatmul.mubr.f32.gmra.mxu0 %v1906
      %v2093 = vpop.f32.mrf.mxu0
      %v2094 = vadd.f32 0.0, %v2093
      %v2095 = vpop.f32.mrf.mxu0
      %2096 = vmatprep.mubr.f32.mxu0 0.0
      %2097 = vmatmul.mubr.f32.gmra.mxu0 %v1909
      %v2098 = vpop.f32.mrf.mxu0
      %v2099 = vadd.f32 0.0, %v2098
      %v2100 = vpop.f32.mrf.mxu0
      %2101 = vmatprep.mubr.f32.mxu0 0.0
      %2102 = vmatmul.mubr.f32.gmra.mxu0 %v1912
      %v2103 = vpop.f32.mrf.mxu0
      %v2104 = vadd.f32 0.0, %v2103
      %v2105 = vpop.f32.mrf.mxu0
      %2106 = vmatprep.mubr.f32.mxu0 0.0
      %2107 = vmatmul.mubr.f32.gmra.mxu0 %v1915
      %v2108 = vpop.f32.mrf.mxu0
      %v2109 = vadd.f32 0.0, %v2108
      %v2110 = vpop.f32.mrf.mxu0
      %2111 = vmatprep.mubr.f32.mxu0 0.0
      %2112 = vmatmul.mubr.f32.gmra.mxu0 %v1918
      %v2113 = vpop.f32.mrf.mxu0
      %v2114 = vadd.f32 0.0, %v2113
      %v2115 = vpop.f32.mrf.mxu0
      %2116 = vmatprep.mubr.f32.mxu0 0.0
      %2117 = vmatmul.mubr.f32.gmra.mxu0 %v1921
      %v2118 = vpop.f32.mrf.mxu0
      %v2119 = vadd.f32 0.0, %v2118
      %v2120 = vpop.f32.mrf.mxu0
      %2121 = vmatprep.mubr.f32.mxu0 0.0
      %2122 = vmatmul.mubr.f32.gmra.mxu0 %v1924
      %v2123 = vpop.f32.mrf.mxu0
      %v2124 = vadd.f32 0.0, %v2123
      %v2125 = vpop.f32.mrf.mxu0
      %2126 = vmatprep.mubr.f32.mxu0 0.0
      %2127 = vmatmul.mubr.f32.gmra.mxu0 %v1927
      %v2128 = vpop.f32.mrf.mxu0
      %v2129 = vadd.f32 0.0, %v2128
      %v2130 = vpop.f32.mrf.mxu0
      %2131 = vmatprep.mubr.f32.mxu0 0.0
      %2132 = vmatmul.mubr.f32.gmra.mxu0 %v1930
      %v2133 = vpop.f32.mrf.mxu0
      %v2134 = vadd.f32 0.0, %v2133
      %v2135 = vpop.f32.mrf.mxu0
      %2136 = vmatprep.mubr.f32.mxu0 0.0
      %2137 = vmatmul.mubr.f32.gmra.mxu0 %v1933
      %v2138 = vpop.f32.mrf.mxu0
      %v2139 = vadd.f32 0.0, %v2138
      %v2140 = vpop.f32.mrf.mxu0
      %2141 = vmatprep.mubr.f32.mxu0 0.0
      %2142 = vmatmul.mubr.f32.gmra.mxu0 %v1936
      %v2143 = vpop.f32.mrf.mxu0
      %v2144 = vadd.f32 0.0, %v2143
      %v2145 = vpop.f32.mrf.mxu0
      %2146 = vmatprep.mubr.f32.mxu0 0.0
      %2147 = vmatmul.mubr.f32.gmra.mxu0 %v1939
      %v2148 = vpop.f32.mrf.mxu0
      %v2149 = vadd.f32 0.0, %v2148
      %v2150 = vpop.f32.mrf.mxu0
      %2151 = vmatprep.mubr.f32.mxu0 0.0
      %2152 = vmatmul.mubr.f32.gmra.mxu0 %v1942
      %v2153 = vpop.f32.mrf.mxu0
      %v2154 = vadd.f32 0.0, %v2153
      %v2155 = vpop.f32.mrf.mxu0
      %2156 = vmatprep.mubr.f32.mxu0 0.0
      %2157 = vmatmul.mubr.f32.gmra.mxu0 %v1945
      %v2158 = vpop.f32.mrf.mxu0
      %v2159 = vadd.f32 0.0, %v2158
      %v2160 = vpop.f32.mrf.mxu0
      %2161 = vmatprep.mubr.f32.mxu0 0.0
      %2162 = vmatmul.mubr.f32.gmra.mxu0 %v1948
      %v2163 = vpop.f32.mrf.mxu0
      %v2164 = vadd.f32 0.0, %v2163
      %v2165 = vpop.f32.mrf.mxu0
      %2166 = vmatprep.mubr.f32.mxu0 0.0
      %2167 = vmatmul.mubr.f32.gmra.mxu0 %v1951
      %v2168 = vpop.f32.mrf.mxu0
      %v2169 = vadd.f32 0.0, %v2168
      %v2170 = vpop.f32.mrf.mxu0
      %2171 = vmatprep.mubr.f32.mxu0 0.0
      %2172 = vmatmul.mubr.f32.gmra.mxu0 %v1954
      %v2173 = vpop.f32.mrf.mxu0
      %v2174 = vadd.f32 0.0, %v2173
      %v2175 = vpop.f32.mrf.mxu0
      %2176 = vmatprep.mubr.f32.mxu0 0.0
      %2177 = vmatmul.mubr.f32.gmra.mxu0 %v1957
      %v2178 = vpop.f32.mrf.mxu0
      %v2179 = vadd.f32 0.0, %v2178
      %v2180 = vpop.f32.mrf.mxu0
      %2181 = vmatprep.mubr.f32.mxu0 0.0
      %2182 = vmatmul.mubr.f32.gmra.mxu0 %v1960
      %v2183 = vpop.f32.mrf.mxu0
      %v2184 = vadd.f32 0.0, %v2183
      %v2185 = vpop.f32.mrf.mxu0
      %2186 = vmatprep.mubr.f32.mxu0 0.0
      %2187 = vmatmul.mubr.f32.gmra.mxu0 %v1963
      %v2188 = vpop.f32.mrf.mxu0
      %v2189 = vadd.f32 0.0, %v2188
      %v2190 = vpop.f32.mrf.mxu0
      %2191 = vmatprep.mubr.f32.mxu0 0.0
      %2192 = vmatmul.mubr.f32.gmra.mxu0 %v1966
      %v2193 = vpop.f32.mrf.mxu0
      %v2194 = vadd.f32 0.0, %v2193
      %v2195 = vpop.f32.mrf.mxu0
      %2196 = vdwg.mxu0
      %2197 = vst.msk [vmem:[%s259 + $0x1] sm:$0xff] %vm171, %v2039
      %2198 = vst.msk [vmem:[%s259 + $0x9] sm:$0xff] %vm171, %v2044
      %2199 = vst.msk [vmem:[%s259 + $0x19] sm:$0xff] %vm171, %v2049
      %2200 = vst.msk [vmem:[%s259 + $0x21] sm:$0xff] %vm171, %v2054
      %2201 = vst.msk [vmem:[%s259 + $0x31] sm:$0xff] %vm171, %v2059
      %2202 = vst.msk [vmem:[%s259 + $0x39] sm:$0xff] %vm171, %v2064
      %2203 = vst.msk [vmem:[%s259 + $0x49] sm:$0xff] %vm171, %v2069
      %2204 = vst.msk [vmem:[%s259 + $0x51] sm:$0xff] %vm171, %v2074
      %2205 = vst.msk [vmem:[%s259 + $0x61] sm:$0xff] %vm171, %v2079
      %2206 = vst.msk [vmem:[%s259 + $0x69] sm:$0xff] %vm171, %v2084
      %2207 = vst.msk [vmem:[%s259 + $0x79] sm:$0xff] %vm171, %v2089
      %2208 = vst.msk [vmem:[%s259 + $0x81] sm:$0xff] %vm171, %v2094
      %2209 = vst.msk [vmem:[%s259 + $0x91] sm:$0xff] %vm171, %v2099
      %2210 = vst.msk [vmem:[%s259 + $0x99] sm:$0xff] %vm171, %v2104
      %2211 = vst.msk [vmem:[%s259 + $0xa9] sm:$0xff] %vm171, %v2109
      %2212 = vst.msk [vmem:[%s259 + $0xb1] sm:$0xff] %vm171, %v2114
      %2213 = vst.msk [vmem:[%s259 + $0xc1] sm:$0xff] %vm171, %v2119
      %2214 = vst.msk [vmem:[%s259 + $0xc9] sm:$0xff] %vm171, %v2124
      %2215 = vst.msk [vmem:[%s259 + $0xd9] sm:$0xff] %vm171, %v2129
      %2216 = vst.msk [vmem:[%s259 + $0xe1] sm:$0xff] %vm171, %v2134
      %2217 = vst.msk [vmem:[%s259 + $0xf1] sm:$0xff] %vm171, %v2139
      %2218 = vst.msk [vmem:[%s259 + $0xf9] sm:$0xff] %vm171, %v2144
      %2219 = vst.msk [vmem:[%s259 + $0x109] sm:$0xff] %vm171, %v2149
      %2220 = vst.msk [vmem:[%s259 + $0x111] sm:$0xff] %vm171, %v2154
      %2221 = vst.msk [vmem:[%s259 + $0x121] sm:$0xff] %vm171, %v2159
      %2222 = vst.msk [vmem:[%s259 + $0x129] sm:$0xff] %vm171, %v2164
      %2223 = vst.msk [vmem:[%s259 + $0x139] sm:$0xff] %vm171, %v2169
      %2224 = vst.msk [vmem:[%s259 + $0x141] sm:$0xff] %vm171, %v2174
      %2225 = vst.msk [vmem:[%s259 + $0x151] sm:$0xff] %vm171, %v2179
      %2226 = vst.msk [vmem:[%s259 + $0x159] sm:$0xff] %vm171, %v2184
      %2227 = vst.msk [vmem:[%s259 + $0x169] sm:$0xff] %vm171, %v2189
      %2228 = vst.msk [vmem:[%s259 + $0x171] sm:$0xff] %vm171, %v2194
      %v2229 = vld [vmem:[#allocation2] sm:$0xff]
      %v2230 = vld [vmem:[#allocation2 + $0x8] sm:$0xff]
      %v2231 = vld [vmem:[#allocation2 + $0x18] sm:$0xff]
      %v2232 = vld [vmem:[#allocation2 + $0x20] sm:$0xff]
      %v2233 = vld [vmem:[#allocation2 + $0x30] sm:$0xff]
      %v2234 = vld [vmem:[#allocation2 + $0x38] sm:$0xff]
      %v2235 = vld [vmem:[#allocation2 + $0x48] sm:$0xff]
      %v2236 = vld [vmem:[#allocation2 + $0x50] sm:$0xff]
      %v2237 = vld [vmem:[#allocation2 + $0x60] sm:$0xff]
      %v2238 = vld [vmem:[#allocation2 + $0x68] sm:$0xff]
      %v2239 = vld [vmem:[#allocation2 + $0x78] sm:$0xff]
      %v2240 = vld [vmem:[#allocation2 + $0x80] sm:$0xff]
      %v2241 = vld [vmem:[#allocation2 + $0x90] sm:$0xff]
      %v2242 = vld [vmem:[#allocation2 + $0x98] sm:$0xff]
      %v2243 = vld [vmem:[#allocation2 + $0xa8] sm:$0xff]
      %v2244 = vld [vmem:[#allocation2 + $0xb0] sm:$0xff]
      %v2245 = vld [vmem:[#allocation2 + $0xc0] sm:$0xff]
      %v2246 = vld [vmem:[#allocation2 + $0xc8] sm:$0xff]
      %v2247 = vld [vmem:[#allocation2 + $0xd8] sm:$0xff]
      %v2248 = vld [vmem:[#allocation2 + $0xe0] sm:$0xff]
      %v2249 = vld [vmem:[#allocation2 + $0xf0] sm:$0xff]
      %v2250 = vld [vmem:[#allocation2 + $0xf8] sm:$0xff]
      %v2251 = vld [vmem:[#allocation2 + $0x108] sm:$0xff]
      %v2252 = vld [vmem:[#allocation2 + $0x110] sm:$0xff]
      %v2253 = vld [vmem:[#allocation2 + $0x120] sm:$0xff]
      %v2254 = vld [vmem:[#allocation2 + $0x128] sm:$0xff]
      %v2255 = vld [vmem:[#allocation2 + $0x138] sm:$0xff]
      %v2256 = vld [vmem:[#allocation2 + $0x140] sm:$0xff]
      %v2257 = vld [vmem:[#allocation2 + $0x150] sm:$0xff]
      %v2258 = vld [vmem:[#allocation2 + $0x158] sm:$0xff]
      %v2259 = vld [vmem:[#allocation2 + $0x168] sm:$0xff]
      %v2260 = vld [vmem:[#allocation2 + $0x170] sm:$0xff]
      %v2261 = vld [vmem:[#allocation2 + $0x1] sm:$0xff]
      %v2262 = vld [vmem:[#allocation2 + $0x9] sm:$0xff]
      %v2263 = vld [vmem:[#allocation2 + $0x19] sm:$0xff]
      %v2264 = vld [vmem:[#allocation2 + $0x21] sm:$0xff]
      %v2265 = vld [vmem:[#allocation2 + $0x31] sm:$0xff]
      %v2266 = vld [vmem:[#allocation2 + $0x39] sm:$0xff]
      %v2267 = vld [vmem:[#allocation2 + $0x49] sm:$0xff]
      %v2268 = vld [vmem:[#allocation2 + $0x51] sm:$0xff]
      %v2269 = vld [vmem:[#allocation2 + $0x61] sm:$0xff]
      %v2270 = vld [vmem:[#allocation2 + $0x69] sm:$0xff]
      %v2271 = vld [vmem:[#allocation2 + $0x79] sm:$0xff]
      %v2272 = vld [vmem:[#allocation2 + $0x81] sm:$0xff]
      %v2273 = vld [vmem:[#allocation2 + $0x91] sm:$0xff]
      %v2274 = vld [vmem:[#allocation2 + $0x99] sm:$0xff]
      %v2275 = vld [vmem:[#allocation2 + $0xa9] sm:$0xff]
      %v2276 = vld [vmem:[#allocation2 + $0xb1] sm:$0xff]
      %v2277 = vld [vmem:[#allocation2 + $0xc1] sm:$0xff]
      %v2278 = vld [vmem:[#allocation2 + $0xc9] sm:$0xff]
      %v2279 = vld [vmem:[#allocation2 + $0xd9] sm:$0xff]
      %v2280 = vld [vmem:[#allocation2 + $0xe1] sm:$0xff]
      %v2281 = vld [vmem:[#allocation2 + $0xf1] sm:$0xff]
      %v2282 = vld [vmem:[#allocation2 + $0xf9] sm:$0xff]
      %v2283 = vld [vmem:[#allocation2 + $0x109] sm:$0xff]
      %v2284 = vld [vmem:[#allocation2 + $0x111] sm:$0xff]
      %v2285 = vld [vmem:[#allocation2 + $0x121] sm:$0xff]
      %v2286 = vld [vmem:[#allocation2 + $0x129] sm:$0xff]
      %v2287 = vld [vmem:[#allocation2 + $0x139] sm:$0xff]
      %v2288 = vld [vmem:[#allocation2 + $0x141] sm:$0xff]
      %v2289 = vld [vmem:[#allocation2 + $0x151] sm:$0xff]
      %v2290 = vld [vmem:[#allocation2 + $0x159] sm:$0xff]
      %v2291 = vld [vmem:[#allocation2 + $0x169] sm:$0xff]
      %v2292 = vld [vmem:[#allocation2 + $0x171] sm:$0xff]
      %v2293 = vld [vmem:[#allocation2 + $0x2] sm:$0xff]
      %v2294 = vld [vmem:[#allocation2 + $0xa] sm:$0xff]
      %v2295 = vld [vmem:[#allocation2 + $0x1a] sm:$0xff]
      %v2296 = vld [vmem:[#allocation2 + $0x22] sm:$0xff]
      %v2297 = vld [vmem:[#allocation2 + $0x32] sm:$0xff]
      %v2298 = vld [vmem:[#allocation2 + $0x3a] sm:$0xff]
      %v2299 = vld [vmem:[#allocation2 + $0x4a] sm:$0xff]
      %v2300 = vld [vmem:[#allocation2 + $0x52] sm:$0xff]
      %v2301 = vld [vmem:[#allocation2 + $0x62] sm:$0xff]
      %v2302 = vld [vmem:[#allocation2 + $0x6a] sm:$0xff]
      %v2303 = vld [vmem:[#allocation2 + $0x7a] sm:$0xff]
      %v2304 = vld [vmem:[#allocation2 + $0x82] sm:$0xff]
      %v2305 = vld [vmem:[#allocation2 + $0x92] sm:$0xff]
      %v2306 = vld [vmem:[#allocation2 + $0x9a] sm:$0xff]
      %v2307 = vld [vmem:[#allocation2 + $0xaa] sm:$0xff]
      %v2308 = vld [vmem:[#allocation2 + $0xb2] sm:$0xff]
      %v2309 = vld [vmem:[#allocation2 + $0xc2] sm:$0xff]
      %v2310 = vld [vmem:[#allocation2 + $0xca] sm:$0xff]
      %v2311 = vld [vmem:[#allocation2 + $0xda] sm:$0xff]
      %v2312 = vld [vmem:[#allocation2 + $0xe2] sm:$0xff]
      %v2313 = vld [vmem:[#allocation2 + $0xf2] sm:$0xff]
      %v2314 = vld [vmem:[#allocation2 + $0xfa] sm:$0xff]
      %v2315 = vld [vmem:[#allocation2 + $0x10a] sm:$0xff]
      %v2316 = vld [vmem:[#allocation2 + $0x112] sm:$0xff]
      %v2317 = vld [vmem:[#allocation2 + $0x122] sm:$0xff]
      %v2318 = vld [vmem:[#allocation2 + $0x12a] sm:$0xff]
      %v2319 = vld [vmem:[#allocation2 + $0x13a] sm:$0xff]
      %v2320 = vld [vmem:[#allocation2 + $0x142] sm:$0xff]
      %v2321 = vld [vmem:[#allocation2 + $0x152] sm:$0xff]
      %v2322 = vld [vmem:[#allocation2 + $0x15a] sm:$0xff]
      %v2323 = vld [vmem:[#allocation2 + $0x16a] sm:$0xff]
      %v2324 = vld [vmem:[#allocation2 + $0x172] sm:$0xff]
      %v2325 = vld [vmem:[%s259] sm:$0xff]
      %v2326 = vld [vmem:[%s259 + $0x8] sm:$0xff]
      %v2327 = vld [vmem:[%s259 + $0x18] sm:$0xff]
      %v2328 = vld [vmem:[%s259 + $0x20] sm:$0xff]
      %v2329 = vld [vmem:[%s259 + $0x30] sm:$0xff]
      %v2330 = vld [vmem:[%s259 + $0x38] sm:$0xff]
      %v2331 = vld [vmem:[%s259 + $0x48] sm:$0xff]
      %v2332 = vld [vmem:[%s259 + $0x50] sm:$0xff]
      %v2333 = vld [vmem:[%s259 + $0x60] sm:$0xff]
      %v2334 = vld [vmem:[%s259 + $0x68] sm:$0xff]
      %v2335 = vld [vmem:[%s259 + $0x78] sm:$0xff]
      %v2336 = vld [vmem:[%s259 + $0x80] sm:$0xff]
      %v2337 = vld [vmem:[%s259 + $0x90] sm:$0xff]
      %v2338 = vld [vmem:[%s259 + $0x98] sm:$0xff]
      %v2339 = vld [vmem:[%s259 + $0xa8] sm:$0xff]
      %v2340 = vld [vmem:[%s259 + $0xb0] sm:$0xff]
      %v2341 = vld [vmem:[%s259 + $0xc0] sm:$0xff]
      %v2342 = vld [vmem:[%s259 + $0xc8] sm:$0xff]
      %v2343 = vld [vmem:[%s259 + $0xd8] sm:$0xff]
      %v2344 = vld [vmem:[%s259 + $0xe0] sm:$0xff]
      %v2345 = vld [vmem:[%s259 + $0xf0] sm:$0xff]
      %v2346 = vld [vmem:[%s259 + $0xf8] sm:$0xff]
      %v2347 = vld [vmem:[%s259 + $0x108] sm:$0xff]
      %v2348 = vld [vmem:[%s259 + $0x110] sm:$0xff]
      %v2349 = vld [vmem:[%s259 + $0x120] sm:$0xff]
      %v2350 = vld [vmem:[%s259 + $0x128] sm:$0xff]
      %v2351 = vld [vmem:[%s259 + $0x138] sm:$0xff]
      %v2352 = vld [vmem:[%s259 + $0x140] sm:$0xff]
      %v2353 = vld [vmem:[%s259 + $0x150] sm:$0xff]
      %v2354 = vld [vmem:[%s259 + $0x158] sm:$0xff]
      %v2355 = vld [vmem:[%s259 + $0x168] sm:$0xff]
      %v2356 = vld [vmem:[%s259 + $0x170] sm:$0xff]
      %v2357 = vld [vmem:[%s259 + $0x1] sm:$0xff]
      %v2358 = vld [vmem:[%s259 + $0x9] sm:$0xff]
      %v2359 = vld [vmem:[%s259 + $0x19] sm:$0xff]
      %v2360 = vld [vmem:[%s259 + $0x21] sm:$0xff]
      %v2361 = vld [vmem:[%s259 + $0x31] sm:$0xff]
      %v2362 = vld [vmem:[%s259 + $0x39] sm:$0xff]
      %v2363 = vld [vmem:[%s259 + $0x49] sm:$0xff]
      %v2364 = vld [vmem:[%s259 + $0x51] sm:$0xff]
      %v2365 = vld [vmem:[%s259 + $0x61] sm:$0xff]
      %v2366 = vld [vmem:[%s259 + $0x69] sm:$0xff]
      %v2367 = vld [vmem:[%s259 + $0x79] sm:$0xff]
      %v2368 = vld [vmem:[%s259 + $0x81] sm:$0xff]
      %v2369 = vld [vmem:[%s259 + $0x91] sm:$0xff]
      %v2370 = vld [vmem:[%s259 + $0x99] sm:$0xff]
      %v2371 = vld [vmem:[%s259 + $0xa9] sm:$0xff]
      %v2372 = vld [vmem:[%s259 + $0xb1] sm:$0xff]
      %v2373 = vld [vmem:[%s259 + $0xc1] sm:$0xff]
      %v2374 = vld [vmem:[%s259 + $0xc9] sm:$0xff]
      %v2375 = vld [vmem:[%s259 + $0xd9] sm:$0xff]
      %v2376 = vld [vmem:[%s259 + $0xe1] sm:$0xff]
      %v2377 = vld [vmem:[%s259 + $0xf1] sm:$0xff]
      %v2378 = vld [vmem:[%s259 + $0xf9] sm:$0xff]
      %v2379 = vld [vmem:[%s259 + $0x109] sm:$0xff]
      %v2380 = vld [vmem:[%s259 + $0x111] sm:$0xff]
      %v2381 = vld [vmem:[%s259 + $0x121] sm:$0xff]
      %v2382 = vld [vmem:[%s259 + $0x129] sm:$0xff]
      %v2383 = vld [vmem:[%s259 + $0x139] sm:$0xff]
      %v2384 = vld [vmem:[%s259 + $0x141] sm:$0xff]
      %v2385 = vld [vmem:[%s259 + $0x151] sm:$0xff]
      %v2386 = vld [vmem:[%s259 + $0x159] sm:$0xff]
      %v2387 = vld [vmem:[%s259 + $0x169] sm:$0xff]
      %v2388 = vld [vmem:[%s259 + $0x171] sm:$0xff]
      %v2389 = vld [vmem:[%s259 + $0x2] sm:$0xff]
      %v2390 = vld [vmem:[%s259 + $0xa] sm:$0xff]
      %v2391 = vld [vmem:[%s259 + $0x1a] sm:$0xff]
      %v2392 = vld [vmem:[%s259 + $0x22] sm:$0xff]
      %v2393 = vld [vmem:[%s259 + $0x32] sm:$0xff]
      %v2394 = vld [vmem:[%s259 + $0x3a] sm:$0xff]
      %v2395 = vld [vmem:[%s259 + $0x4a] sm:$0xff]
      %v2396 = vld [vmem:[%s259 + $0x52] sm:$0xff]
      %v2397 = vld [vmem:[%s259 + $0x62] sm:$0xff]
      %v2398 = vld [vmem:[%s259 + $0x6a] sm:$0xff]
      %v2399 = vld [vmem:[%s259 + $0x7a] sm:$0xff]
      %v2400 = vld [vmem:[%s259 + $0x82] sm:$0xff]
      %v2401 = vld [vmem:[%s259 + $0x92] sm:$0xff]
      %v2402 = vld [vmem:[%s259 + $0x9a] sm:$0xff]
      %v2403 = vld [vmem:[%s259 + $0xaa] sm:$0xff]
      %v2404 = vld [vmem:[%s259 + $0xb2] sm:$0xff]
      %v2405 = vld [vmem:[%s259 + $0xc2] sm:$0xff]
      %v2406 = vld [vmem:[%s259 + $0xca] sm:$0xff]
      %v2407 = vld [vmem:[%s259 + $0xda] sm:$0xff]
      %v2408 = vld [vmem:[%s259 + $0xe2] sm:$0xff]
      %v2409 = vld [vmem:[%s259 + $0xf2] sm:$0xff]
      %v2410 = vld [vmem:[%s259 + $0xfa] sm:$0xff]
      %v2411 = vld [vmem:[%s259 + $0x10a] sm:$0xff]
      %v2412 = vld [vmem:[%s259 + $0x112] sm:$0xff]
      %v2413 = vld [vmem:[%s259 + $0x122] sm:$0xff]
      %v2414 = vld [vmem:[%s259 + $0x12a] sm:$0xff]
      %v2415 = vld [vmem:[%s259 + $0x13a] sm:$0xff]
      %v2416 = vld [vmem:[%s259 + $0x142] sm:$0xff]
      %v2417 = vld [vmem:[%s259 + $0x152] sm:$0xff]
      %v2418 = vld [vmem:[%s259 + $0x15a] sm:$0xff]
      %v2419 = vld [vmem:[%s259 + $0x16a] sm:$0xff]
      %v2420 = vld [vmem:[%s259 + $0x172] sm:$0xff]
      %v2421 = vld [vmem:[%s484] sm:$0xff]
      %v2422 = vld [vmem:[%s484 + $0x8] sm:$0xff]
      %v2423 = vld [vmem:[%s484 + $0x18] sm:$0xff]
      %v2424 = vld [vmem:[%s484 + $0x20] sm:$0xff]
      %v2425 = vld [vmem:[%s484 + $0x30] sm:$0xff]
      %v2426 = vld [vmem:[%s484 + $0x38] sm:$0xff]
      %v2427 = vld [vmem:[%s484 + $0x48] sm:$0xff]
      %v2428 = vld [vmem:[%s484 + $0x50] sm:$0xff]
      %v2429 = vld [vmem:[%s484 + $0x60] sm:$0xff]
      %v2430 = vld [vmem:[%s484 + $0x68] sm:$0xff]
      %v2431 = vld [vmem:[%s484 + $0x78] sm:$0xff]
      %v2432 = vld [vmem:[%s484 + $0x80] sm:$0xff]
      %v2433 = vld [vmem:[%s484 + $0x90] sm:$0xff]
      %v2434 = vld [vmem:[%s484 + $0x98] sm:$0xff]
      %v2435 = vld [vmem:[%s484 + $0xa8] sm:$0xff]
      %v2436 = vld [vmem:[%s484 + $0xb0] sm:$0xff]
      %v2437 = vld [vmem:[%s484 + $0xc0] sm:$0xff]
      %v2438 = vld [vmem:[%s484 + $0xc8] sm:$0xff]
      %v2439 = vld [vmem:[%s484 + $0xd8] sm:$0xff]
      %v2440 = vld [vmem:[%s484 + $0xe0] sm:$0xff]
      %v2441 = vld [vmem:[%s484 + $0xf0] sm:$0xff]
      %v2442 = vld [vmem:[%s484 + $0xf8] sm:$0xff]
      %v2443 = vld [vmem:[%s484 + $0x108] sm:$0xff]
      %v2444 = vld [vmem:[%s484 + $0x110] sm:$0xff]
      %v2445 = vld [vmem:[%s484 + $0x120] sm:$0xff]
      %v2446 = vld [vmem:[%s484 + $0x128] sm:$0xff]
      %v2447 = vld [vmem:[%s484 + $0x138] sm:$0xff]
      %v2448 = vld [vmem:[%s484 + $0x140] sm:$0xff]
      %v2449 = vld [vmem:[%s484 + $0x150] sm:$0xff]
      %v2450 = vld [vmem:[%s484 + $0x158] sm:$0xff]
      %v2451 = vld [vmem:[%s484 + $0x168] sm:$0xff]
      %v2452 = vld [vmem:[%s484 + $0x170] sm:$0xff]
      %v2453 = vld [vmem:[%s484 + $0x1] sm:$0xff]
      %v2454 = vld [vmem:[%s484 + $0x9] sm:$0xff]
      %v2455 = vld [vmem:[%s484 + $0x19] sm:$0xff]
      %v2456 = vld [vmem:[%s484 + $0x21] sm:$0xff]
      %v2457 = vld [vmem:[%s484 + $0x31] sm:$0xff]
      %v2458 = vld [vmem:[%s484 + $0x39] sm:$0xff]
      %v2459 = vld [vmem:[%s484 + $0x49] sm:$0xff]
      %v2460 = vld [vmem:[%s484 + $0x51] sm:$0xff]
      %v2461 = vld [vmem:[%s484 + $0x61] sm:$0xff]
      %v2462 = vld [vmem:[%s484 + $0x69] sm:$0xff]
      %v2463 = vld [vmem:[%s484 + $0x79] sm:$0xff]
      %v2464 = vld [vmem:[%s484 + $0x81] sm:$0xff]
      %v2465 = vld [vmem:[%s484 + $0x91] sm:$0xff]
      %v2466 = vld [vmem:[%s484 + $0x99] sm:$0xff]
      %v2467 = vld [vmem:[%s484 + $0xa9] sm:$0xff]
      %v2468 = vld [vmem:[%s484 + $0xb1] sm:$0xff]
      %v2469 = vld [vmem:[%s484 + $0xc1] sm:$0xff]
      %v2470 = vld [vmem:[%s484 + $0xc9] sm:$0xff]
      %v2471 = vld [vmem:[%s484 + $0xd9] sm:$0xff]
      %v2472 = vld [vmem:[%s484 + $0xe1] sm:$0xff]
      %v2473 = vld [vmem:[%s484 + $0xf1] sm:$0xff]
      %v2474 = vld [vmem:[%s484 + $0xf9] sm:$0xff]
      %v2475 = vld [vmem:[%s484 + $0x109] sm:$0xff]
      %v2476 = vld [vmem:[%s484 + $0x111] sm:$0xff]
      %v2477 = vld [vmem:[%s484 + $0x121] sm:$0xff]
      %v2478 = vld [vmem:[%s484 + $0x129] sm:$0xff]
      %v2479 = vld [vmem:[%s484 + $0x139] sm:$0xff]
      %v2480 = vld [vmem:[%s484 + $0x141] sm:$0xff]
      %v2481 = vld [vmem:[%s484 + $0x151] sm:$0xff]
      %v2482 = vld [vmem:[%s484 + $0x159] sm:$0xff]
      %v2483 = vld [vmem:[%s484 + $0x169] sm:$0xff]
      %v2484 = vld [vmem:[%s484 + $0x171] sm:$0xff]
      %v2485 = vld [vmem:[%s484 + $0x2] sm:$0xff]
      %v2486 = vld [vmem:[%s484 + $0xa] sm:$0xff]
      %v2487 = vld [vmem:[%s484 + $0x1a] sm:$0xff]
      %v2488 = vld [vmem:[%s484 + $0x22] sm:$0xff]
      %v2489 = vld [vmem:[%s484 + $0x32] sm:$0xff]
      %v2490 = vld [vmem:[%s484 + $0x3a] sm:$0xff]
      %v2491 = vld [vmem:[%s484 + $0x4a] sm:$0xff]
      %v2492 = vld [vmem:[%s484 + $0x52] sm:$0xff]
      %v2493 = vld [vmem:[%s484 + $0x62] sm:$0xff]
      %v2494 = vld [vmem:[%s484 + $0x6a] sm:$0xff]
      %v2495 = vld [vmem:[%s484 + $0x7a] sm:$0xff]
      %v2496 = vld [vmem:[%s484 + $0x82] sm:$0xff]
      %v2497 = vld [vmem:[%s484 + $0x92] sm:$0xff]
      %v2498 = vld [vmem:[%s484 + $0x9a] sm:$0xff]
      %v2499 = vld [vmem:[%s484 + $0xaa] sm:$0xff]
      %v2500 = vld [vmem:[%s484 + $0xb2] sm:$0xff]
      %v2501 = vld [vmem:[%s484 + $0xc2] sm:$0xff]
      %v2502 = vld [vmem:[%s484 + $0xca] sm:$0xff]
      %v2503 = vld [vmem:[%s484 + $0xda] sm:$0xff]
      %v2504 = vld [vmem:[%s484 + $0xe2] sm:$0xff]
      %v2505 = vld [vmem:[%s484 + $0xf2] sm:$0xff]
      %v2506 = vld [vmem:[%s484 + $0xfa] sm:$0xff]
      %v2507 = vld [vmem:[%s484 + $0x10a] sm:$0xff]
      %v2508 = vld [vmem:[%s484 + $0x112] sm:$0xff]
      %v2509 = vld [vmem:[%s484 + $0x122] sm:$0xff]
      %v2510 = vld [vmem:[%s484 + $0x12a] sm:$0xff]
      %v2511 = vld [vmem:[%s484 + $0x13a] sm:$0xff]
      %v2512 = vld [vmem:[%s484 + $0x142] sm:$0xff]
      %v2513 = vld [vmem:[%s484 + $0x152] sm:$0xff]
      %v2514 = vld [vmem:[%s484 + $0x15a] sm:$0xff]
      %v2515 = vld [vmem:[%s484 + $0x16a] sm:$0xff]
      %v2516 = vld [vmem:[%s484 + $0x172] sm:$0xff]
      %2549 = vrot.lane.b32.xlu0 %v2261, 2
      %v2550 = vpop.permute.xlu0 %2549
      %2551 = vrot.lane.b32.xlu0 %v2262, 2
      %v2552 = vpop.permute.xlu0 %2551
      %2553 = vrot.lane.b32.xlu0 %v2263, 2
      %v2554 = vpop.permute.xlu0 %2553
      %2555 = vrot.lane.b32.xlu0 %v2264, 2
      %v2556 = vpop.permute.xlu0 %2555
      %2557 = vrot.lane.b32.xlu0 %v2265, 2
      %v2558 = vpop.permute.xlu0 %2557
      %2559 = vrot.lane.b32.xlu0 %v2266, 2
      %v2560 = vpop.permute.xlu0 %2559
      %2561 = vrot.lane.b32.xlu0 %v2267, 2
      %v2562 = vpop.permute.xlu0 %2561
      %2563 = vrot.lane.b32.xlu0 %v2268, 2
      %v2564 = vpop.permute.xlu0 %2563
      %2565 = vrot.lane.b32.xlu0 %v2269, 2
      %v2566 = vpop.permute.xlu0 %2565
      %2567 = vrot.lane.b32.xlu0 %v2270, 2
      %v2568 = vpop.permute.xlu0 %2567
      %2569 = vrot.lane.b32.xlu0 %v2271, 2
      %v2570 = vpop.permute.xlu0 %2569
      %2571 = vrot.lane.b32.xlu0 %v2272, 2
      %v2572 = vpop.permute.xlu0 %2571
      %2573 = vrot.lane.b32.xlu0 %v2273, 2
      %v2574 = vpop.permute.xlu0 %2573
      %2575 = vrot.lane.b32.xlu0 %v2274, 2
      %v2576 = vpop.permute.xlu0 %2575
      %2577 = vrot.lane.b32.xlu0 %v2275, 2
      %v2578 = vpop.permute.xlu0 %2577
      %2579 = vrot.lane.b32.xlu0 %v2276, 2
      %v2580 = vpop.permute.xlu0 %2579
      %2581 = vrot.lane.b32.xlu0 %v2277, 2
      %v2582 = vpop.permute.xlu0 %2581
      %2583 = vrot.lane.b32.xlu0 %v2278, 2
      %v2584 = vpop.permute.xlu0 %2583
      %2585 = vrot.lane.b32.xlu0 %v2279, 2
      %v2586 = vpop.permute.xlu0 %2585
      %2587 = vrot.lane.b32.xlu0 %v2280, 2
      %v2588 = vpop.permute.xlu0 %2587
      %2589 = vrot.lane.b32.xlu0 %v2281, 2
      %v2590 = vpop.permute.xlu0 %2589
      %2591 = vrot.lane.b32.xlu0 %v2282, 2
      %v2592 = vpop.permute.xlu0 %2591
      %2593 = vrot.lane.b32.xlu0 %v2283, 2
      %v2594 = vpop.permute.xlu0 %2593
      %2595 = vrot.lane.b32.xlu0 %v2284, 2
      %v2596 = vpop.permute.xlu0 %2595
      %2597 = vrot.lane.b32.xlu0 %v2285, 2
      %v2598 = vpop.permute.xlu0 %2597
      %2599 = vrot.lane.b32.xlu0 %v2286, 2
      %v2600 = vpop.permute.xlu0 %2599
      %2601 = vrot.lane.b32.xlu0 %v2287, 2
      %v2602 = vpop.permute.xlu0 %2601
      %2603 = vrot.lane.b32.xlu0 %v2288, 2
      %v2604 = vpop.permute.xlu0 %2603
      %2605 = vrot.lane.b32.xlu0 %v2289, 2
      %v2606 = vpop.permute.xlu0 %2605
      %2607 = vrot.lane.b32.xlu0 %v2290, 2
      %v2608 = vpop.permute.xlu0 %2607
      %2609 = vrot.lane.b32.xlu0 %v2291, 2
      %v2610 = vpop.permute.xlu0 %2609
      %2611 = vrot.lane.b32.xlu0 %v2292, 2
      %v2612 = vpop.permute.xlu0 %2611
      %2677 = vrot.lane.b32.xlu0 %v2293, 4
      %v2678 = vpop.permute.xlu0 %2677
      %2679 = vrot.lane.b32.xlu0 %v2294, 4
      %v2680 = vpop.permute.xlu0 %2679
      %2681 = vrot.lane.b32.xlu0 %v2295, 4
      %v2682 = vpop.permute.xlu0 %2681
      %2683 = vrot.lane.b32.xlu0 %v2296, 4
      %v2684 = vpop.permute.xlu0 %2683
      %2685 = vrot.lane.b32.xlu0 %v2297, 4
      %v2686 = vpop.permute.xlu0 %2685
      %2687 = vrot.lane.b32.xlu0 %v2298, 4
      %v2688 = vpop.permute.xlu0 %2687
      %2689 = vrot.lane.b32.xlu0 %v2299, 4
      %v2690 = vpop.permute.xlu0 %2689
      %2691 = vrot.lane.b32.xlu0 %v2300, 4
      %v2692 = vpop.permute.xlu0 %2691
      %2693 = vrot.lane.b32.xlu0 %v2301, 4
      %v2694 = vpop.permute.xlu0 %2693
      %2695 = vrot.lane.b32.xlu0 %v2302, 4
      %v2696 = vpop.permute.xlu0 %2695
      %2697 = vrot.lane.b32.xlu0 %v2303, 4
      %v2698 = vpop.permute.xlu0 %2697
      %2699 = vrot.lane.b32.xlu0 %v2304, 4
      %v2700 = vpop.permute.xlu0 %2699
      %2701 = vrot.lane.b32.xlu0 %v2305, 4
      %v2702 = vpop.permute.xlu0 %2701
      %2703 = vrot.lane.b32.xlu0 %v2306, 4
      %v2704 = vpop.permute.xlu0 %2703
      %2705 = vrot.lane.b32.xlu0 %v2307, 4
      %v2706 = vpop.permute.xlu0 %2705
      %2707 = vrot.lane.b32.xlu0 %v2308, 4
      %v2708 = vpop.permute.xlu0 %2707
      %2709 = vrot.lane.b32.xlu0 %v2309, 4
      %v2710 = vpop.permute.xlu0 %2709
      %2711 = vrot.lane.b32.xlu0 %v2310, 4
      %v2712 = vpop.permute.xlu0 %2711
      %2713 = vrot.lane.b32.xlu0 %v2311, 4
      %v2714 = vpop.permute.xlu0 %2713
      %2715 = vrot.lane.b32.xlu0 %v2312, 4
      %v2716 = vpop.permute.xlu0 %2715
      %2717 = vrot.lane.b32.xlu0 %v2313, 4
      %v2718 = vpop.permute.xlu0 %2717
      %2719 = vrot.lane.b32.xlu0 %v2314, 4
      %v2720 = vpop.permute.xlu0 %2719
      %2721 = vrot.lane.b32.xlu0 %v2315, 4
      %v2722 = vpop.permute.xlu0 %2721
      %2723 = vrot.lane.b32.xlu0 %v2316, 4
      %v2724 = vpop.permute.xlu0 %2723
      %2725 = vrot.lane.b32.xlu0 %v2317, 4
      %v2726 = vpop.permute.xlu0 %2725
      %2727 = vrot.lane.b32.xlu0 %v2318, 4
      %v2728 = vpop.permute.xlu0 %2727
      %2729 = vrot.lane.b32.xlu0 %v2319, 4
      %v2730 = vpop.permute.xlu0 %2729
      %2731 = vrot.lane.b32.xlu0 %v2320, 4
      %v2732 = vpop.permute.xlu0 %2731
      %2733 = vrot.lane.b32.xlu0 %v2321, 4
      %v2734 = vpop.permute.xlu0 %2733
      %2735 = vrot.lane.b32.xlu0 %v2322, 4
      %v2736 = vpop.permute.xlu0 %2735
      %2737 = vrot.lane.b32.xlu0 %v2323, 4
      %v2738 = vpop.permute.xlu0 %2737
      %2739 = vrot.lane.b32.xlu0 %v2324, 4
      %v2740 = vpop.permute.xlu0 %2739
      %2805 = vrot.lane.b32.xlu0 %v2325, 6
      %v2806 = vpop.permute.xlu0 %2805
      %2807 = vrot.lane.b32.xlu0 %v2326, 6
      %v2808 = vpop.permute.xlu0 %2807
      %2809 = vrot.lane.b32.xlu0 %v2327, 6
      %v2810 = vpop.permute.xlu0 %2809
      %2811 = vrot.lane.b32.xlu0 %v2328, 6
      %v2812 = vpop.permute.xlu0 %2811
      %2813 = vrot.lane.b32.xlu0 %v2329, 6
      %v2814 = vpop.permute.xlu0 %2813
      %2815 = vrot.lane.b32.xlu0 %v2330, 6
      %v2816 = vpop.permute.xlu0 %2815
      %2817 = vrot.lane.b32.xlu0 %v2331, 6
      %v2818 = vpop.permute.xlu0 %2817
      %2819 = vrot.lane.b32.xlu0 %v2332, 6
      %v2820 = vpop.permute.xlu0 %2819
      %2821 = vrot.lane.b32.xlu0 %v2333, 6
      %v2822 = vpop.permute.xlu0 %2821
      %2823 = vrot.lane.b32.xlu0 %v2334, 6
      %v2824 = vpop.permute.xlu0 %2823
      %2825 = vrot.lane.b32.xlu0 %v2335, 6
      %v2826 = vpop.permute.xlu0 %2825
      %2827 = vrot.lane.b32.xlu0 %v2336, 6
      %v2828 = vpop.permute.xlu0 %2827
      %2829 = vrot.lane.b32.xlu0 %v2337, 6
      %v2830 = vpop.permute.xlu0 %2829
      %2831 = vrot.lane.b32.xlu0 %v2338, 6
      %v2832 = vpop.permute.xlu0 %2831
      %2833 = vrot.lane.b32.xlu0 %v2339, 6
      %v2834 = vpop.permute.xlu0 %2833
      %2835 = vrot.lane.b32.xlu0 %v2340, 6
      %v2836 = vpop.permute.xlu0 %2835
      %2837 = vrot.lane.b32.xlu0 %v2341, 6
      %v2838 = vpop.permute.xlu0 %2837
      %2839 = vrot.lane.b32.xlu0 %v2342, 6
      %v2840 = vpop.permute.xlu0 %2839
      %2841 = vrot.lane.b32.xlu0 %v2343, 6
      %v2842 = vpop.permute.xlu0 %2841
      %2843 = vrot.lane.b32.xlu0 %v2344, 6
      %v2844 = vpop.permute.xlu0 %2843
      %2845 = vrot.lane.b32.xlu0 %v2345, 6
      %v2846 = vpop.permute.xlu0 %2845
      %2847 = vrot.lane.b32.xlu0 %v2346, 6
      %v2848 = vpop.permute.xlu0 %2847
      %2849 = vrot.lane.b32.xlu0 %v2347, 6
      %v2850 = vpop.permute.xlu0 %2849
      %2851 = vrot.lane.b32.xlu0 %v2348, 6
      %v2852 = vpop.permute.xlu0 %2851
      %2853 = vrot.lane.b32.xlu0 %v2349, 6
      %v2854 = vpop.permute.xlu0 %2853
      %2855 = vrot.lane.b32.xlu0 %v2350, 6
      %v2856 = vpop.permute.xlu0 %2855
      %2857 = vrot.lane.b32.xlu0 %v2351, 6
      %v2858 = vpop.permute.xlu0 %2857
      %2859 = vrot.lane.b32.xlu0 %v2352, 6
      %v2860 = vpop.permute.xlu0 %2859
      %2861 = vrot.lane.b32.xlu0 %v2353, 6
      %v2862 = vpop.permute.xlu0 %2861
      %2863 = vrot.lane.b32.xlu0 %v2354, 6
      %v2864 = vpop.permute.xlu0 %2863
      %2865 = vrot.lane.b32.xlu0 %v2355, 6
      %v2866 = vpop.permute.xlu0 %2865
      %2867 = vrot.lane.b32.xlu0 %v2356, 6
      %v2868 = vpop.permute.xlu0 %2867
      %2933 = vrot.lane.b32.xlu0 %v2357, 8
      %v2934 = vpop.permute.xlu0 %2933
      %2935 = vrot.lane.b32.xlu0 %v2358, 8
      %v2936 = vpop.permute.xlu0 %2935
      %2937 = vrot.lane.b32.xlu0 %v2359, 8
      %v2938 = vpop.permute.xlu0 %2937
      %2939 = vrot.lane.b32.xlu0 %v2360, 8
      %v2940 = vpop.permute.xlu0 %2939
      %2941 = vrot.lane.b32.xlu0 %v2361, 8
      %v2942 = vpop.permute.xlu0 %2941
      %2943 = vrot.lane.b32.xlu0 %v2362, 8
      %v2944 = vpop.permute.xlu0 %2943
      %2945 = vrot.lane.b32.xlu0 %v2363, 8
      %v2946 = vpop.permute.xlu0 %2945
      %2947 = vrot.lane.b32.xlu0 %v2364, 8
      %v2948 = vpop.permute.xlu0 %2947
      %2949 = vrot.lane.b32.xlu0 %v2365, 8
      %v2950 = vpop.permute.xlu0 %2949
      %2951 = vrot.lane.b32.xlu0 %v2366, 8
      %v2952 = vpop.permute.xlu0 %2951
      %2953 = vrot.lane.b32.xlu0 %v2367, 8
      %v2954 = vpop.permute.xlu0 %2953
      %2955 = vrot.lane.b32.xlu0 %v2368, 8
      %v2956 = vpop.permute.xlu0 %2955
      %2957 = vrot.lane.b32.xlu0 %v2369, 8
      %v2958 = vpop.permute.xlu0 %2957
      %2959 = vrot.lane.b32.xlu0 %v2370, 8
      %v2960 = vpop.permute.xlu0 %2959
      %2961 = vrot.lane.b32.xlu0 %v2371, 8
      %v2962 = vpop.permute.xlu0 %2961
      %2963 = vrot.lane.b32.xlu0 %v2372, 8
      %v2964 = vpop.permute.xlu0 %2963
      %2965 = vrot.lane.b32.xlu0 %v2373, 8
      %v2966 = vpop.permute.xlu0 %2965
      %2967 = vrot.lane.b32.xlu0 %v2374, 8
      %v2968 = vpop.permute.xlu0 %2967
      %2969 = vrot.lane.b32.xlu0 %v2375, 8
      %v2970 = vpop.permute.xlu0 %2969
      %2971 = vrot.lane.b32.xlu0 %v2376, 8
      %v2972 = vpop.permute.xlu0 %2971
      %2973 = vrot.lane.b32.xlu0 %v2377, 8
      %v2974 = vpop.permute.xlu0 %2973
      %2975 = vrot.lane.b32.xlu0 %v2378, 8
      %v2976 = vpop.permute.xlu0 %2975
      %2977 = vrot.lane.b32.xlu0 %v2379, 8
      %v2978 = vpop.permute.xlu0 %2977
      %2979 = vrot.lane.b32.xlu0 %v2380, 8
      %v2980 = vpop.permute.xlu0 %2979
      %2981 = vrot.lane.b32.xlu0 %v2381, 8
      %v2982 = vpop.permute.xlu0 %2981
      %2983 = vrot.lane.b32.xlu0 %v2382, 8
      %v2984 = vpop.permute.xlu0 %2983
      %2985 = vrot.lane.b32.xlu0 %v2383, 8
      %v2986 = vpop.permute.xlu0 %2985
      %2987 = vrot.lane.b32.xlu0 %v2384, 8
      %v2988 = vpop.permute.xlu0 %2987
      %2989 = vrot.lane.b32.xlu0 %v2385, 8
      %v2990 = vpop.permute.xlu0 %2989
      %2991 = vrot.lane.b32.xlu0 %v2386, 8
      %v2992 = vpop.permute.xlu0 %2991
      %2993 = vrot.lane.b32.xlu0 %v2387, 8
      %v2994 = vpop.permute.xlu0 %2993
      %2995 = vrot.lane.b32.xlu0 %v2388, 8
      %v2996 = vpop.permute.xlu0 %2995
      %3061 = vrot.lane.b32.xlu0 %v2389, 10
      %v3062 = vpop.permute.xlu0 %3061
      %3063 = vrot.lane.b32.xlu0 %v2390, 10
      %v3064 = vpop.permute.xlu0 %3063
      %3065 = vrot.lane.b32.xlu0 %v2391, 10
      %v3066 = vpop.permute.xlu0 %3065
      %3067 = vrot.lane.b32.xlu0 %v2392, 10
      %v3068 = vpop.permute.xlu0 %3067
      %3069 = vrot.lane.b32.xlu0 %v2393, 10
      %v3070 = vpop.permute.xlu0 %3069
      %3071 = vrot.lane.b32.xlu0 %v2394, 10
      %v3072 = vpop.permute.xlu0 %3071
      %3073 = vrot.lane.b32.xlu0 %v2395, 10
      %v3074 = vpop.permute.xlu0 %3073
      %3075 = vrot.lane.b32.xlu0 %v2396, 10
      %v3076 = vpop.permute.xlu0 %3075
      %3077 = vrot.lane.b32.xlu0 %v2397, 10
      %v3078 = vpop.permute.xlu0 %3077
      %3079 = vrot.lane.b32.xlu0 %v2398, 10
      %v3080 = vpop.permute.xlu0 %3079
      %3081 = vrot.lane.b32.xlu0 %v2399, 10
      %v3082 = vpop.permute.xlu0 %3081
      %3083 = vrot.lane.b32.xlu0 %v2400, 10
      %v3084 = vpop.permute.xlu0 %3083
      %3085 = vrot.lane.b32.xlu0 %v2401, 10
      %v3086 = vpop.permute.xlu0 %3085
      %3087 = vrot.lane.b32.xlu0 %v2402, 10
      %v3088 = vpop.permute.xlu0 %3087
      %3089 = vrot.lane.b32.xlu0 %v2403, 10
      %v3090 = vpop.permute.xlu0 %3089
      %3091 = vrot.lane.b32.xlu0 %v2404, 10
      %v3092 = vpop.permute.xlu0 %3091
      %3093 = vrot.lane.b32.xlu0 %v2405, 10
      %v3094 = vpop.permute.xlu0 %3093
      %3095 = vrot.lane.b32.xlu0 %v2406, 10
      %v3096 = vpop.permute.xlu0 %3095
      %3097 = vrot.lane.b32.xlu0 %v2407, 10
      %v3098 = vpop.permute.xlu0 %3097
      %3099 = vrot.lane.b32.xlu0 %v2408, 10
      %v3100 = vpop.permute.xlu0 %3099
      %3101 = vrot.lane.b32.xlu0 %v2409, 10
      %v3102 = vpop.permute.xlu0 %3101
      %3103 = vrot.lane.b32.xlu0 %v2410, 10
      %v3104 = vpop.permute.xlu0 %3103
      %3105 = vrot.lane.b32.xlu0 %v2411, 10
      %v3106 = vpop.permute.xlu0 %3105
      %3107 = vrot.lane.b32.xlu0 %v2412, 10
      %v3108 = vpop.permute.xlu0 %3107
      %3109 = vrot.lane.b32.xlu0 %v2413, 10
      %v3110 = vpop.permute.xlu0 %3109
      %3111 = vrot.lane.b32.xlu0 %v2414, 10
      %v3112 = vpop.permute.xlu0 %3111
      %3113 = vrot.lane.b32.xlu0 %v2415, 10
      %v3114 = vpop.permute.xlu0 %3113
      %3115 = vrot.lane.b32.xlu0 %v2416, 10
      %v3116 = vpop.permute.xlu0 %3115
      %3117 = vrot.lane.b32.xlu0 %v2417, 10
      %v3118 = vpop.permute.xlu0 %3117
      %3119 = vrot.lane.b32.xlu0 %v2418, 10
      %v3120 = vpop.permute.xlu0 %3119
      %3121 = vrot.lane.b32.xlu0 %v2419, 10
      %v3122 = vpop.permute.xlu0 %3121
      %3123 = vrot.lane.b32.xlu0 %v2420, 10
      %v3124 = vpop.permute.xlu0 %3123
      %3189 = vrot.lane.b32.xlu0 %v2421, 12
      %v3190 = vpop.permute.xlu0 %3189
      %3191 = vrot.lane.b32.xlu0 %v2422, 12
      %v3192 = vpop.permute.xlu0 %3191
      %3193 = vrot.lane.b32.xlu0 %v2423, 12
      %v3194 = vpop.permute.xlu0 %3193
      %3195 = vrot.lane.b32.xlu0 %v2424, 12
      %v3196 = vpop.permute.xlu0 %3195
      %3197 = vrot.lane.b32.xlu0 %v2425, 12
      %v3198 = vpop.permute.xlu0 %3197
      %3199 = vrot.lane.b32.xlu0 %v2426, 12
      %v3200 = vpop.permute.xlu0 %3199
      %3201 = vrot.lane.b32.xlu0 %v2427, 12
      %v3202 = vpop.permute.xlu0 %3201
      %3203 = vrot.lane.b32.xlu0 %v2428, 12
      %v3204 = vpop.permute.xlu0 %3203
      %3205 = vrot.lane.b32.xlu0 %v2429, 12
      %v3206 = vpop.permute.xlu0 %3205
      %3207 = vrot.lane.b32.xlu0 %v2430, 12
      %v3208 = vpop.permute.xlu0 %3207
      %3209 = vrot.lane.b32.xlu0 %v2431, 12
      %v3210 = vpop.permute.xlu0 %3209
      %3211 = vrot.lane.b32.xlu0 %v2432, 12
      %v3212 = vpop.permute.xlu0 %3211
      %3213 = vrot.lane.b32.xlu0 %v2433, 12
      %v3214 = vpop.permute.xlu0 %3213
      %3215 = vrot.lane.b32.xlu0 %v2434, 12
      %v3216 = vpop.permute.xlu0 %3215
      %3217 = vrot.lane.b32.xlu0 %v2435, 12
      %v3218 = vpop.permute.xlu0 %3217
      %3219 = vrot.lane.b32.xlu0 %v2436, 12
      %v3220 = vpop.permute.xlu0 %3219
      %3221 = vrot.lane.b32.xlu0 %v2437, 12
      %v3222 = vpop.permute.xlu0 %3221
      %3223 = vrot.lane.b32.xlu0 %v2438, 12
      %v3224 = vpop.permute.xlu0 %3223
      %3225 = vrot.lane.b32.xlu0 %v2439, 12
      %v3226 = vpop.permute.xlu0 %3225
      %3227 = vrot.lane.b32.xlu0 %v2440, 12
      %v3228 = vpop.permute.xlu0 %3227
      %3229 = vrot.lane.b32.xlu0 %v2441, 12
      %v3230 = vpop.permute.xlu0 %3229
      %3231 = vrot.lane.b32.xlu0 %v2442, 12
      %v3232 = vpop.permute.xlu0 %3231
      %3233 = vrot.lane.b32.xlu0 %v2443, 12
      %v3234 = vpop.permute.xlu0 %3233
      %3235 = vrot.lane.b32.xlu0 %v2444, 12
      %v3236 = vpop.permute.xlu0 %3235
      %3237 = vrot.lane.b32.xlu0 %v2445, 12
      %v3238 = vpop.permute.xlu0 %3237
      %3239 = vrot.lane.b32.xlu0 %v2446, 12
      %v3240 = vpop.permute.xlu0 %3239
      %3241 = vrot.lane.b32.xlu0 %v2447, 12
      %v3242 = vpop.permute.xlu0 %3241
      %3243 = vrot.lane.b32.xlu0 %v2448, 12
      %v3244 = vpop.permute.xlu0 %3243
      %3245 = vrot.lane.b32.xlu0 %v2449, 12
      %v3246 = vpop.permute.xlu0 %3245
      %3247 = vrot.lane.b32.xlu0 %v2450, 12
      %v3248 = vpop.permute.xlu0 %3247
      %3249 = vrot.lane.b32.xlu0 %v2451, 12
      %v3250 = vpop.permute.xlu0 %3249
      %3251 = vrot.lane.b32.xlu0 %v2452, 12
      %v3252 = vpop.permute.xlu0 %3251
      %3317 = vrot.lane.b32.xlu0 %v2453, 14
      %v3318 = vpop.permute.xlu0 %3317
      %3319 = vrot.lane.b32.xlu0 %v2454, 14
      %v3320 = vpop.permute.xlu0 %3319
      %3321 = vrot.lane.b32.xlu0 %v2455, 14
      %v3322 = vpop.permute.xlu0 %3321
      %3323 = vrot.lane.b32.xlu0 %v2456, 14
      %v3324 = vpop.permute.xlu0 %3323
      %3325 = vrot.lane.b32.xlu0 %v2457, 14
      %v3326 = vpop.permute.xlu0 %3325
      %3327 = vrot.lane.b32.xlu0 %v2458, 14
      %v3328 = vpop.permute.xlu0 %3327
      %3329 = vrot.lane.b32.xlu0 %v2459, 14
      %v3330 = vpop.permute.xlu0 %3329
      %3331 = vrot.lane.b32.xlu0 %v2460, 14
      %v3332 = vpop.permute.xlu0 %3331
      %3333 = vrot.lane.b32.xlu0 %v2461, 14
      %v3334 = vpop.permute.xlu0 %3333
      %3335 = vrot.lane.b32.xlu0 %v2462, 14
      %v3336 = vpop.permute.xlu0 %3335
      %3337 = vrot.lane.b32.xlu0 %v2463, 14
      %v3338 = vpop.permute.xlu0 %3337
      %3339 = vrot.lane.b32.xlu0 %v2464, 14
      %v3340 = vpop.permute.xlu0 %3339
      %3341 = vrot.lane.b32.xlu0 %v2465, 14
      %v3342 = vpop.permute.xlu0 %3341
      %3343 = vrot.lane.b32.xlu0 %v2466, 14
      %v3344 = vpop.permute.xlu0 %3343
      %3345 = vrot.lane.b32.xlu0 %v2467, 14
      %v3346 = vpop.permute.xlu0 %3345
      %3347 = vrot.lane.b32.xlu0 %v2468, 14
      %v3348 = vpop.permute.xlu0 %3347
      %3349 = vrot.lane.b32.xlu0 %v2469, 14
      %v3350 = vpop.permute.xlu0 %3349
      %3351 = vrot.lane.b32.xlu0 %v2470, 14
      %v3352 = vpop.permute.xlu0 %3351
      %3353 = vrot.lane.b32.xlu0 %v2471, 14
      %v3354 = vpop.permute.xlu0 %3353
      %3355 = vrot.lane.b32.xlu0 %v2472, 14
      %v3356 = vpop.permute.xlu0 %3355
      %3357 = vrot.lane.b32.xlu0 %v2473, 14
      %v3358 = vpop.permute.xlu0 %3357
      %3359 = vrot.lane.b32.xlu0 %v2474, 14
      %v3360 = vpop.permute.xlu0 %3359
      %3361 = vrot.lane.b32.xlu0 %v2475, 14
      %v3362 = vpop.permute.xlu0 %3361
      %3363 = vrot.lane.b32.xlu0 %v2476, 14
      %v3364 = vpop.permute.xlu0 %3363
      %3365 = vrot.lane.b32.xlu0 %v2477, 14
      %v3366 = vpop.permute.xlu0 %3365
      %3367 = vrot.lane.b32.xlu0 %v2478, 14
      %v3368 = vpop.permute.xlu0 %3367
      %3369 = vrot.lane.b32.xlu0 %v2479, 14
      %v3370 = vpop.permute.xlu0 %3369
      %3371 = vrot.lane.b32.xlu0 %v2480, 14
      %v3372 = vpop.permute.xlu0 %3371
      %3373 = vrot.lane.b32.xlu0 %v2481, 14
      %v3374 = vpop.permute.xlu0 %3373
      %3375 = vrot.lane.b32.xlu0 %v2482, 14
      %v3376 = vpop.permute.xlu0 %3375
      %3377 = vrot.lane.b32.xlu0 %v2483, 14
      %v3378 = vpop.permute.xlu0 %3377
      %3379 = vrot.lane.b32.xlu0 %v2484, 14
      %v3380 = vpop.permute.xlu0 %3379
      %3445 = vrot.lane.b32.xlu0 %v2485, 16
      %v3446 = vpop.permute.xlu0 %3445
      %3447 = vrot.lane.b32.xlu0 %v2486, 16
      %v3448 = vpop.permute.xlu0 %3447
      %3449 = vrot.lane.b32.xlu0 %v2487, 16
      %v3450 = vpop.permute.xlu0 %3449
      %3451 = vrot.lane.b32.xlu0 %v2488, 16
      %v3452 = vpop.permute.xlu0 %3451
      %3453 = vrot.lane.b32.xlu0 %v2489, 16
      %v3454 = vpop.permute.xlu0 %3453
      %3455 = vrot.lane.b32.xlu0 %v2490, 16
      %v3456 = vpop.permute.xlu0 %3455
      %3457 = vrot.lane.b32.xlu0 %v2491, 16
      %v3458 = vpop.permute.xlu0 %3457
      %3459 = vrot.lane.b32.xlu0 %v2492, 16
      %v3460 = vpop.permute.xlu0 %3459
      %3461 = vrot.lane.b32.xlu0 %v2493, 16
      %v3462 = vpop.permute.xlu0 %3461
      %3463 = vrot.lane.b32.xlu0 %v2494, 16
      %v3464 = vpop.permute.xlu0 %3463
      %3465 = vrot.lane.b32.xlu0 %v2495, 16
      %v3466 = vpop.permute.xlu0 %3465
      %3467 = vrot.lane.b32.xlu0 %v2496, 16
      %v3468 = vpop.permute.xlu0 %3467
      %3469 = vrot.lane.b32.xlu0 %v2497, 16
      %v3470 = vpop.permute.xlu0 %3469
      %3471 = vrot.lane.b32.xlu0 %v2498, 16
      %v3472 = vpop.permute.xlu0 %3471
      %3473 = vrot.lane.b32.xlu0 %v2499, 16
      %v3474 = vpop.permute.xlu0 %3473
      %3475 = vrot.lane.b32.xlu0 %v2500, 16
      %v3476 = vpop.permute.xlu0 %3475
      %3477 = vrot.lane.b32.xlu0 %v2501, 16
      %v3478 = vpop.permute.xlu0 %3477
      %3479 = vrot.lane.b32.xlu0 %v2502, 16
      %v3480 = vpop.permute.xlu0 %3479
      %3481 = vrot.lane.b32.xlu0 %v2503, 16
      %v3482 = vpop.permute.xlu0 %3481
      %3483 = vrot.lane.b32.xlu0 %v2504, 16
      %v3484 = vpop.permute.xlu0 %3483
      %3485 = vrot.lane.b32.xlu0 %v2505, 16
      %v3486 = vpop.permute.xlu0 %3485
      %3487 = vrot.lane.b32.xlu0 %v2506, 16
      %v3488 = vpop.permute.xlu0 %3487
      %3489 = vrot.lane.b32.xlu0 %v2507, 16
      %v3490 = vpop.permute.xlu0 %3489
      %3491 = vrot.lane.b32.xlu0 %v2508, 16
      %v3492 = vpop.permute.xlu0 %3491
      %3493 = vrot.lane.b32.xlu0 %v2509, 16
      %v3494 = vpop.permute.xlu0 %3493
      %3495 = vrot.lane.b32.xlu0 %v2510, 16
      %v3496 = vpop.permute.xlu0 %3495
      %3497 = vrot.lane.b32.xlu0 %v2511, 16
      %v3498 = vpop.permute.xlu0 %3497
      %3499 = vrot.lane.b32.xlu0 %v2512, 16
      %v3500 = vpop.permute.xlu0 %3499
      %3501 = vrot.lane.b32.xlu0 %v2513, 16
      %v3502 = vpop.permute.xlu0 %3501
      %3503 = vrot.lane.b32.xlu0 %v2514, 16
      %v3504 = vpop.permute.xlu0 %3503
      %3505 = vrot.lane.b32.xlu0 %v2515, 16
      %v3506 = vpop.permute.xlu0 %3505
      %3507 = vrot.lane.b32.xlu0 %v2516, 16
      %v3508 = vpop.permute.xlu0 %3507
      %v3541 = vsel %vm171, %v2229, %v2550
      %v3542 = vsel %vm171, %v2230, %v2552
      %v3543 = vsel %vm171, %v2231, %v2554
      %v3544 = vsel %vm171, %v2232, %v2556
      %v3545 = vsel %vm171, %v2233, %v2558
      %v3546 = vsel %vm171, %v2234, %v2560
      %v3547 = vsel %vm171, %v2235, %v2562
      %v3548 = vsel %vm171, %v2236, %v2564
      %v3549 = vsel %vm171, %v2237, %v2566
      %v3550 = vsel %vm171, %v2238, %v2568
      %v3551 = vsel %vm171, %v2239, %v2570
      %v3552 = vsel %vm171, %v2240, %v2572
      %v3553 = vsel %vm171, %v2241, %v2574
      %v3554 = vsel %vm171, %v2242, %v2576
      %v3555 = vsel %vm171, %v2243, %v2578
      %v3556 = vsel %vm171, %v2244, %v2580
      %v3557 = vsel %vm171, %v2245, %v2582
      %v3558 = vsel %vm171, %v2246, %v2584
      %v3559 = vsel %vm171, %v2247, %v2586
      %v3560 = vsel %vm171, %v2248, %v2588
      %v3561 = vsel %vm171, %v2249, %v2590
      %v3562 = vsel %vm171, %v2250, %v2592
      %v3563 = vsel %vm171, %v2251, %v2594
      %v3564 = vsel %vm171, %v2252, %v2596
      %v3565 = vsel %vm171, %v2253, %v2598
      %v3566 = vsel %vm171, %v2254, %v2600
      %v3567 = vsel %vm171, %v2255, %v2602
      %v3568 = vsel %vm171, %v2256, %v2604
      %v3569 = vsel %vm171, %v2257, %v2606
      %v3570 = vsel %vm171, %v2258, %v2608
      %v3571 = vsel %vm171, %v2259, %v2610
      %v3572 = vsel %vm171, %v2260, %v2612
      %v3573 = vsel %vm1637, %v3541, %v2678
      %v3574 = vsel %vm1637, %v3542, %v2680
      %v3575 = vsel %vm1637, %v3543, %v2682
      %v3576 = vsel %vm1637, %v3544, %v2684
      %v3577 = vsel %vm1637, %v3545, %v2686
      %v3578 = vsel %vm1637, %v3546, %v2688
      %v3579 = vsel %vm1637, %v3547, %v2690
      %v3580 = vsel %vm1637, %v3548, %v2692
      %v3581 = vsel %vm1637, %v3549, %v2694
      %v3582 = vsel %vm1637, %v3550, %v2696
      %v3583 = vsel %vm1637, %v3551, %v2698
      %v3584 = vsel %vm1637, %v3552, %v2700
      %v3585 = vsel %vm1637, %v3553, %v2702
      %v3586 = vsel %vm1637, %v3554, %v2704
      %v3587 = vsel %vm1637, %v3555, %v2706
      %v3588 = vsel %vm1637, %v3556, %v2708
      %v3589 = vsel %vm1637, %v3557, %v2710
      %v3590 = vsel %vm1637, %v3558, %v2712
      %v3591 = vsel %vm1637, %v3559, %v2714
      %v3592 = vsel %vm1637, %v3560, %v2716
      %v3593 = vsel %vm1637, %v3561, %v2718
      %v3594 = vsel %vm1637, %v3562, %v2720
      %v3595 = vsel %vm1637, %v3563, %v2722
      %v3596 = vsel %vm1637, %v3564, %v2724
      %v3597 = vsel %vm1637, %v3565, %v2726
      %v3598 = vsel %vm1637, %v3566, %v2728
      %v3599 = vsel %vm1637, %v3567, %v2730
      %v3600 = vsel %vm1637, %v3568, %v2732
      %v3601 = vsel %vm1637, %v3569, %v2734
      %v3602 = vsel %vm1637, %v3570, %v2736
      %v3603 = vsel %vm1637, %v3571, %v2738
      %v3604 = vsel %vm1637, %v3572, %v2740
      %v3605 = vsel %vm1670, %v3573, %v2806
      %v3606 = vsel %vm1670, %v3574, %v2808
      %v3607 = vsel %vm1670, %v3575, %v2810
      %v3608 = vsel %vm1670, %v3576, %v2812
      %v3609 = vsel %vm1670, %v3577, %v2814
      %v3610 = vsel %vm1670, %v3578, %v2816
      %v3611 = vsel %vm1670, %v3579, %v2818
      %v3612 = vsel %vm1670, %v3580, %v2820
      %v3613 = vsel %vm1670, %v3581, %v2822
      %v3614 = vsel %vm1670, %v3582, %v2824
      %v3615 = vsel %vm1670, %v3583, %v2826
      %v3616 = vsel %vm1670, %v3584, %v2828
      %v3617 = vsel %vm1670, %v3585, %v2830
      %v3618 = vsel %vm1670, %v3586, %v2832
      %v3619 = vsel %vm1670, %v3587, %v2834
      %v3620 = vsel %vm1670, %v3588, %v2836
      %v3621 = vsel %vm1670, %v3589, %v2838
      %v3622 = vsel %vm1670, %v3590, %v2840
      %v3623 = vsel %vm1670, %v3591, %v2842
      %v3624 = vsel %vm1670, %v3592, %v2844
      %v3625 = vsel %vm1670, %v3593, %v2846
      %v3626 = vsel %vm1670, %v3594, %v2848
      %v3627 = vsel %vm1670, %v3595, %v2850
      %v3628 = vsel %vm1670, %v3596, %v2852
      %v3629 = vsel %vm1670, %v3597, %v2854
      %v3630 = vsel %vm1670, %v3598, %v2856
      %v3631 = vsel %vm1670, %v3599, %v2858
      %v3632 = vsel %vm1670, %v3600, %v2860
      %v3633 = vsel %vm1670, %v3601, %v2862
      %v3634 = vsel %vm1670, %v3602, %v2864
      %v3635 = vsel %vm1670, %v3603, %v2866
      %v3636 = vsel %vm1670, %v3604, %v2868
      %v3637 = vsel %vm1703, %v3605, %v2934
      %v3638 = vsel %vm1703, %v3606, %v2936
      %v3639 = vsel %vm1703, %v3607, %v2938
      %v3640 = vsel %vm1703, %v3608, %v2940
      %v3641 = vsel %vm1703, %v3609, %v2942
      %v3642 = vsel %vm1703, %v3610, %v2944
      %v3643 = vsel %vm1703, %v3611, %v2946
      %v3644 = vsel %vm1703, %v3612, %v2948
      %v3645 = vsel %vm1703, %v3613, %v2950
      %v3646 = vsel %vm1703, %v3614, %v2952
      %v3647 = vsel %vm1703, %v3615, %v2954
      %v3648 = vsel %vm1703, %v3616, %v2956
      %v3649 = vsel %vm1703, %v3617, %v2958
      %v3650 = vsel %vm1703, %v3618, %v2960
      %v3651 = vsel %vm1703, %v3619, %v2962
      %v3652 = vsel %vm1703, %v3620, %v2964
      %v3653 = vsel %vm1703, %v3621, %v2966
      %v3654 = vsel %vm1703, %v3622, %v2968
      %v3655 = vsel %vm1703, %v3623, %v2970
      %v3656 = vsel %vm1703, %v3624, %v2972
      %v3657 = vsel %vm1703, %v3625, %v2974
      %v3658 = vsel %vm1703, %v3626, %v2976
      %v3659 = vsel %vm1703, %v3627, %v2978
      %v3660 = vsel %vm1703, %v3628, %v2980
      %v3661 = vsel %vm1703, %v3629, %v2982
      %v3662 = vsel %vm1703, %v3630, %v2984
      %v3663 = vsel %vm1703, %v3631, %v2986
      %v3664 = vsel %vm1703, %v3632, %v2988
      %v3665 = vsel %vm1703, %v3633, %v2990
      %v3666 = vsel %vm1703, %v3634, %v2992
      %v3667 = vsel %vm1703, %v3635, %v2994
      %v3668 = vsel %vm1703, %v3636, %v2996
      %v3669 = vsel %vm1736, %v3637, %v3062
      %v3670 = vsel %vm1736, %v3638, %v3064
      %v3671 = vsel %vm1736, %v3639, %v3066
      %v3672 = vsel %vm1736, %v3640, %v3068
      %v3673 = vsel %vm1736, %v3641, %v3070
      %v3674 = vsel %vm1736, %v3642, %v3072
      %v3675 = vsel %vm1736, %v3643, %v3074
      %v3676 = vsel %vm1736, %v3644, %v3076
      %v3677 = vsel %vm1736, %v3645, %v3078
      %v3678 = vsel %vm1736, %v3646, %v3080
      %v3679 = vsel %vm1736, %v3647, %v3082
      %v3680 = vsel %vm1736, %v3648, %v3084
      %v3681 = vsel %vm1736, %v3649, %v3086
      %v3682 = vsel %vm1736, %v3650, %v3088
      %v3683 = vsel %vm1736, %v3651, %v3090
      %v3684 = vsel %vm1736, %v3652, %v3092
      %v3685 = vsel %vm1736, %v3653, %v3094
      %v3686 = vsel %vm1736, %v3654, %v3096
      %v3687 = vsel %vm1736, %v3655, %v3098
      %v3688 = vsel %vm1736, %v3656, %v3100
      %v3689 = vsel %vm1736, %v3657, %v3102
      %v3690 = vsel %vm1736, %v3658, %v3104
      %v3691 = vsel %vm1736, %v3659, %v3106
      %v3692 = vsel %vm1736, %v3660, %v3108
      %v3693 = vsel %vm1736, %v3661, %v3110
      %v3694 = vsel %vm1736, %v3662, %v3112
      %v3695 = vsel %vm1736, %v3663, %v3114
      %v3696 = vsel %vm1736, %v3664, %v3116
      %v3697 = vsel %vm1736, %v3665, %v3118
      %v3698 = vsel %vm1736, %v3666, %v3120
      %v3699 = vsel %vm1736, %v3667, %v3122
      %v3700 = vsel %vm1736, %v3668, %v3124
      %v3701 = vsel %vm1769, %v3669, %v3190
      %v3702 = vsel %vm1769, %v3670, %v3192
      %v3703 = vsel %vm1769, %v3671, %v3194
      %v3704 = vsel %vm1769, %v3672, %v3196
      %v3705 = vsel %vm1769, %v3673, %v3198
      %v3706 = vsel %vm1769, %v3674, %v3200
      %v3707 = vsel %vm1769, %v3675, %v3202
      %v3708 = vsel %vm1769, %v3676, %v3204
      %v3709 = vsel %vm1769, %v3677, %v3206
      %v3710 = vsel %vm1769, %v3678, %v3208
      %v3711 = vsel %vm1769, %v3679, %v3210
      %v3712 = vsel %vm1769, %v3680, %v3212
      %v3713 = vsel %vm1769, %v3681, %v3214
      %v3714 = vsel %vm1769, %v3682, %v3216
      %v3715 = vsel %vm1769, %v3683, %v3218
      %v3716 = vsel %vm1769, %v3684, %v3220
      %v3717 = vsel %vm1769, %v3685, %v3222
      %v3718 = vsel %vm1769, %v3686, %v3224
      %v3719 = vsel %vm1769, %v3687, %v3226
      %v3720 = vsel %vm1769, %v3688, %v3228
      %v3721 = vsel %vm1769, %v3689, %v3230
      %v3722 = vsel %vm1769, %v3690, %v3232
      %v3723 = vsel %vm1769, %v3691, %v3234
      %v3724 = vsel %vm1769, %v3692, %v3236
      %v3725 = vsel %vm1769, %v3693, %v3238
      %v3726 = vsel %vm1769, %v3694, %v3240
      %v3727 = vsel %vm1769, %v3695, %v3242
      %v3728 = vsel %vm1769, %v3696, %v3244
      %v3729 = vsel %vm1769, %v3697, %v3246
      %v3730 = vsel %vm1769, %v3698, %v3248
      %v3731 = vsel %vm1769, %v3699, %v3250
      %v3732 = vsel %vm1769, %v3700, %v3252
      %v3733 = vsel %vm1802, %v3701, %v3318
      %v3734 = vsel %vm1802, %v3702, %v3320
      %v3735 = vsel %vm1802, %v3703, %v3322
      %v3736 = vsel %vm1802, %v3704, %v3324
      %v3737 = vsel %vm1802, %v3705, %v3326
      %v3738 = vsel %vm1802, %v3706, %v3328
      %v3739 = vsel %vm1802, %v3707, %v3330
      %v3740 = vsel %vm1802, %v3708, %v3332
      %v3741 = vsel %vm1802, %v3709, %v3334
      %v3742 = vsel %vm1802, %v3710, %v3336
      %v3743 = vsel %vm1802, %v3711, %v3338
      %v3744 = vsel %vm1802, %v3712, %v3340
      %v3745 = vsel %vm1802, %v3713, %v3342
      %v3746 = vsel %vm1802, %v3714, %v3344
      %v3747 = vsel %vm1802, %v3715, %v3346
      %v3748 = vsel %vm1802, %v3716, %v3348
      %v3749 = vsel %vm1802, %v3717, %v3350
      %v3750 = vsel %vm1802, %v3718, %v3352
      %v3751 = vsel %vm1802, %v3719, %v3354
      %v3752 = vsel %vm1802, %v3720, %v3356
      %v3753 = vsel %vm1802, %v3721, %v3358
      %v3754 = vsel %vm1802, %v3722, %v3360
      %v3755 = vsel %vm1802, %v3723, %v3362
      %v3756 = vsel %vm1802, %v3724, %v3364
      %v3757 = vsel %vm1802, %v3725, %v3366
      %v3758 = vsel %vm1802, %v3726, %v3368
      %v3759 = vsel %vm1802, %v3727, %v3370
      %v3760 = vsel %vm1802, %v3728, %v3372
      %v3761 = vsel %vm1802, %v3729, %v3374
      %v3762 = vsel %vm1802, %v3730, %v3376
      %v3763 = vsel %vm1802, %v3731, %v3378
      %v3764 = vsel %vm1802, %v3732, %v3380
      %v3765 = vsel %vm1835, %v3733, %v3446
      %v3766 = vsel %vm1835, %v3734, %v3448
      %v3767 = vsel %vm1835, %v3735, %v3450
      %v3768 = vsel %vm1835, %v3736, %v3452
      %v3769 = vsel %vm1835, %v3737, %v3454
      %v3770 = vsel %vm1835, %v3738, %v3456
      %v3771 = vsel %vm1835, %v3739, %v3458
      %v3772 = vsel %vm1835, %v3740, %v3460
      %v3773 = vsel %vm1835, %v3741, %v3462
      %v3774 = vsel %vm1835, %v3742, %v3464
      %v3775 = vsel %vm1835, %v3743, %v3466
      %v3776 = vsel %vm1835, %v3744, %v3468
      %v3777 = vsel %vm1835, %v3745, %v3470
      %v3778 = vsel %vm1835, %v3746, %v3472
      %v3779 = vsel %vm1835, %v3747, %v3474
      %v3780 = vsel %vm1835, %v3748, %v3476
      %v3781 = vsel %vm1835, %v3749, %v3478
      %v3782 = vsel %vm1835, %v3750, %v3480
      %v3783 = vsel %vm1835, %v3751, %v3482
      %v3784 = vsel %vm1835, %v3752, %v3484
      %v3785 = vsel %vm1835, %v3753, %v3486
      %v3786 = vsel %vm1835, %v3754, %v3488
      %v3787 = vsel %vm1835, %v3755, %v3490
      %v3788 = vsel %vm1835, %v3756, %v3492
      %v3789 = vsel %vm1835, %v3757, %v3494
      %v3790 = vsel %vm1835, %v3758, %v3496
      %v3791 = vsel %vm1835, %v3759, %v3498
      %v3792 = vsel %vm1835, %v3760, %v3500
      %v3793 = vsel %vm1835, %v3761, %v3502
      %v3794 = vsel %vm1835, %v3762, %v3504
      %v3795 = vsel %vm1835, %v3763, %v3506
      %v3796 = vsel %vm1835, %v3764, %v3508
      %v3797 = vld [vmem:[%s2] sm:$0xff]
      %v3798 = vld [vmem:[%s2 + $0x8] sm:$0xff]
      %v3799 = vld [vmem:[%s2 + $0x10] sm:$0x3]
      %v3801 = vsel %vm1871, %v3765, 0
      %v3804 = vsel %vm1871, %v3766, 0
      %v3807 = vsel %vm1871, %v3767, 0
      %v3810 = vsel %vm1871, %v3768, 0
      %v3813 = vsel %vm1871, %v3769, 0
      %v3816 = vsel %vm1871, %v3770, 0
      %v3819 = vsel %vm1871, %v3771, 0
      %v3822 = vsel %vm1871, %v3772, 0
      %v3825 = vsel %vm1871, %v3773, 0
      %v3828 = vsel %vm1871, %v3774, 0
      %v3831 = vsel %vm1871, %v3775, 0
      %v3834 = vsel %vm1871, %v3776, 0
      %v3837 = vsel %vm1871, %v3777, 0
      %v3840 = vsel %vm1871, %v3778, 0
      %v3843 = vsel %vm1871, %v3779, 0
      %v3846 = vsel %vm1871, %v3780, 0
      %v3849 = vsel %vm1871, %v3781, 0
      %v3852 = vsel %vm1871, %v3782, 0
      %v3855 = vsel %vm1871, %v3783, 0
      %v3858 = vsel %vm1871, %v3784, 0
      %v3861 = vsel %vm1871, %v3785, 0
      %v3864 = vsel %vm1871, %v3786, 0
      %v3867 = vsel %vm1871, %v3787, 0
      %v3870 = vsel %vm1871, %v3788, 0
      %v3873 = vsel %vm1871, %v3789, 0
      %v3876 = vsel %vm1871, %v3790, 0
      %v3879 = vsel %vm1871, %v3791, 0
      %v3882 = vsel %vm1871, %v3792, 0
      %v3885 = vsel %vm1871, %v3793, 0
      %v3888 = vsel %vm1871, %v3794, 0
      %v3891 = vsel %vm1871, %v3795, 0
      %v3894 = vsel %vm1871, %v3796, 0
      %v3897 = vsel %vm1968, %v3799, 0
      %3899 = vmatprep.subr.mxu0 0.0
      %3900 = vmatpush1.msra.mxu0 0.0
      %3901 = vmatprep.subr.mxu0 0.0
      %3902 = vmatpush1.msra.mxu0 0.0
      %3903 = vmatprep.subr.mxu0 0.0
      %3904 = vmatpush1.msra.mxu0 0.0
      %3905 = vmatprep.subr.mxu0 0.0
      %3906 = vmatpush1.msra.mxu0 0.0
      %3907 = vmatprep.subr.mxu0 0.0
      %3908 = vmatpush1.msra.mxu0 0.0
      %3909 = vmatprep.subr.mxu0 0.0
      %3910 = vmatpush1.msra.mxu0 0.0
      %3911 = vmatprep.subr.mxu0 0.0
      %3912 = vmatpush1.msra.mxu0 0.0
      %3913 = vmatprep.subr.mxu0 0.0
      %3914 = vmatpush1.msra.mxu0 0.0
      %3915 = vmatprep.subr.mxu0 0.0
      %3916 = vmatpush1.msra.mxu0 0.0
      %3917 = vmatprep.subr.mxu0 0.0
      %3918 = vmatpush1.msra.mxu0 0.0
      %3919 = vmatprep.subr.mxu0 0.0
      %3920 = vmatpush1.msra.mxu0 0.0
      %3921 = vmatprep.subr.mxu0 0.0
      %3922 = vmatpush1.msra.mxu0 0.0
      %3923 = vmatprep.subr.mxu0 0.0
      %3924 = vmatpush1.msra.mxu0 0.0
      %3925 = vmatprep.subr.mxu0 0.0
      %3926 = vmatpush1.msra.mxu0 %v3897
      %3927 = vmatprep.subr.mxu0 0.0
      %3928 = vmatpush1.msra.mxu0 %v3798
      %3929 = vmatprep.subr.mxu0 0.0
      %3930 = vmatpush1.msra.mxu0 %v3797
      %3931 = vmatprep.subr.mxu0 0.0
      %3932 = vmatpush2.msra.mxu0 0.0
      %3933 = vmatprep.subr.mxu0 0.0
      %3934 = vmatpush2.msra.mxu0 0.0
      %3935 = vmatprep.subr.mxu0 0.0
      %3936 = vmatpush2.msra.mxu0 0.0
      %3937 = vmatprep.subr.mxu0 0.0
      %3938 = vmatpush2.msra.mxu0 0.0
      %3939 = vmatprep.subr.mxu0 0.0
      %3940 = vmatpush2.msra.mxu0 0.0
      %3941 = vmatprep.subr.mxu0 0.0
      %3942 = vmatpush2.msra.mxu0 0.0
      %3943 = vmatprep.subr.mxu0 0.0
      %3944 = vmatpush2.msra.mxu0 0.0
      %3945 = vmatprep.subr.mxu0 0.0
      %3946 = vmatpush2.msra.mxu0 0.0
      %3947 = vmatprep.subr.mxu0 0.0
      %3948 = vmatpush2.msra.mxu0 0.0
      %3949 = vmatprep.subr.mxu0 0.0
      %3950 = vmatpush2.msra.mxu0 0.0
      %3951 = vmatprep.subr.mxu0 0.0
      %3952 = vmatpush2.msra.mxu0 0.0
      %3953 = vmatprep.subr.mxu0 0.0
      %3954 = vmatpush2.msra.mxu0 0.0
      %3955 = vmatprep.subr.mxu0 0.0
      %3956 = vmatpush2.msra.mxu0 0.0
      %3957 = vmatprep.subr.mxu0 0.0
      %3958 = vmatpush2.msra.mxu0 0.0
      %3959 = vmatprep.subr.mxu0 0.0
      %3960 = vmatpush2.msra.mxu0 0.0
      %3961 = vmatprep.subr.mxu0 0.0
      %3962 = vmatpush2.msra.mxu0 0.0
      %3963 = vmatprep.mubr.f32.mxu0 0.0
      %3964 = vmatmul.mubr.f32.gmra.mxu0 %v3801
      %v3965 = vpop.f32.mrf.mxu0
      %v3966 = vadd.f32 0.0, %v3965
      %v3967 = vpop.f32.mrf.mxu0
      %3968 = vmatprep.mubr.f32.mxu0 0.0
      %3969 = vmatmul.mubr.f32.gmra.mxu0 %v3804
      %v3970 = vpop.f32.mrf.mxu0
      %v3971 = vadd.f32 0.0, %v3970
      %v3972 = vpop.f32.mrf.mxu0
      %3973 = vmatprep.mubr.f32.mxu0 0.0
      %3974 = vmatmul.mubr.f32.gmra.mxu0 %v3807
      %v3975 = vpop.f32.mrf.mxu0
      %v3976 = vadd.f32 0.0, %v3975
      %v3977 = vpop.f32.mrf.mxu0
      %3978 = vmatprep.mubr.f32.mxu0 0.0
      %3979 = vmatmul.mubr.f32.gmra.mxu0 %v3810
      %v3980 = vpop.f32.mrf.mxu0
      %v3981 = vadd.f32 0.0, %v3980
      %v3982 = vpop.f32.mrf.mxu0
      %3983 = vmatprep.mubr.f32.mxu0 0.0
      %3984 = vmatmul.mubr.f32.gmra.mxu0 %v3813
      %v3985 = vpop.f32.mrf.mxu0
      %v3986 = vadd.f32 0.0, %v3985
      %v3987 = vpop.f32.mrf.mxu0
      %3988 = vmatprep.mubr.f32.mxu0 0.0
      %3989 = vmatmul.mubr.f32.gmra.mxu0 %v3816
      %v3990 = vpop.f32.mrf.mxu0
      %v3991 = vadd.f32 0.0, %v3990
      %v3992 = vpop.f32.mrf.mxu0
      %3993 = vmatprep.mubr.f32.mxu0 0.0
      %3994 = vmatmul.mubr.f32.gmra.mxu0 %v3819
      %v3995 = vpop.f32.mrf.mxu0
      %v3996 = vadd.f32 0.0, %v3995
      %v3997 = vpop.f32.mrf.mxu0
      %3998 = vmatprep.mubr.f32.mxu0 0.0
      %3999 = vmatmul.mubr.f32.gmra.mxu0 %v3822
      %v4000 = vpop.f32.mrf.mxu0
      %v4001 = vadd.f32 0.0, %v4000
      %v4002 = vpop.f32.mrf.mxu0
      %4003 = vmatprep.mubr.f32.mxu0 0.0
      %4004 = vmatmul.mubr.f32.gmra.mxu0 %v3825
      %v4005 = vpop.f32.mrf.mxu0
      %v4006 = vadd.f32 0.0, %v4005
      %v4007 = vpop.f32.mrf.mxu0
      %4008 = vmatprep.mubr.f32.mxu0 0.0
      %4009 = vmatmul.mubr.f32.gmra.mxu0 %v3828
      %v4010 = vpop.f32.mrf.mxu0
      %v4011 = vadd.f32 0.0, %v4010
      %v4012 = vpop.f32.mrf.mxu0
      %4013 = vmatprep.mubr.f32.mxu0 0.0
      %4014 = vmatmul.mubr.f32.gmra.mxu0 %v3831
      %v4015 = vpop.f32.mrf.mxu0
      %v4016 = vadd.f32 0.0, %v4015
      %v4017 = vpop.f32.mrf.mxu0
      %4018 = vmatprep.mubr.f32.mxu0 0.0
      %4019 = vmatmul.mubr.f32.gmra.mxu0 %v3834
      %v4020 = vpop.f32.mrf.mxu0
      %v4021 = vadd.f32 0.0, %v4020
      %v4022 = vpop.f32.mrf.mxu0
      %4023 = vmatprep.mubr.f32.mxu0 0.0
      %4024 = vmatmul.mubr.f32.gmra.mxu0 %v3837
      %v4025 = vpop.f32.mrf.mxu0
      %v4026 = vadd.f32 0.0, %v4025
      %v4027 = vpop.f32.mrf.mxu0
      %4028 = vmatprep.mubr.f32.mxu0 0.0
      %4029 = vmatmul.mubr.f32.gmra.mxu0 %v3840
      %v4030 = vpop.f32.mrf.mxu0
      %v4031 = vadd.f32 0.0, %v4030
      %v4032 = vpop.f32.mrf.mxu0
      %4033 = vmatprep.mubr.f32.mxu0 0.0
      %4034 = vmatmul.mubr.f32.gmra.mxu0 %v3843
      %v4035 = vpop.f32.mrf.mxu0
      %v4036 = vadd.f32 0.0, %v4035
      %v4037 = vpop.f32.mrf.mxu0
      %4038 = vmatprep.mubr.f32.mxu0 0.0
      %4039 = vmatmul.mubr.f32.gmra.mxu0 %v3846
      %v4040 = vpop.f32.mrf.mxu0
      %v4041 = vadd.f32 0.0, %v4040
      %v4042 = vpop.f32.mrf.mxu0
      %4043 = vmatprep.mubr.f32.mxu0 0.0
      %4044 = vmatmul.mubr.f32.gmra.mxu0 %v3849
      %v4045 = vpop.f32.mrf.mxu0
      %v4046 = vadd.f32 0.0, %v4045
      %v4047 = vpop.f32.mrf.mxu0
      %4048 = vmatprep.mubr.f32.mxu0 0.0
      %4049 = vmatmul.mubr.f32.gmra.mxu0 %v3852
      %v4050 = vpop.f32.mrf.mxu0
      %v4051 = vadd.f32 0.0, %v4050
      %v4052 = vpop.f32.mrf.mxu0
      %4053 = vmatprep.mubr.f32.mxu0 0.0
      %4054 = vmatmul.mubr.f32.gmra.mxu0 %v3855
      %v4055 = vpop.f32.mrf.mxu0
      %v4056 = vadd.f32 0.0, %v4055
      %v4057 = vpop.f32.mrf.mxu0
      %4058 = vmatprep.mubr.f32.mxu0 0.0
      %4059 = vmatmul.mubr.f32.gmra.mxu0 %v3858
      %v4060 = vpop.f32.mrf.mxu0
      %v4061 = vadd.f32 0.0, %v4060
      %v4062 = vpop.f32.mrf.mxu0
      %4063 = vmatprep.mubr.f32.mxu0 0.0
      %4064 = vmatmul.mubr.f32.gmra.mxu0 %v3861
      %v4065 = vpop.f32.mrf.mxu0
      %v4066 = vadd.f32 0.0, %v4065
      %v4067 = vpop.f32.mrf.mxu0
      %4068 = vmatprep.mubr.f32.mxu0 0.0
      %4069 = vmatmul.mubr.f32.gmra.mxu0 %v3864
      %v4070 = vpop.f32.mrf.mxu0
      %v4071 = vadd.f32 0.0, %v4070
      %v4072 = vpop.f32.mrf.mxu0
      %4073 = vmatprep.mubr.f32.mxu0 0.0
      %4074 = vmatmul.mubr.f32.gmra.mxu0 %v3867
      %v4075 = vpop.f32.mrf.mxu0
      %v4076 = vadd.f32 0.0, %v4075
      %v4077 = vpop.f32.mrf.mxu0
      %4078 = vmatprep.mubr.f32.mxu0 0.0
      %4079 = vmatmul.mubr.f32.gmra.mxu0 %v3870
      %v4080 = vpop.f32.mrf.mxu0
      %v4081 = vadd.f32 0.0, %v4080
      %v4082 = vpop.f32.mrf.mxu0
      %4083 = vmatprep.mubr.f32.mxu0 0.0
      %4084 = vmatmul.mubr.f32.gmra.mxu0 %v3873
      %v4085 = vpop.f32.mrf.mxu0
      %v4086 = vadd.f32 0.0, %v4085
      %v4087 = vpop.f32.mrf.mxu0
      %4088 = vmatprep.mubr.f32.mxu0 0.0
      %4089 = vmatmul.mubr.f32.gmra.mxu0 %v3876
      %v4090 = vpop.f32.mrf.mxu0
      %v4091 = vadd.f32 0.0, %v4090
      %v4092 = vpop.f32.mrf.mxu0
      %4093 = vmatprep.mubr.f32.mxu0 0.0
      %4094 = vmatmul.mubr.f32.gmra.mxu0 %v3879
      %v4095 = vpop.f32.mrf.mxu0
      %v4096 = vadd.f32 0.0, %v4095
      %v4097 = vpop.f32.mrf.mxu0
      %4098 = vmatprep.mubr.f32.mxu0 0.0
      %4099 = vmatmul.mubr.f32.gmra.mxu0 %v3882
      %v4100 = vpop.f32.mrf.mxu0
      %v4101 = vadd.f32 0.0, %v4100
      %v4102 = vpop.f32.mrf.mxu0
      %4103 = vmatprep.mubr.f32.mxu0 0.0
      %4104 = vmatmul.mubr.f32.gmra.mxu0 %v3885
      %v4105 = vpop.f32.mrf.mxu0
      %v4106 = vadd.f32 0.0, %v4105
      %v4107 = vpop.f32.mrf.mxu0
      %4108 = vmatprep.mubr.f32.mxu0 0.0
      %4109 = vmatmul.mubr.f32.gmra.mxu0 %v3888
      %v4110 = vpop.f32.mrf.mxu0
      %v4111 = vadd.f32 0.0, %v4110
      %v4112 = vpop.f32.mrf.mxu0
      %4113 = vmatprep.mubr.f32.mxu0 0.0
      %4114 = vmatmul.mubr.f32.gmra.mxu0 %v3891
      %v4115 = vpop.f32.mrf.mxu0
      %v4116 = vadd.f32 0.0, %v4115
      %v4117 = vpop.f32.mrf.mxu0
      %4118 = vmatprep.mubr.f32.mxu0 0.0
      %4119 = vmatmul.mubr.f32.gmra.mxu0 %v3894
      %v4120 = vpop.f32.mrf.mxu0
      %v4121 = vadd.f32 0.0, %v4120
      %v4122 = vpop.f32.mrf.mxu0
      %4123 = vdwg.mxu0
      %4124 = vst.msk [vmem:[%s170] sm:$0xff] %vm171, %v3966
      %4125 = vst.msk [vmem:[%s170 + $0x8] sm:$0xff] %vm171, %v3971
      %4126 = vst.msk [vmem:[%s170 + $0x10] sm:$0xff] %vm171, %v3976
      %4127 = vst.msk [vmem:[%s170 + $0x18] sm:$0xff] %vm171, %v3981
      %4128 = vst.msk [vmem:[%s170 + $0x20] sm:$0xff] %vm171, %v3986
      %4129 = vst.msk [vmem:[%s170 + $0x28] sm:$0xff] %vm171, %v3991
      %4130 = vst.msk [vmem:[%s170 + $0x30] sm:$0xff] %vm171, %v3996
      %4131 = vst.msk [vmem:[%s170 + $0x38] sm:$0xff] %vm171, %v4001
      %4132 = vst.msk [vmem:[%s170 + $0x40] sm:$0xff] %vm171, %v4006
      %4133 = vst.msk [vmem:[%s170 + $0x48] sm:$0xff] %vm171, %v4011
      %4134 = vst.msk [vmem:[%s170 + $0x50] sm:$0xff] %vm171, %v4016
      %4135 = vst.msk [vmem:[%s170 + $0x58] sm:$0xff] %vm171, %v4021
      %4136 = vst.msk [vmem:[%s170 + $0x60] sm:$0xff] %vm171, %v4026
      %4137 = vst.msk [vmem:[%s170 + $0x68] sm:$0xff] %vm171, %v4031
      %4138 = vst.msk [vmem:[%s170 + $0x70] sm:$0xff] %vm171, %v4036
      %4139 = vst.msk [vmem:[%s170 + $0x78] sm:$0xff] %vm171, %v4041
      %4140 = vst.msk [vmem:[%s170 + $0x80] sm:$0xff] %vm171, %v4046
      %4141 = vst.msk [vmem:[%s170 + $0x88] sm:$0xff] %vm171, %v4051
      %4142 = vst.msk [vmem:[%s170 + $0x90] sm:$0xff] %vm171, %v4056
      %4143 = vst.msk [vmem:[%s170 + $0x98] sm:$0xff] %vm171, %v4061
      %4144 = vst.msk [vmem:[%s170 + $0xa0] sm:$0xff] %vm171, %v4066
      %4145 = vst.msk [vmem:[%s170 + $0xa8] sm:$0xff] %vm171, %v4071
      %4146 = vst.msk [vmem:[%s170 + $0xb0] sm:$0xff] %vm171, %v4076
      %4147 = vst.msk [vmem:[%s170 + $0xb8] sm:$0xff] %vm171, %v4081
      %4148 = vst.msk [vmem:[%s170 + $0xc0] sm:$0xff] %vm171, %v4086
      %4149 = vst.msk [vmem:[%s170 + $0xc8] sm:$0xff] %vm171, %v4091
      %4150 = vst.msk [vmem:[%s170 + $0xd0] sm:$0xff] %vm171, %v4096
      %4151 = vst.msk [vmem:[%s170 + $0xd8] sm:$0xff] %vm171, %v4101
      %4152 = vst.msk [vmem:[%s170 + $0xe0] sm:$0xff] %vm171, %v4106
      %4153 = vst.msk [vmem:[%s170 + $0xe8] sm:$0xff] %vm171, %v4111
      %4154 = vst.msk [vmem:[%s170 + $0xf0] sm:$0xff] %vm171, %v4116
      %4155 = vst.msk [vmem:[%s170 + $0xf8] sm:$0xff] %vm171, %v4121
      %v4156 = vld [vmem:[%s165] sm:$0xff]
      %v4157 = vld [vmem:[%s165 + $0x8] sm:$0xff]
      %v4158 = vld [vmem:[%s165 + $0x10] sm:$0xff]
      %v4159 = vld [vmem:[%s165 + $0x18] sm:$0xff]
      %v4160 = vld [vmem:[%s165 + $0x20] sm:$0xff]
      %v4161 = vld [vmem:[%s165 + $0x28] sm:$0xff]
      %v4162 = vld [vmem:[%s165 + $0x30] sm:$0xff]
      %v4163 = vld [vmem:[%s165 + $0x38] sm:$0xff]
      %v4164 = vld [vmem:[%s165 + $0x40] sm:$0xff]
      %v4165 = vld [vmem:[%s165 + $0x48] sm:$0xff]
      %v4166 = vld [vmem:[%s165 + $0x50] sm:$0xff]
      %v4167 = vld [vmem:[%s165 + $0x58] sm:$0xff]
      %v4168 = vld [vmem:[%s165 + $0x60] sm:$0xff]
      %v4169 = vld [vmem:[%s165 + $0x68] sm:$0xff]
      %v4170 = vld [vmem:[%s165 + $0x70] sm:$0xff]
      %v4171 = vld [vmem:[%s165 + $0x78] sm:$0xff]
      %v4172 = vld [vmem:[%s165 + $0x80] sm:$0xff]
      %v4173 = vld [vmem:[%s165 + $0x88] sm:$0xff]
      %v4174 = vld [vmem:[%s165 + $0x90] sm:$0xff]
      %v4175 = vld [vmem:[%s165 + $0x98] sm:$0xff]
      %v4176 = vld [vmem:[%s165 + $0xa0] sm:$0xff]
      %v4177 = vld [vmem:[%s165 + $0xa8] sm:$0xff]
      %v4178 = vld [vmem:[%s165 + $0xb0] sm:$0xff]
      %v4179 = vld [vmem:[%s165 + $0xb8] sm:$0xff]
      %v4180 = vld [vmem:[%s165 + $0xc0] sm:$0xff]
      %v4181 = vld [vmem:[%s165 + $0xc8] sm:$0xff]
      %v4182 = vld [vmem:[%s165 + $0xd0] sm:$0xff]
      %v4183 = vld [vmem:[%s165 + $0xd8] sm:$0xff]
      %v4184 = vld [vmem:[%s165 + $0xe0] sm:$0xff]
      %v4185 = vld [vmem:[%s165 + $0xe8] sm:$0xff]
      %v4186 = vld [vmem:[%s165 + $0xf0] sm:$0xff]
      %v4187 = vld [vmem:[%s165 + $0xf8] sm:$0xff]
      %vm4188 = vcmask 64528
      %4189 = vst.msk [vmem:[%s170] sm:$0xff] %vm4188, %v4156
      %4190 = vst.msk [vmem:[%s170 + $0x8] sm:$0xff] %vm4188, %v4157
      %4191 = vst.msk [vmem:[%s170 + $0x10] sm:$0xff] %vm4188, %v4158
      %4192 = vst.msk [vmem:[%s170 + $0x18] sm:$0xff] %vm4188, %v4159
      %4193 = vst.msk [vmem:[%s170 + $0x20] sm:$0xff] %vm4188, %v4160
      %4194 = vst.msk [vmem:[%s170 + $0x28] sm:$0xff] %vm4188, %v4161
      %4195 = vst.msk [vmem:[%s170 + $0x30] sm:$0xff] %vm4188, %v4162
      %4196 = vst.msk [vmem:[%s170 + $0x38] sm:$0xff] %vm4188, %v4163
      %4197 = vst.msk [vmem:[%s170 + $0x40] sm:$0xff] %vm4188, %v4164
      %4198 = vst.msk [vmem:[%s170 + $0x48] sm:$0xff] %vm4188, %v4165
      %4199 = vst.msk [vmem:[%s170 + $0x50] sm:$0xff] %vm4188, %v4166
      %4200 = vst.msk [vmem:[%s170 + $0x58] sm:$0xff] %vm4188, %v4167
      %4201 = vst.msk [vmem:[%s170 + $0x60] sm:$0xff] %vm4188, %v4168
      %4202 = vst.msk [vmem:[%s170 + $0x68] sm:$0xff] %vm4188, %v4169
      %4203 = vst.msk [vmem:[%s170 + $0x70] sm:$0xff] %vm4188, %v4170
      %4204 = vst.msk [vmem:[%s170 + $0x78] sm:$0xff] %vm4188, %v4171
      %4205 = vst.msk [vmem:[%s170 + $0x80] sm:$0xff] %vm4188, %v4172
      %4206 = vst.msk [vmem:[%s170 + $0x88] sm:$0xff] %vm4188, %v4173
      %4207 = vst.msk [vmem:[%s170 + $0x90] sm:$0xff] %vm4188, %v4174
      %4208 = vst.msk [vmem:[%s170 + $0x98] sm:$0xff] %vm4188, %v4175
      %4209 = vst.msk [vmem:[%s170 + $0xa0] sm:$0xff] %vm4188, %v4176
      %4210 = vst.msk [vmem:[%s170 + $0xa8] sm:$0xff] %vm4188, %v4177
      %4211 = vst.msk [vmem:[%s170 + $0xb0] sm:$0xff] %vm4188, %v4178
      %4212 = vst.msk [vmem:[%s170 + $0xb8] sm:$0xff] %vm4188, %v4179
      %4213 = vst.msk [vmem:[%s170 + $0xc0] sm:$0xff] %vm4188, %v4180
      %4214 = vst.msk [vmem:[%s170 + $0xc8] sm:$0xff] %vm4188, %v4181
      %4215 = vst.msk [vmem:[%s170 + $0xd0] sm:$0xff] %vm4188, %v4182
      %4216 = vst.msk [vmem:[%s170 + $0xd8] sm:$0xff] %vm4188, %v4183
      %4217 = vst.msk [vmem:[%s170 + $0xe0] sm:$0xff] %vm4188, %v4184
      %4218 = vst.msk [vmem:[%s170 + $0xe8] sm:$0xff] %vm4188, %v4185
      %4219 = vst.msk [vmem:[%s170 + $0xf0] sm:$0xff] %vm4188, %v4186
      %4220 = vst.msk [vmem:[%s170 + $0xf8] sm:$0xff] %vm4188, %v4187
      %p4221 = scmp.lt.s32.totalorder %s14, 1
      %s4222 = scalar_select %p4221, %s14, 1
      %s4223 = smul.addr %s4222, 32
      %s4224 = smul.addr %s4223, 8
      %s4225 = scalar_lea.vmem %s3, %s4224
      // Predicated region
      $region33: #{csppc_forward_nchw.4} parent=31 // pred_check
        %p4226 = pneg %p100
      $region34: #{csppc_forward_nchw.4} parent=31 // pred_check_branch
        %4228 = sbr.rel (%p4226) target = $region36
      $region35: #{csppc_forward_nchw.4} parent=31 // pred_region
        _
      $region36: #{csppc_forward_nchw.4} parent=31 // pred_fallthru
        _
    $region32: #{csppc_forward_nchw.4} parent=5 // pred_fallthru
      _
    %p4229 = scmp.le.s32.totalorder 2, %s9
    // Predicated region
    $region37: #{csppc_forward_nchw.4} parent=5 // pred_check
      %p4230 = pneg %p4229
    $region38: #{csppc_forward_nchw.4} parent=5 // pred_check_branch
      %4232 = sbr.rel (%p4230) target = $region40
    $region39: #{csppc_forward_nchw.4} parent=5 // pred_region
      %s4233 = ssub.s32 %s9, 2
      // Predicated region
      $region41: #{csppc_forward_nchw.4} parent=39 // pred_check
        %p4234 = pneg %p106
      $region42: #{csppc_forward_nchw.4} parent=39 // pred_check_branch
        %4236 = sbr.rel (%p4234) target = $region44
      $region43: #{csppc_forward_nchw.4} parent=39 // pred_region
        %p4237 = scmp.lt.s32.totalorder %s15, 1
        %s4238 = scalar_select %p4237, %s15, 1
        %s4239 = smul.addr %s4238, 32
        %s4240 = smul.addr %s4239, 8
        %s4241 = scalar_lea.vmem %s3, %s4240
      $region44: #{csppc_forward_nchw.4} parent=39 // pred_fallthru
        _
    $region40: #{csppc_forward_nchw.4} parent=5 // pred_fallthru
      _
  $region6: #{csppc_forward_nchw.4} parent=0 // loop_footer
    %s13 = sadd.s32 1, %s9
  $region7: #{csppc_forward_nchw.4} parent=0 // loop_footer_branch
    %8 = sbr.rel target = $region3
  $region8: #{csppc_forward_nchw.4} parent=0 // loop_exit
    _

</llo_original>
